<compile_context>
chip_gen: v7x
topology: tpu7x:2x2x1
jax: 0.10.0
libtpu: 0.0.40
codegen_flags: <defaults>
</compile_context>

<pallas_src>
import jax
import jax.numpy as jnp
from jax.experimental import pallas as pl
from jax.experimental.pallas import tpu as pltpu


def _pool_linear_kernel(x_ref, w_ref, b_ref, o_ref):
    """Fused global-average-pool + Linear for one batch tile.

    x_ref: (TN, C, HW) f32 feature block (NCHW with H,W flattened)
    w_ref: (C, F)      dense weight^T, pre-scaled by 1/HW
    b_ref: (1, F)      dense bias, f32
    o_ref: (TN, F)     logits, f32
    """
    # Spatial pooling as a plain f32 sum (the 1/HW scale is folded into the
    # weight in the wrapper); result (TN, C) is lane-dense for the matmul.
    pooled = jnp.sum(x_ref[...], axis=-1)
    # Single small MXU matmul over channels, f32 accumulation, bias once.
    o_ref[...] = (
        jnp.dot(pooled, w_ref[...], preferred_element_type=jnp.float32)
        + b_ref[...]
    )


def hw_classifier_head(feat_nchw, weight, bias, *, batch_tile=None):
    """Fused global-avg-pool + Linear(C -> 2) head of HWClassifier.

    feat_nchw: (N, C, H, W) float32 feature map (EfficientNet-b2 output layout)
    weight:    (F, C) PyTorch nn.Linear weight (F = 2)
    bias:      (F,)   PyTorch nn.Linear bias
    returns:   (N, F) float32 logits
    """
    n, c, h, w = feat_nchw.shape
    f_out = weight.shape[0]
    assert weight.shape == (f_out, c) and bias.shape == (f_out,)
    hw = h * w

    # Zero-copy layout: NCHW -> (N, C, H*W), native dtype (f32).  The feature
    # slab is read from HBM exactly once by the kernel's input DMA.
    x = feat_nchw.reshape(n, c, hw)
    # Fold the 1/HW average-pool scale into the (tiny) weight; pass it as
    # (C, F) so the kernel does a plain (TN,C)@(C,F) matmul.
    w_t = (weight.astype(jnp.float32) / float(hw)).T  # (C, F)
    b2d = bias.astype(jnp.float32).reshape(1, f_out)

    if batch_tile is None:
        itemsize = x.dtype.itemsize
        # Padded VMEM footprint of one sample: the minor HW dim pads to a
        # multiple of 128 lanes (e.g. 64 -> 128).
        row_bytes = c * (pl.cdiv(hw, 128) * 128) * itemsize
        # ~4 MiB feature block per buffer (Pallas double-buffers -> ~8 MiB),
        # safe under v5e's 16 MiB default scoped VMEM and v7x's 64 MiB VMEM.
        budget = 4 * 1024 * 1024
        fit = max(8, ((budget // row_bytes) // 8) * 8)
        if n <= 8:
            # Tiny batch: one block (leading batch dim is unconstrained).
            batch_tile = n
        else:
            # >= 2 grid steps so v7x's 2nd TensorCore gets work and the next
            # feature DMA overlaps the current pool+matmul; multiple of 8 rows
            # keeps the (batch_tile, F) output block layout-legal.
            half = max(8, ((n // 2) // 8) * 8)
            batch_tile = min(fit, half)

    grid = (pl.cdiv(n, batch_tile),)
    return pl.pallas_call(
        _pool_linear_kernel,
        out_shape=jax.ShapeDtypeStruct((n, f_out), jnp.float32),
        grid=grid,
        in_specs=[
            pl.BlockSpec((batch_tile, c, hw), lambda b: (b, 0, 0)),  # features
            pl.BlockSpec((c, f_out), lambda b: (0, 0)),              # weight^T
            pl.BlockSpec((1, f_out), lambda b: (0, 0)),              # bias
        ],
        out_specs=pl.BlockSpec((batch_tile, f_out), lambda b: (b, 0)),
        compiler_params=pltpu.CompilerParams(
            dimension_semantics=("parallel",),
            vmem_limit_bytes=32 * 1024 * 1024,
        ),
    )(x, w_t, b2d)


if __name__ == "__main__":
    # Small, deterministic shapes consistent with HWClassifier.forward:
    # EfficientNet-b2 features have 1408 channels; spatial kept small (8x8).
    N, C, H, W = 2, 1408, 8, 8

    key = jax.random.PRNGKey(0)
    k_feat, k_w, k_b = jax.random.split(key, 3)

    feat = jax.random.normal(k_feat, (N, C, H, W), dtype=jnp.float32)

    # Deterministic synthetic nn.Linear(1408, 2) params (PyTorch-style init).
    bound = 1.0 / jnp.sqrt(jnp.float32(C))
    dense_w = jax.random.uniform(k_w, (2, C), jnp.float32, -bound, bound)
    dense_b = jax.random.uniform(k_b, (2,), jnp.float32, -bound, bound)

    out = hw_classifier_head(feat, dense_w, dense_b)
    out = jax.block_until_ready(out)

    # Pure-JAX f32 reference for the implemented path (avg_pool2d + Linear).
    ref = feat.mean(axis=(2, 3)) @ dense_w.T + dense_b
    assert out.shape == (N, 2)
    # Everything is f32 end-to-end now -> tight tolerance.
    assert jnp.allclose(out, ref, atol=1e-4, rtol=1e-4), "mismatch vs reference"

    print("KERNEL_OK")
</pallas_src>

<mosaic_0001>
module attributes {stable_mosaic.version = 11 : i64} {
  func.func @_pool_linear_kernel(%arg0: i32, %arg1: memref<2x1408x64xf32, #tpu.memory_space<vmem>>, %arg2: memref<1408x2xf32, #tpu.memory_space<vmem>>, %arg3: memref<1x2xf32, #tpu.memory_space<vmem>>, %arg4: memref<2x2xf32, #tpu.memory_space<vmem>>) attributes {dimension_semantics = [#tpu.dimension_semantics<parallel>], iteration_bounds = array<i64: 1>, scalar_prefetch = 0 : i64, scratch_operands = 0 : i64, tpu.core_type = #tpu.core_type<tc>, window_params = [{transform_indices = @transform_0, window_bounds = array<i64: 2, 1408, 64>}, {pipeline_mode = #tpu.pipeline_mode<synchronous>, transform_indices = @transform_1, window_bounds = array<i64: 1408, 2>}, {pipeline_mode = #tpu.pipeline_mode<synchronous>, transform_indices = @transform_2, window_bounds = array<i64: 1, 2>}, {transform_indices = @transform_3, window_bounds = array<i64: 2, 2>}]} {
    %c0 = arith.constant 0 : index
    %c0_0 = arith.constant 0 : index
    %c0_1 = arith.constant 0 : index
    %0 = vector.load %arg1[%c0, %c0_0, %c0_1] : memref<2x1408x64xf32, #tpu.memory_space<vmem>>, vector<2x1408x64xf32>
    %cst = arith.constant dense<0.000000e+00> : vector<2x1408xf32>
    %1 = vector.multi_reduction <add>, %0, %cst [2] : vector<2x1408x64xf32> to vector<2x1408xf32>
    %c0_2 = arith.constant 0 : index
    %c0_3 = arith.constant 0 : index
    %2 = vector.load %arg2[%c0_2, %c0_3] : memref<1408x2xf32, #tpu.memory_space<vmem>>, vector<1408x2xf32>
    %cst_4 = arith.constant dense<0.000000e+00> : vector<2x2xf32>
    %3 = tpu.matmul %1, %2, %cst_4 {dimension_numbers = #tpu.dot_dimension_numbers<[1], [0], [0], [1], [0, 0, 1, 1], [], []>} : vector<2x1408xf32>, vector<1408x2xf32>, vector<2x2xf32> -> vector<2x2xf32>
    %c0_5 = arith.constant 0 : index
    %c0_6 = arith.constant 0 : index
    %4 = vector.load %arg3[%c0_5, %c0_6] : memref<1x2xf32, #tpu.memory_space<vmem>>, vector<1x2xf32>
    %5 = vector.broadcast %4 : vector<1x2xf32> to vector<2x2xf32>
    %6 = arith.addf %3, %5 : vector<2x2xf32>
    %c0_7 = arith.constant 0 : index
    %c0_8 = arith.constant 0 : index
    %7 = vector.load %arg4[%c0_7, %c0_8] : memref<2x2xf32, #tpu.memory_space<vmem>>, vector<2x2xf32>
    tpu.vector_store %arg4[%c0_7, %c0_8], %6 {strides = array<i32>} : memref<2x2xf32, #tpu.memory_space<vmem>>, vector<2x2xf32>,
    return
  }
  func.func @transform_0(%arg0: i32) -> (i32, i32, i32) {
    %c0_i32 = arith.constant 0 : i32
    %c0_i32_0 = arith.constant 0 : i32
    %c0_i32_1 = arith.constant 0 : i32
    return %arg0, %c0_i32, %c0_i32_0 : i32, i32, i32
  }
  func.func @transform_1(%arg0: i32) -> (i32, i32) {
    %c0_i32 = arith.constant 0 : i32
    %c0_i32_0 = arith.constant 0 : i32
    %c0_i32_1 = arith.constant 0 : i32
    return %c0_i32, %c0_i32_0 : i32, i32
  }
  func.func @transform_2(%arg0: i32) -> (i32, i32) {
    %c0_i32 = arith.constant 0 : i32
    %c0_i32_0 = arith.constant 0 : i32
    %c0_i32_1 = arith.constant 0 : i32
    return %c0_i32, %c0_i32_0 : i32, i32
  }
  func.func @transform_3(%arg0: i32) -> (i32, i32) {
    %c0_i32 = arith.constant 0 : i32
    %c0_i32_0 = arith.constant 0 : i32
    return %arg0, %c0_i32 : i32, i32
  }
}

</mosaic_0001>

<llo_original>
// kernel: tpu_custom_call.1
$region0: #{tpu_custom_call.1}
  #allocation0 [shape = 'u32[]', space=smem, size = 0x4, offset = 0x4, fixed_abs, tag = 'smem constant byte address 0x4 - core index']
  #allocation1 [shape = 'u32[144,128]{1,0:T(1,128)}', space=vmem, size = 0x12000, scoped, tag = 'internal scratch']
  %s0 = inlined_call_operand.vmem [shape: f32[2,1408,64], index: 0, kind: input, shape index: {}]
  %s1 = inlined_call_operand.vmem [shape: f32[1408,2], index: 1, kind: input, shape index: {}]
  %s2 = inlined_call_operand.vmem [shape: f32[1,2], index: 2, kind: input, shape index: {}]
  %s3 = inlined_call_operand.hbm [shape: f32[2,2], index: 3, kind: output, shape index: {}]
  %s4 = sld [smem:[#allocation0]]
  $region22: #{tpu_custom_call.1} parent=0
    _
  %s6 = ssub.s32 1, %s4
  %s7 = scalar_select 0, %s6, %s4
  $region1: #{tpu_custom_call.1} parent=0
    #allocation2 [shape = 'u8[1024]{0}', space=vmem, size = 0x400, scoped, tag = 'output window, operand 0, single buffered']
    #allocation3 [shape = 's32[1]{0}', space=sflag, size = 0x4, scoped, tag = 'scoped memory for tpu_custom_call.1']
    %8 = vsyncpa [#allocation3], 0
    // Predicated region
    $region2: #{tpu_custom_call.1} parent=1 // pred_check
      _
    $region3: #{tpu_custom_call.1} parent=1 // pred_check_branch
      %10 = sbr.rel (0) target = $region5
    $region4: #{tpu_custom_call.1} parent=1 // pred_region
      _
    $region5: #{tpu_custom_call.1} parent=1 // pred_fallthru
      _
    // Predicated region
    $region6: #{tpu_custom_call.1} parent=1 // pred_check
      _
    $region7: #{tpu_custom_call.1} parent=1 // pred_check_branch
      %12 = sbr.rel (0) target = $region9
    $region8: #{tpu_custom_call.1} parent=1 // pred_region
      _
    $region9: #{tpu_custom_call.1} parent=1 // pred_fallthru
      _
    // Predicated region
    $region10: #{tpu_custom_call.1} parent=1 // pred_check
      _
    $region11: #{tpu_custom_call.1} parent=1 // pred_check_branch
      %14 = sbr.rel (0) target = $region13
    $region12: #{tpu_custom_call.1} parent=1 // pred_region
      _
    $region13: #{tpu_custom_call.1} parent=1 // pred_fallthru
      _
    %v15 = vld [vmem:[%s0] sm:$0xff]
    %v16 = vld [vmem:[%s0 + $0x8] sm:$0xff]
    %v17 = vld [vmem:[%s0 + $0x10] sm:$0xff]
    %v18 = vld [vmem:[%s0 + $0x18] sm:$0xff]
    %v19 = vld [vmem:[%s0 + $0x20] sm:$0xff]
    %v20 = vld [vmem:[%s0 + $0x28] sm:$0xff]
    %v21 = vld [vmem:[%s0 + $0x30] sm:$0xff]
    %v22 = vld [vmem:[%s0 + $0x38] sm:$0xff]
    %v23 = vld [vmem:[%s0 + $0x40] sm:$0xff]
    %v24 = vld [vmem:[%s0 + $0x48] sm:$0xff]
    %v25 = vld [vmem:[%s0 + $0x50] sm:$0xff]
    %v26 = vld [vmem:[%s0 + $0x58] sm:$0xff]
    %v27 = vld [vmem:[%s0 + $0x60] sm:$0xff]
    %v28 = vld [vmem:[%s0 + $0x68] sm:$0xff]
    %v29 = vld [vmem:[%s0 + $0x70] sm:$0xff]
    %v30 = vld [vmem:[%s0 + $0x78] sm:$0xff]
    %v31 = vld [vmem:[%s0 + $0x80] sm:$0xff]
    %v32 = vld [vmem:[%s0 + $0x88] sm:$0xff]
    %v33 = vld [vmem:[%s0 + $0x90] sm:$0xff]
    %v34 = vld [vmem:[%s0 + $0x98] sm:$0xff]
    %v35 = vld [vmem:[%s0 + $0xa0] sm:$0xff]
    %v36 = vld [vmem:[%s0 + $0xa8] sm:$0xff]
    %v37 = vld [vmem:[%s0 + $0xb0] sm:$0xff]
    %v38 = vld [vmem:[%s0 + $0xb8] sm:$0xff]
    %v39 = vld [vmem:[%s0 + $0xc0] sm:$0xff]
    %v40 = vld [vmem:[%s0 + $0xc8] sm:$0xff]
    %v41 = vld [vmem:[%s0 + $0xd0] sm:$0xff]
    %v42 = vld [vmem:[%s0 + $0xd8] sm:$0xff]
    %v43 = vld [vmem:[%s0 + $0xe0] sm:$0xff]
    %v44 = vld [vmem:[%s0 + $0xe8] sm:$0xff]
    %v45 = vld [vmem:[%s0 + $0xf0] sm:$0xff]
    %v46 = vld [vmem:[%s0 + $0xf8] sm:$0xff]
    %v47 = vld [vmem:[%s0 + $0x100] sm:$0xff]
    %v48 = vld [vmem:[%s0 + $0x108] sm:$0xff]
    %v49 = vld [vmem:[%s0 + $0x110] sm:$0xff]
    %v50 = vld [vmem:[%s0 + $0x118] sm:$0xff]
    %v51 = vld [vmem:[%s0 + $0x120] sm:$0xff]
    %v52 = vld [vmem:[%s0 + $0x128] sm:$0xff]
    %v53 = vld [vmem:[%s0 + $0x130] sm:$0xff]
    %v54 = vld [vmem:[%s0 + $0x138] sm:$0xff]
    %v55 = vld [vmem:[%s0 + $0x140] sm:$0xff]
    %v56 = vld [vmem:[%s0 + $0x148] sm:$0xff]
    %v57 = vld [vmem:[%s0 + $0x150] sm:$0xff]
    %v58 = vld [vmem:[%s0 + $0x158] sm:$0xff]
    %v59 = vld [vmem:[%s0 + $0x160] sm:$0xff]
    %v60 = vld [vmem:[%s0 + $0x168] sm:$0xff]
    %v61 = vld [vmem:[%s0 + $0x170] sm:$0xff]
    %v62 = vld [vmem:[%s0 + $0x178] sm:$0xff]
    %v63 = vld [vmem:[%s0 + $0x180] sm:$0xff]
    %v64 = vld [vmem:[%s0 + $0x188] sm:$0xff]
    %v65 = vld [vmem:[%s0 + $0x190] sm:$0xff]
    %v66 = vld [vmem:[%s0 + $0x198] sm:$0xff]
    %v67 = vld [vmem:[%s0 + $0x1a0] sm:$0xff]
    %v68 = vld [vmem:[%s0 + $0x1a8] sm:$0xff]
    %v69 = vld [vmem:[%s0 + $0x1b0] sm:$0xff]
    %v70 = vld [vmem:[%s0 + $0x1b8] sm:$0xff]
    %v71 = vld [vmem:[%s0 + $0x1c0] sm:$0xff]
    %v72 = vld [vmem:[%s0 + $0x1c8] sm:$0xff]
    %v73 = vld [vmem:[%s0 + $0x1d0] sm:$0xff]
    %v74 = vld [vmem:[%s0 + $0x1d8] sm:$0xff]
    %v75 = vld [vmem:[%s0 + $0x1e0] sm:$0xff]
    %v76 = vld [vmem:[%s0 + $0x1e8] sm:$0xff]
    %v77 = vld [vmem:[%s0 + $0x1f0] sm:$0xff]
    %v78 = vld [vmem:[%s0 + $0x1f8] sm:$0xff]
    %v79 = vld [vmem:[%s0 + $0x200] sm:$0xff]
    %v80 = vld [vmem:[%s0 + $0x208] sm:$0xff]
    %v81 = vld [vmem:[%s0 + $0x210] sm:$0xff]
    %v82 = vld [vmem:[%s0 + $0x218] sm:$0xff]
    %v83 = vld [vmem:[%s0 + $0x220] sm:$0xff]
    %v84 = vld [vmem:[%s0 + $0x228] sm:$0xff]
    %v85 = vld [vmem:[%s0 + $0x230] sm:$0xff]
    %v86 = vld [vmem:[%s0 + $0x238] sm:$0xff]
    %v87 = vld [vmem:[%s0 + $0x240] sm:$0xff]
    %v88 = vld [vmem:[%s0 + $0x248] sm:$0xff]
    %v89 = vld [vmem:[%s0 + $0x250] sm:$0xff]
    %v90 = vld [vmem:[%s0 + $0x258] sm:$0xff]
    %v91 = vld [vmem:[%s0 + $0x260] sm:$0xff]
    %v92 = vld [vmem:[%s0 + $0x268] sm:$0xff]
    %v93 = vld [vmem:[%s0 + $0x270] sm:$0xff]
    %v94 = vld [vmem:[%s0 + $0x278] sm:$0xff]
    %v95 = vld [vmem:[%s0 + $0x280] sm:$0xff]
    %v96 = vld [vmem:[%s0 + $0x288] sm:$0xff]
    %v97 = vld [vmem:[%s0 + $0x290] sm:$0xff]
    %v98 = vld [vmem:[%s0 + $0x298] sm:$0xff]
    %v99 = vld [vmem:[%s0 + $0x2a0] sm:$0xff]
    %v100 = vld [vmem:[%s0 + $0x2a8] sm:$0xff]
    %v101 = vld [vmem:[%s0 + $0x2b0] sm:$0xff]
    %v102 = vld [vmem:[%s0 + $0x2b8] sm:$0xff]
    %v103 = vld [vmem:[%s0 + $0x2c0] sm:$0xff]
    %v104 = vld [vmem:[%s0 + $0x2c8] sm:$0xff]
    %v105 = vld [vmem:[%s0 + $0x2d0] sm:$0xff]
    %v106 = vld [vmem:[%s0 + $0x2d8] sm:$0xff]
    %v107 = vld [vmem:[%s0 + $0x2e0] sm:$0xff]
    %v108 = vld [vmem:[%s0 + $0x2e8] sm:$0xff]
    %v109 = vld [vmem:[%s0 + $0x2f0] sm:$0xff]
    %v110 = vld [vmem:[%s0 + $0x2f8] sm:$0xff]
    %v111 = vld [vmem:[%s0 + $0x300] sm:$0xff]
    %v112 = vld [vmem:[%s0 + $0x308] sm:$0xff]
    %v113 = vld [vmem:[%s0 + $0x310] sm:$0xff]
    %v114 = vld [vmem:[%s0 + $0x318] sm:$0xff]
    %v115 = vld [vmem:[%s0 + $0x320] sm:$0xff]
    %v116 = vld [vmem:[%s0 + $0x328] sm:$0xff]
    %v117 = vld [vmem:[%s0 + $0x330] sm:$0xff]
    %v118 = vld [vmem:[%s0 + $0x338] sm:$0xff]
    %v119 = vld [vmem:[%s0 + $0x340] sm:$0xff]
    %v120 = vld [vmem:[%s0 + $0x348] sm:$0xff]
    %v121 = vld [vmem:[%s0 + $0x350] sm:$0xff]
    %v122 = vld [vmem:[%s0 + $0x358] sm:$0xff]
    %v123 = vld [vmem:[%s0 + $0x360] sm:$0xff]
    %v124 = vld [vmem:[%s0 + $0x368] sm:$0xff]
    %v125 = vld [vmem:[%s0 + $0x370] sm:$0xff]
    %v126 = vld [vmem:[%s0 + $0x378] sm:$0xff]
    %v127 = vld [vmem:[%s0 + $0x380] sm:$0xff]
    %v128 = vld [vmem:[%s0 + $0x388] sm:$0xff]
    %v129 = vld [vmem:[%s0 + $0x390] sm:$0xff]
    %v130 = vld [vmem:[%s0 + $0x398] sm:$0xff]
    %v131 = vld [vmem:[%s0 + $0x3a0] sm:$0xff]
    %v132 = vld [vmem:[%s0 + $0x3a8] sm:$0xff]
    %v133 = vld [vmem:[%s0 + $0x3b0] sm:$0xff]
    %v134 = vld [vmem:[%s0 + $0x3b8] sm:$0xff]
    %v135 = vld [vmem:[%s0 + $0x3c0] sm:$0xff]
    %v136 = vld [vmem:[%s0 + $0x3c8] sm:$0xff]
    %v137 = vld [vmem:[%s0 + $0x3d0] sm:$0xff]
    %v138 = vld [vmem:[%s0 + $0x3d8] sm:$0xff]
    %v139 = vld [vmem:[%s0 + $0x3e0] sm:$0xff]
    %v140 = vld [vmem:[%s0 + $0x3e8] sm:$0xff]
    %v141 = vld [vmem:[%s0 + $0x3f0] sm:$0xff]
    %v142 = vld [vmem:[%s0 + $0x3f8] sm:$0xff]
    %v143 = vld [vmem:[%s0 + $0x400] sm:$0xff]
    %v144 = vld [vmem:[%s0 + $0x408] sm:$0xff]
    %v145 = vld [vmem:[%s0 + $0x410] sm:$0xff]
    %v146 = vld [vmem:[%s0 + $0x418] sm:$0xff]
    %v147 = vld [vmem:[%s0 + $0x420] sm:$0xff]
    %v148 = vld [vmem:[%s0 + $0x428] sm:$0xff]
    %v149 = vld [vmem:[%s0 + $0x430] sm:$0xff]
    %v150 = vld [vmem:[%s0 + $0x438] sm:$0xff]
    %v151 = vld [vmem:[%s0 + $0x440] sm:$0xff]
    %v152 = vld [vmem:[%s0 + $0x448] sm:$0xff]
    %v153 = vld [vmem:[%s0 + $0x450] sm:$0xff]
    %v154 = vld [vmem:[%s0 + $0x458] sm:$0xff]
    %v155 = vld [vmem:[%s0 + $0x460] sm:$0xff]
    %v156 = vld [vmem:[%s0 + $0x468] sm:$0xff]
    %v157 = vld [vmem:[%s0 + $0x470] sm:$0xff]
    %v158 = vld [vmem:[%s0 + $0x478] sm:$0xff]
    %v159 = vld [vmem:[%s0 + $0x480] sm:$0xff]
    %v160 = vld [vmem:[%s0 + $0x488] sm:$0xff]
    %v161 = vld [vmem:[%s0 + $0x490] sm:$0xff]
    %v162 = vld [vmem:[%s0 + $0x498] sm:$0xff]
    %v163 = vld [vmem:[%s0 + $0x4a0] sm:$0xff]
    %v164 = vld [vmem:[%s0 + $0x4a8] sm:$0xff]
    %v165 = vld [vmem:[%s0 + $0x4b0] sm:$0xff]
    %v166 = vld [vmem:[%s0 + $0x4b8] sm:$0xff]
    %v167 = vld [vmem:[%s0 + $0x4c0] sm:$0xff]
    %v168 = vld [vmem:[%s0 + $0x4c8] sm:$0xff]
    %v169 = vld [vmem:[%s0 + $0x4d0] sm:$0xff]
    %v170 = vld [vmem:[%s0 + $0x4d8] sm:$0xff]
    %v171 = vld [vmem:[%s0 + $0x4e0] sm:$0xff]
    %v172 = vld [vmem:[%s0 + $0x4e8] sm:$0xff]
    %v173 = vld [vmem:[%s0 + $0x4f0] sm:$0xff]
    %v174 = vld [vmem:[%s0 + $0x4f8] sm:$0xff]
    %v175 = vld [vmem:[%s0 + $0x500] sm:$0xff]
    %v176 = vld [vmem:[%s0 + $0x508] sm:$0xff]
    %v177 = vld [vmem:[%s0 + $0x510] sm:$0xff]
    %v178 = vld [vmem:[%s0 + $0x518] sm:$0xff]
    %v179 = vld [vmem:[%s0 + $0x520] sm:$0xff]
    %v180 = vld [vmem:[%s0 + $0x528] sm:$0xff]
    %v181 = vld [vmem:[%s0 + $0x530] sm:$0xff]
    %v182 = vld [vmem:[%s0 + $0x538] sm:$0xff]
    %v183 = vld [vmem:[%s0 + $0x540] sm:$0xff]
    %v184 = vld [vmem:[%s0 + $0x548] sm:$0xff]
    %v185 = vld [vmem:[%s0 + $0x550] sm:$0xff]
    %v186 = vld [vmem:[%s0 + $0x558] sm:$0xff]
    %v187 = vld [vmem:[%s0 + $0x560] sm:$0xff]
    %v188 = vld [vmem:[%s0 + $0x568] sm:$0xff]
    %v189 = vld [vmem:[%s0 + $0x570] sm:$0xff]
    %v190 = vld [vmem:[%s0 + $0x578] sm:$0xff]
    %v191 = vld [vmem:[%s0 + $0x580] sm:$0xff]
    %v192 = vld [vmem:[%s0 + $0x588] sm:$0xff]
    %v193 = vld [vmem:[%s0 + $0x590] sm:$0xff]
    %v194 = vld [vmem:[%s0 + $0x598] sm:$0xff]
    %v195 = vld [vmem:[%s0 + $0x5a0] sm:$0xff]
    %v196 = vld [vmem:[%s0 + $0x5a8] sm:$0xff]
    %v197 = vld [vmem:[%s0 + $0x5b0] sm:$0xff]
    %v198 = vld [vmem:[%s0 + $0x5b8] sm:$0xff]
    %v199 = vld [vmem:[%s0 + $0x5c0] sm:$0xff]
    %v200 = vld [vmem:[%s0 + $0x5c8] sm:$0xff]
    %v201 = vld [vmem:[%s0 + $0x5d0] sm:$0xff]
    %v202 = vld [vmem:[%s0 + $0x5d8] sm:$0xff]
    %v203 = vld [vmem:[%s0 + $0x5e0] sm:$0xff]
    %v204 = vld [vmem:[%s0 + $0x5e8] sm:$0xff]
    %v205 = vld [vmem:[%s0 + $0x5f0] sm:$0xff]
    %v206 = vld [vmem:[%s0 + $0x5f8] sm:$0xff]
    %v207 = vld [vmem:[%s0 + $0x600] sm:$0xff]
    %v208 = vld [vmem:[%s0 + $0x608] sm:$0xff]
    %v209 = vld [vmem:[%s0 + $0x610] sm:$0xff]
    %v210 = vld [vmem:[%s0 + $0x618] sm:$0xff]
    %v211 = vld [vmem:[%s0 + $0x620] sm:$0xff]
    %v212 = vld [vmem:[%s0 + $0x628] sm:$0xff]
    %v213 = vld [vmem:[%s0 + $0x630] sm:$0xff]
    %v214 = vld [vmem:[%s0 + $0x638] sm:$0xff]
    %v215 = vld [vmem:[%s0 + $0x640] sm:$0xff]
    %v216 = vld [vmem:[%s0 + $0x648] sm:$0xff]
    %v217 = vld [vmem:[%s0 + $0x650] sm:$0xff]
    %v218 = vld [vmem:[%s0 + $0x658] sm:$0xff]
    %v219 = vld [vmem:[%s0 + $0x660] sm:$0xff]
    %v220 = vld [vmem:[%s0 + $0x668] sm:$0xff]
    %v221 = vld [vmem:[%s0 + $0x670] sm:$0xff]
    %v222 = vld [vmem:[%s0 + $0x678] sm:$0xff]
    %v223 = vld [vmem:[%s0 + $0x680] sm:$0xff]
    %v224 = vld [vmem:[%s0 + $0x688] sm:$0xff]
    %v225 = vld [vmem:[%s0 + $0x690] sm:$0xff]
    %v226 = vld [vmem:[%s0 + $0x698] sm:$0xff]
    %v227 = vld [vmem:[%s0 + $0x6a0] sm:$0xff]
    %v228 = vld [vmem:[%s0 + $0x6a8] sm:$0xff]
    %v229 = vld [vmem:[%s0 + $0x6b0] sm:$0xff]
    %v230 = vld [vmem:[%s0 + $0x6b8] sm:$0xff]
    %v231 = vld [vmem:[%s0 + $0x6c0] sm:$0xff]
    %v232 = vld [vmem:[%s0 + $0x6c8] sm:$0xff]
    %v233 = vld [vmem:[%s0 + $0x6d0] sm:$0xff]
    %v234 = vld [vmem:[%s0 + $0x6d8] sm:$0xff]
    %v235 = vld [vmem:[%s0 + $0x6e0] sm:$0xff]
    %v236 = vld [vmem:[%s0 + $0x6e8] sm:$0xff]
    %v237 = vld [vmem:[%s0 + $0x6f0] sm:$0xff]
    %v238 = vld [vmem:[%s0 + $0x6f8] sm:$0xff]
    %v239 = vld [vmem:[%s0 + $0x700] sm:$0xff]
    %v240 = vld [vmem:[%s0 + $0x708] sm:$0xff]
    %v241 = vld [vmem:[%s0 + $0x710] sm:$0xff]
    %v242 = vld [vmem:[%s0 + $0x718] sm:$0xff]
    %v243 = vld [vmem:[%s0 + $0x720] sm:$0xff]
    %v244 = vld [vmem:[%s0 + $0x728] sm:$0xff]
    %v245 = vld [vmem:[%s0 + $0x730] sm:$0xff]
    %v246 = vld [vmem:[%s0 + $0x738] sm:$0xff]
    %v247 = vld [vmem:[%s0 + $0x740] sm:$0xff]
    %v248 = vld [vmem:[%s0 + $0x748] sm:$0xff]
    %v249 = vld [vmem:[%s0 + $0x750] sm:$0xff]
    %v250 = vld [vmem:[%s0 + $0x758] sm:$0xff]
    %v251 = vld [vmem:[%s0 + $0x760] sm:$0xff]
    %v252 = vld [vmem:[%s0 + $0x768] sm:$0xff]
    %v253 = vld [vmem:[%s0 + $0x770] sm:$0xff]
    %v254 = vld [vmem:[%s0 + $0x778] sm:$0xff]
    %v255 = vld [vmem:[%s0 + $0x780] sm:$0xff]
    %v256 = vld [vmem:[%s0 + $0x788] sm:$0xff]
    %v257 = vld [vmem:[%s0 + $0x790] sm:$0xff]
    %v258 = vld [vmem:[%s0 + $0x798] sm:$0xff]
    %v259 = vld [vmem:[%s0 + $0x7a0] sm:$0xff]
    %v260 = vld [vmem:[%s0 + $0x7a8] sm:$0xff]
    %v261 = vld [vmem:[%s0 + $0x7b0] sm:$0xff]
    %v262 = vld [vmem:[%s0 + $0x7b8] sm:$0xff]
    %v263 = vld [vmem:[%s0 + $0x7c0] sm:$0xff]
    %v264 = vld [vmem:[%s0 + $0x7c8] sm:$0xff]
    %v265 = vld [vmem:[%s0 + $0x7d0] sm:$0xff]
    %v266 = vld [vmem:[%s0 + $0x7d8] sm:$0xff]
    %v267 = vld [vmem:[%s0 + $0x7e0] sm:$0xff]
    %v268 = vld [vmem:[%s0 + $0x7e8] sm:$0xff]
    %v269 = vld [vmem:[%s0 + $0x7f0] sm:$0xff]
    %v270 = vld [vmem:[%s0 + $0x7f8] sm:$0xff]
    %v271 = vld [vmem:[%s0 + $0x800] sm:$0xff]
    %v272 = vld [vmem:[%s0 + $0x808] sm:$0xff]
    %v273 = vld [vmem:[%s0 + $0x810] sm:$0xff]
    %v274 = vld [vmem:[%s0 + $0x818] sm:$0xff]
    %v275 = vld [vmem:[%s0 + $0x820] sm:$0xff]
    %v276 = vld [vmem:[%s0 + $0x828] sm:$0xff]
    %v277 = vld [vmem:[%s0 + $0x830] sm:$0xff]
    %v278 = vld [vmem:[%s0 + $0x838] sm:$0xff]
    %v279 = vld [vmem:[%s0 + $0x840] sm:$0xff]
    %v280 = vld [vmem:[%s0 + $0x848] sm:$0xff]
    %v281 = vld [vmem:[%s0 + $0x850] sm:$0xff]
    %v282 = vld [vmem:[%s0 + $0x858] sm:$0xff]
    %v283 = vld [vmem:[%s0 + $0x860] sm:$0xff]
    %v284 = vld [vmem:[%s0 + $0x868] sm:$0xff]
    %v285 = vld [vmem:[%s0 + $0x870] sm:$0xff]
    %v286 = vld [vmem:[%s0 + $0x878] sm:$0xff]
    %v287 = vld [vmem:[%s0 + $0x880] sm:$0xff]
    %v288 = vld [vmem:[%s0 + $0x888] sm:$0xff]
    %v289 = vld [vmem:[%s0 + $0x890] sm:$0xff]
    %v290 = vld [vmem:[%s0 + $0x898] sm:$0xff]
    %v291 = vld [vmem:[%s0 + $0x8a0] sm:$0xff]
    %v292 = vld [vmem:[%s0 + $0x8a8] sm:$0xff]
    %v293 = vld [vmem:[%s0 + $0x8b0] sm:$0xff]
    %v294 = vld [vmem:[%s0 + $0x8b8] sm:$0xff]
    %v295 = vld [vmem:[%s0 + $0x8c0] sm:$0xff]
    %v296 = vld [vmem:[%s0 + $0x8c8] sm:$0xff]
    %v297 = vld [vmem:[%s0 + $0x8d0] sm:$0xff]
    %v298 = vld [vmem:[%s0 + $0x8d8] sm:$0xff]
    %v299 = vld [vmem:[%s0 + $0x8e0] sm:$0xff]
    %v300 = vld [vmem:[%s0 + $0x8e8] sm:$0xff]
    %v301 = vld [vmem:[%s0 + $0x8f0] sm:$0xff]
    %v302 = vld [vmem:[%s0 + $0x8f8] sm:$0xff]
    %v303 = vld [vmem:[%s0 + $0x900] sm:$0xff]
    %v304 = vld [vmem:[%s0 + $0x908] sm:$0xff]
    %v305 = vld [vmem:[%s0 + $0x910] sm:$0xff]
    %v306 = vld [vmem:[%s0 + $0x918] sm:$0xff]
    %v307 = vld [vmem:[%s0 + $0x920] sm:$0xff]
    %v308 = vld [vmem:[%s0 + $0x928] sm:$0xff]
    %v309 = vld [vmem:[%s0 + $0x930] sm:$0xff]
    %v310 = vld [vmem:[%s0 + $0x938] sm:$0xff]
    %v311 = vld [vmem:[%s0 + $0x940] sm:$0xff]
    %v312 = vld [vmem:[%s0 + $0x948] sm:$0xff]
    %v313 = vld [vmem:[%s0 + $0x950] sm:$0xff]
    %v314 = vld [vmem:[%s0 + $0x958] sm:$0xff]
    %v315 = vld [vmem:[%s0 + $0x960] sm:$0xff]
    %v316 = vld [vmem:[%s0 + $0x968] sm:$0xff]
    %v317 = vld [vmem:[%s0 + $0x970] sm:$0xff]
    %v318 = vld [vmem:[%s0 + $0x978] sm:$0xff]
    %v319 = vld [vmem:[%s0 + $0x980] sm:$0xff]
    %v320 = vld [vmem:[%s0 + $0x988] sm:$0xff]
    %v321 = vld [vmem:[%s0 + $0x990] sm:$0xff]
    %v322 = vld [vmem:[%s0 + $0x998] sm:$0xff]
    %v323 = vld [vmem:[%s0 + $0x9a0] sm:$0xff]
    %v324 = vld [vmem:[%s0 + $0x9a8] sm:$0xff]
    %v325 = vld [vmem:[%s0 + $0x9b0] sm:$0xff]
    %v326 = vld [vmem:[%s0 + $0x9b8] sm:$0xff]
    %v327 = vld [vmem:[%s0 + $0x9c0] sm:$0xff]
    %v328 = vld [vmem:[%s0 + $0x9c8] sm:$0xff]
    %v329 = vld [vmem:[%s0 + $0x9d0] sm:$0xff]
    %v330 = vld [vmem:[%s0 + $0x9d8] sm:$0xff]
    %v331 = vld [vmem:[%s0 + $0x9e0] sm:$0xff]
    %v332 = vld [vmem:[%s0 + $0x9e8] sm:$0xff]
    %v333 = vld [vmem:[%s0 + $0x9f0] sm:$0xff]
    %v334 = vld [vmem:[%s0 + $0x9f8] sm:$0xff]
    %v335 = vld [vmem:[%s0 + $0xa00] sm:$0xff]
    %v336 = vld [vmem:[%s0 + $0xa08] sm:$0xff]
    %v337 = vld [vmem:[%s0 + $0xa10] sm:$0xff]
    %v338 = vld [vmem:[%s0 + $0xa18] sm:$0xff]
    %v339 = vld [vmem:[%s0 + $0xa20] sm:$0xff]
    %v340 = vld [vmem:[%s0 + $0xa28] sm:$0xff]
    %v341 = vld [vmem:[%s0 + $0xa30] sm:$0xff]
    %v342 = vld [vmem:[%s0 + $0xa38] sm:$0xff]
    %v343 = vld [vmem:[%s0 + $0xa40] sm:$0xff]
    %v344 = vld [vmem:[%s0 + $0xa48] sm:$0xff]
    %v345 = vld [vmem:[%s0 + $0xa50] sm:$0xff]
    %v346 = vld [vmem:[%s0 + $0xa58] sm:$0xff]
    %v347 = vld [vmem:[%s0 + $0xa60] sm:$0xff]
    %v348 = vld [vmem:[%s0 + $0xa68] sm:$0xff]
    %v349 = vld [vmem:[%s0 + $0xa70] sm:$0xff]
    %v350 = vld [vmem:[%s0 + $0xa78] sm:$0xff]
    %v351 = vld [vmem:[%s0 + $0xa80] sm:$0xff]
    %v352 = vld [vmem:[%s0 + $0xa88] sm:$0xff]
    %v353 = vld [vmem:[%s0 + $0xa90] sm:$0xff]
    %v354 = vld [vmem:[%s0 + $0xa98] sm:$0xff]
    %v355 = vld [vmem:[%s0 + $0xaa0] sm:$0xff]
    %v356 = vld [vmem:[%s0 + $0xaa8] sm:$0xff]
    %v357 = vld [vmem:[%s0 + $0xab0] sm:$0xff]
    %v358 = vld [vmem:[%s0 + $0xab8] sm:$0xff]
    %v359 = vld [vmem:[%s0 + $0xac0] sm:$0xff]
    %v360 = vld [vmem:[%s0 + $0xac8] sm:$0xff]
    %v361 = vld [vmem:[%s0 + $0xad0] sm:$0xff]
    %v362 = vld [vmem:[%s0 + $0xad8] sm:$0xff]
    %v363 = vld [vmem:[%s0 + $0xae0] sm:$0xff]
    %v364 = vld [vmem:[%s0 + $0xae8] sm:$0xff]
    %v365 = vld [vmem:[%s0 + $0xaf0] sm:$0xff]
    %v366 = vld [vmem:[%s0 + $0xaf8] sm:$0xff]
    %vm367 = vcmask 523264
    %v368 = vsel %vm367, %v15, 0.0
    %369 = vadd.xlane.f32.xlu0 %v368
    %v370 = vpop.xlane.xlu0 %369
    %v371 = vsel %vm367, %v16, 0.0
    %372 = vadd.xlane.f32.xlu0 %v371
    %v373 = vpop.xlane.xlu0 %372
    %v374 = vsel %vm367, %v17, 0.0
    %375 = vadd.xlane.f32.xlu0 %v374
    %v376 = vpop.xlane.xlu0 %375
    %v377 = vsel %vm367, %v18, 0.0
    %378 = vadd.xlane.f32.xlu0 %v377
    %v379 = vpop.xlane.xlu0 %378
    %v380 = vsel %vm367, %v19, 0.0
    %381 = vadd.xlane.f32.xlu0 %v380
    %v382 = vpop.xlane.xlu0 %381
    %v383 = vsel %vm367, %v20, 0.0
    %384 = vadd.xlane.f32.xlu0 %v383
    %v385 = vpop.xlane.xlu0 %384
    %v386 = vsel %vm367, %v21, 0.0
    %387 = vadd.xlane.f32.xlu0 %v386
    %v388 = vpop.xlane.xlu0 %387
    %v389 = vsel %vm367, %v22, 0.0
    %390 = vadd.xlane.f32.xlu0 %v389
    %v391 = vpop.xlane.xlu0 %390
    %v392 = vsel %vm367, %v23, 0.0
    %393 = vadd.xlane.f32.xlu0 %v392
    %v394 = vpop.xlane.xlu0 %393
    %v395 = vsel %vm367, %v24, 0.0
    %396 = vadd.xlane.f32.xlu0 %v395
    %v397 = vpop.xlane.xlu0 %396
    %v398 = vsel %vm367, %v25, 0.0
    %399 = vadd.xlane.f32.xlu0 %v398
    %v400 = vpop.xlane.xlu0 %399
    %v401 = vsel %vm367, %v26, 0.0
    %402 = vadd.xlane.f32.xlu0 %v401
    %v403 = vpop.xlane.xlu0 %402
    %v404 = vsel %vm367, %v27, 0.0
    %405 = vadd.xlane.f32.xlu0 %v404
    %v406 = vpop.xlane.xlu0 %405
    %v407 = vsel %vm367, %v28, 0.0
    %408 = vadd.xlane.f32.xlu0 %v407
    %v409 = vpop.xlane.xlu0 %408
    %v410 = vsel %vm367, %v29, 0.0
    %411 = vadd.xlane.f32.xlu0 %v410
    %v412 = vpop.xlane.xlu0 %411
    %v413 = vsel %vm367, %v30, 0.0
    %414 = vadd.xlane.f32.xlu0 %v413
    %v415 = vpop.xlane.xlu0 %414
    %v416 = vsel %vm367, %v31, 0.0
    %417 = vadd.xlane.f32.xlu0 %v416
    %v418 = vpop.xlane.xlu0 %417
    %v419 = vsel %vm367, %v32, 0.0
    %420 = vadd.xlane.f32.xlu0 %v419
    %v421 = vpop.xlane.xlu0 %420
    %v422 = vsel %vm367, %v33, 0.0
    %423 = vadd.xlane.f32.xlu0 %v422
    %v424 = vpop.xlane.xlu0 %423
    %v425 = vsel %vm367, %v34, 0.0
    %426 = vadd.xlane.f32.xlu0 %v425
    %v427 = vpop.xlane.xlu0 %426
    %v428 = vsel %vm367, %v35, 0.0
    %429 = vadd.xlane.f32.xlu0 %v428
    %v430 = vpop.xlane.xlu0 %429
    %v431 = vsel %vm367, %v36, 0.0
    %432 = vadd.xlane.f32.xlu0 %v431
    %v433 = vpop.xlane.xlu0 %432
    %v434 = vsel %vm367, %v37, 0.0
    %435 = vadd.xlane.f32.xlu0 %v434
    %v436 = vpop.xlane.xlu0 %435
    %v437 = vsel %vm367, %v38, 0.0
    %438 = vadd.xlane.f32.xlu0 %v437
    %v439 = vpop.xlane.xlu0 %438
    %v440 = vsel %vm367, %v39, 0.0
    %441 = vadd.xlane.f32.xlu0 %v440
    %v442 = vpop.xlane.xlu0 %441
    %v443 = vsel %vm367, %v40, 0.0
    %444 = vadd.xlane.f32.xlu0 %v443
    %v445 = vpop.xlane.xlu0 %444
    %v446 = vsel %vm367, %v41, 0.0
    %447 = vadd.xlane.f32.xlu0 %v446
    %v448 = vpop.xlane.xlu0 %447
    %v449 = vsel %vm367, %v42, 0.0
    %450 = vadd.xlane.f32.xlu0 %v449
    %v451 = vpop.xlane.xlu0 %450
    %v452 = vsel %vm367, %v43, 0.0
    %453 = vadd.xlane.f32.xlu0 %v452
    %v454 = vpop.xlane.xlu0 %453
    %v455 = vsel %vm367, %v44, 0.0
    %456 = vadd.xlane.f32.xlu0 %v455
    %v457 = vpop.xlane.xlu0 %456
    %v458 = vsel %vm367, %v45, 0.0
    %459 = vadd.xlane.f32.xlu0 %v458
    %v460 = vpop.xlane.xlu0 %459
    %v461 = vsel %vm367, %v46, 0.0
    %462 = vadd.xlane.f32.xlu0 %v461
    %v463 = vpop.xlane.xlu0 %462
    %v464 = vsel %vm367, %v47, 0.0
    %465 = vadd.xlane.f32.xlu0 %v464
    %v466 = vpop.xlane.xlu0 %465
    %v467 = vsel %vm367, %v48, 0.0
    %468 = vadd.xlane.f32.xlu0 %v467
    %v469 = vpop.xlane.xlu0 %468
    %v470 = vsel %vm367, %v49, 0.0
    %471 = vadd.xlane.f32.xlu0 %v470
    %v472 = vpop.xlane.xlu0 %471
    %v473 = vsel %vm367, %v50, 0.0
    %474 = vadd.xlane.f32.xlu0 %v473
    %v475 = vpop.xlane.xlu0 %474
    %v476 = vsel %vm367, %v51, 0.0
    %477 = vadd.xlane.f32.xlu0 %v476
    %v478 = vpop.xlane.xlu0 %477
    %v479 = vsel %vm367, %v52, 0.0
    %480 = vadd.xlane.f32.xlu0 %v479
    %v481 = vpop.xlane.xlu0 %480
    %v482 = vsel %vm367, %v53, 0.0
    %483 = vadd.xlane.f32.xlu0 %v482
    %v484 = vpop.xlane.xlu0 %483
    %v485 = vsel %vm367, %v54, 0.0
    %486 = vadd.xlane.f32.xlu0 %v485
    %v487 = vpop.xlane.xlu0 %486
    %v488 = vsel %vm367, %v55, 0.0
    %489 = vadd.xlane.f32.xlu0 %v488
    %v490 = vpop.xlane.xlu0 %489
    %v491 = vsel %vm367, %v56, 0.0
    %492 = vadd.xlane.f32.xlu0 %v491
    %v493 = vpop.xlane.xlu0 %492
    %v494 = vsel %vm367, %v57, 0.0
    %495 = vadd.xlane.f32.xlu0 %v494
    %v496 = vpop.xlane.xlu0 %495
    %v497 = vsel %vm367, %v58, 0.0
    %498 = vadd.xlane.f32.xlu0 %v497
    %v499 = vpop.xlane.xlu0 %498
    %v500 = vsel %vm367, %v59, 0.0
    %501 = vadd.xlane.f32.xlu0 %v500
    %v502 = vpop.xlane.xlu0 %501
    %v503 = vsel %vm367, %v60, 0.0
    %504 = vadd.xlane.f32.xlu0 %v503
    %v505 = vpop.xlane.xlu0 %504
    %v506 = vsel %vm367, %v61, 0.0
    %507 = vadd.xlane.f32.xlu0 %v506
    %v508 = vpop.xlane.xlu0 %507
    %v509 = vsel %vm367, %v62, 0.0
    %510 = vadd.xlane.f32.xlu0 %v509
    %v511 = vpop.xlane.xlu0 %510
    %v512 = vsel %vm367, %v63, 0.0
    %513 = vadd.xlane.f32.xlu0 %v512
    %v514 = vpop.xlane.xlu0 %513
    %v515 = vsel %vm367, %v64, 0.0
    %516 = vadd.xlane.f32.xlu0 %v515
    %v517 = vpop.xlane.xlu0 %516
    %v518 = vsel %vm367, %v65, 0.0
    %519 = vadd.xlane.f32.xlu0 %v518
    %v520 = vpop.xlane.xlu0 %519
    %v521 = vsel %vm367, %v66, 0.0
    %522 = vadd.xlane.f32.xlu0 %v521
    %v523 = vpop.xlane.xlu0 %522
    %v524 = vsel %vm367, %v67, 0.0
    %525 = vadd.xlane.f32.xlu0 %v524
    %v526 = vpop.xlane.xlu0 %525
    %v527 = vsel %vm367, %v68, 0.0
    %528 = vadd.xlane.f32.xlu0 %v527
    %v529 = vpop.xlane.xlu0 %528
    %v530 = vsel %vm367, %v69, 0.0
    %531 = vadd.xlane.f32.xlu0 %v530
    %v532 = vpop.xlane.xlu0 %531
    %v533 = vsel %vm367, %v70, 0.0
    %534 = vadd.xlane.f32.xlu0 %v533
    %v535 = vpop.xlane.xlu0 %534
    %v536 = vsel %vm367, %v71, 0.0
    %537 = vadd.xlane.f32.xlu0 %v536
    %v538 = vpop.xlane.xlu0 %537
    %v539 = vsel %vm367, %v72, 0.0
    %540 = vadd.xlane.f32.xlu0 %v539
    %v541 = vpop.xlane.xlu0 %540
    %v542 = vsel %vm367, %v73, 0.0
    %543 = vadd.xlane.f32.xlu0 %v542
    %v544 = vpop.xlane.xlu0 %543
    %v545 = vsel %vm367, %v74, 0.0
    %546 = vadd.xlane.f32.xlu0 %v545
    %v547 = vpop.xlane.xlu0 %546
    %v548 = vsel %vm367, %v75, 0.0
    %549 = vadd.xlane.f32.xlu0 %v548
    %v550 = vpop.xlane.xlu0 %549
    %v551 = vsel %vm367, %v76, 0.0
    %552 = vadd.xlane.f32.xlu0 %v551
    %v553 = vpop.xlane.xlu0 %552
    %v554 = vsel %vm367, %v77, 0.0
    %555 = vadd.xlane.f32.xlu0 %v554
    %v556 = vpop.xlane.xlu0 %555
    %v557 = vsel %vm367, %v78, 0.0
    %558 = vadd.xlane.f32.xlu0 %v557
    %v559 = vpop.xlane.xlu0 %558
    %v560 = vsel %vm367, %v79, 0.0
    %561 = vadd.xlane.f32.xlu0 %v560
    %v562 = vpop.xlane.xlu0 %561
    %v563 = vsel %vm367, %v80, 0.0
    %564 = vadd.xlane.f32.xlu0 %v563
    %v565 = vpop.xlane.xlu0 %564
    %v566 = vsel %vm367, %v81, 0.0
    %567 = vadd.xlane.f32.xlu0 %v566
    %v568 = vpop.xlane.xlu0 %567
    %v569 = vsel %vm367, %v82, 0.0
    %570 = vadd.xlane.f32.xlu0 %v569
    %v571 = vpop.xlane.xlu0 %570
    %v572 = vsel %vm367, %v83, 0.0
    %573 = vadd.xlane.f32.xlu0 %v572
    %v574 = vpop.xlane.xlu0 %573
    %v575 = vsel %vm367, %v84, 0.0
    %576 = vadd.xlane.f32.xlu0 %v575
    %v577 = vpop.xlane.xlu0 %576
    %v578 = vsel %vm367, %v85, 0.0
    %579 = vadd.xlane.f32.xlu0 %v578
    %v580 = vpop.xlane.xlu0 %579
    %v581 = vsel %vm367, %v86, 0.0
    %582 = vadd.xlane.f32.xlu0 %v581
    %v583 = vpop.xlane.xlu0 %582
    %v584 = vsel %vm367, %v87, 0.0
    %585 = vadd.xlane.f32.xlu0 %v584
    %v586 = vpop.xlane.xlu0 %585
    %v587 = vsel %vm367, %v88, 0.0
    %588 = vadd.xlane.f32.xlu0 %v587
    %v589 = vpop.xlane.xlu0 %588
    %v590 = vsel %vm367, %v89, 0.0
    %591 = vadd.xlane.f32.xlu0 %v590
    %v592 = vpop.xlane.xlu0 %591
    %v593 = vsel %vm367, %v90, 0.0
    %594 = vadd.xlane.f32.xlu0 %v593
    %v595 = vpop.xlane.xlu0 %594
    %v596 = vsel %vm367, %v91, 0.0
    %597 = vadd.xlane.f32.xlu0 %v596
    %v598 = vpop.xlane.xlu0 %597
    %v599 = vsel %vm367, %v92, 0.0
    %600 = vadd.xlane.f32.xlu0 %v599
    %v601 = vpop.xlane.xlu0 %600
    %v602 = vsel %vm367, %v93, 0.0
    %603 = vadd.xlane.f32.xlu0 %v602
    %v604 = vpop.xlane.xlu0 %603
    %v605 = vsel %vm367, %v94, 0.0
    %606 = vadd.xlane.f32.xlu0 %v605
    %v607 = vpop.xlane.xlu0 %606
    %v608 = vsel %vm367, %v95, 0.0
    %609 = vadd.xlane.f32.xlu0 %v608
    %v610 = vpop.xlane.xlu0 %609
    %v611 = vsel %vm367, %v96, 0.0
    %612 = vadd.xlane.f32.xlu0 %v611
    %v613 = vpop.xlane.xlu0 %612
    %v614 = vsel %vm367, %v97, 0.0
    %615 = vadd.xlane.f32.xlu0 %v614
    %v616 = vpop.xlane.xlu0 %615
    %v617 = vsel %vm367, %v98, 0.0
    %618 = vadd.xlane.f32.xlu0 %v617
    %v619 = vpop.xlane.xlu0 %618
    %v620 = vsel %vm367, %v99, 0.0
    %621 = vadd.xlane.f32.xlu0 %v620
    %v622 = vpop.xlane.xlu0 %621
    %v623 = vsel %vm367, %v100, 0.0
    %624 = vadd.xlane.f32.xlu0 %v623
    %v625 = vpop.xlane.xlu0 %624
    %v626 = vsel %vm367, %v101, 0.0
    %627 = vadd.xlane.f32.xlu0 %v626
    %v628 = vpop.xlane.xlu0 %627
    %v629 = vsel %vm367, %v102, 0.0
    %630 = vadd.xlane.f32.xlu0 %v629
    %v631 = vpop.xlane.xlu0 %630
    %v632 = vsel %vm367, %v103, 0.0
    %633 = vadd.xlane.f32.xlu0 %v632
    %v634 = vpop.xlane.xlu0 %633
    %v635 = vsel %vm367, %v104, 0.0
    %636 = vadd.xlane.f32.xlu0 %v635
    %v637 = vpop.xlane.xlu0 %636
    %v638 = vsel %vm367, %v105, 0.0
    %639 = vadd.xlane.f32.xlu0 %v638
    %v640 = vpop.xlane.xlu0 %639
    %v641 = vsel %vm367, %v106, 0.0
    %642 = vadd.xlane.f32.xlu0 %v641
    %v643 = vpop.xlane.xlu0 %642
    %v644 = vsel %vm367, %v107, 0.0
    %645 = vadd.xlane.f32.xlu0 %v644
    %v646 = vpop.xlane.xlu0 %645
    %v647 = vsel %vm367, %v108, 0.0
    %648 = vadd.xlane.f32.xlu0 %v647
    %v649 = vpop.xlane.xlu0 %648
    %v650 = vsel %vm367, %v109, 0.0
    %651 = vadd.xlane.f32.xlu0 %v650
    %v652 = vpop.xlane.xlu0 %651
    %v653 = vsel %vm367, %v110, 0.0
    %654 = vadd.xlane.f32.xlu0 %v653
    %v655 = vpop.xlane.xlu0 %654
    %v656 = vsel %vm367, %v111, 0.0
    %657 = vadd.xlane.f32.xlu0 %v656
    %v658 = vpop.xlane.xlu0 %657
    %v659 = vsel %vm367, %v112, 0.0
    %660 = vadd.xlane.f32.xlu0 %v659
    %v661 = vpop.xlane.xlu0 %660
    %v662 = vsel %vm367, %v113, 0.0
    %663 = vadd.xlane.f32.xlu0 %v662
    %v664 = vpop.xlane.xlu0 %663
    %v665 = vsel %vm367, %v114, 0.0
    %666 = vadd.xlane.f32.xlu0 %v665
    %v667 = vpop.xlane.xlu0 %666
    %v668 = vsel %vm367, %v115, 0.0
    %669 = vadd.xlane.f32.xlu0 %v668
    %v670 = vpop.xlane.xlu0 %669
    %v671 = vsel %vm367, %v116, 0.0
    %672 = vadd.xlane.f32.xlu0 %v671
    %v673 = vpop.xlane.xlu0 %672
    %v674 = vsel %vm367, %v117, 0.0
    %675 = vadd.xlane.f32.xlu0 %v674
    %v676 = vpop.xlane.xlu0 %675
    %v677 = vsel %vm367, %v118, 0.0
    %678 = vadd.xlane.f32.xlu0 %v677
    %v679 = vpop.xlane.xlu0 %678
    %v680 = vsel %vm367, %v119, 0.0
    %681 = vadd.xlane.f32.xlu0 %v680
    %v682 = vpop.xlane.xlu0 %681
    %v683 = vsel %vm367, %v120, 0.0
    %684 = vadd.xlane.f32.xlu0 %v683
    %v685 = vpop.xlane.xlu0 %684
    %v686 = vsel %vm367, %v121, 0.0
    %687 = vadd.xlane.f32.xlu0 %v686
    %v688 = vpop.xlane.xlu0 %687
    %v689 = vsel %vm367, %v122, 0.0
    %690 = vadd.xlane.f32.xlu0 %v689
    %v691 = vpop.xlane.xlu0 %690
    %v692 = vsel %vm367, %v123, 0.0
    %693 = vadd.xlane.f32.xlu0 %v692
    %v694 = vpop.xlane.xlu0 %693
    %v695 = vsel %vm367, %v124, 0.0
    %696 = vadd.xlane.f32.xlu0 %v695
    %v697 = vpop.xlane.xlu0 %696
    %v698 = vsel %vm367, %v125, 0.0
    %699 = vadd.xlane.f32.xlu0 %v698
    %v700 = vpop.xlane.xlu0 %699
    %v701 = vsel %vm367, %v126, 0.0
    %702 = vadd.xlane.f32.xlu0 %v701
    %v703 = vpop.xlane.xlu0 %702
    %v704 = vsel %vm367, %v127, 0.0
    %705 = vadd.xlane.f32.xlu0 %v704
    %v706 = vpop.xlane.xlu0 %705
    %v707 = vsel %vm367, %v128, 0.0
    %708 = vadd.xlane.f32.xlu0 %v707
    %v709 = vpop.xlane.xlu0 %708
    %v710 = vsel %vm367, %v129, 0.0
    %711 = vadd.xlane.f32.xlu0 %v710
    %v712 = vpop.xlane.xlu0 %711
    %v713 = vsel %vm367, %v130, 0.0
    %714 = vadd.xlane.f32.xlu0 %v713
    %v715 = vpop.xlane.xlu0 %714
    %v716 = vsel %vm367, %v131, 0.0
    %717 = vadd.xlane.f32.xlu0 %v716
    %v718 = vpop.xlane.xlu0 %717
    %v719 = vsel %vm367, %v132, 0.0
    %720 = vadd.xlane.f32.xlu0 %v719
    %v721 = vpop.xlane.xlu0 %720
    %v722 = vsel %vm367, %v133, 0.0
    %723 = vadd.xlane.f32.xlu0 %v722
    %v724 = vpop.xlane.xlu0 %723
    %v725 = vsel %vm367, %v134, 0.0
    %726 = vadd.xlane.f32.xlu0 %v725
    %v727 = vpop.xlane.xlu0 %726
    %v728 = vsel %vm367, %v135, 0.0
    %729 = vadd.xlane.f32.xlu0 %v728
    %v730 = vpop.xlane.xlu0 %729
    %v731 = vsel %vm367, %v136, 0.0
    %732 = vadd.xlane.f32.xlu0 %v731
    %v733 = vpop.xlane.xlu0 %732
    %v734 = vsel %vm367, %v137, 0.0
    %735 = vadd.xlane.f32.xlu0 %v734
    %v736 = vpop.xlane.xlu0 %735
    %v737 = vsel %vm367, %v138, 0.0
    %738 = vadd.xlane.f32.xlu0 %v737
    %v739 = vpop.xlane.xlu0 %738
    %v740 = vsel %vm367, %v139, 0.0
    %741 = vadd.xlane.f32.xlu0 %v740
    %v742 = vpop.xlane.xlu0 %741
    %v743 = vsel %vm367, %v140, 0.0
    %744 = vadd.xlane.f32.xlu0 %v743
    %v745 = vpop.xlane.xlu0 %744
    %v746 = vsel %vm367, %v141, 0.0
    %747 = vadd.xlane.f32.xlu0 %v746
    %v748 = vpop.xlane.xlu0 %747
    %v749 = vsel %vm367, %v142, 0.0
    %750 = vadd.xlane.f32.xlu0 %v749
    %v751 = vpop.xlane.xlu0 %750
    %v752 = vsel %vm367, %v143, 0.0
    %753 = vadd.xlane.f32.xlu0 %v752
    %v754 = vpop.xlane.xlu0 %753
    %v755 = vsel %vm367, %v144, 0.0
    %756 = vadd.xlane.f32.xlu0 %v755
    %v757 = vpop.xlane.xlu0 %756
    %v758 = vsel %vm367, %v145, 0.0
    %759 = vadd.xlane.f32.xlu0 %v758
    %v760 = vpop.xlane.xlu0 %759
    %v761 = vsel %vm367, %v146, 0.0
    %762 = vadd.xlane.f32.xlu0 %v761
    %v763 = vpop.xlane.xlu0 %762
    %v764 = vsel %vm367, %v147, 0.0
    %765 = vadd.xlane.f32.xlu0 %v764
    %v766 = vpop.xlane.xlu0 %765
    %v767 = vsel %vm367, %v148, 0.0
    %768 = vadd.xlane.f32.xlu0 %v767
    %v769 = vpop.xlane.xlu0 %768
    %v770 = vsel %vm367, %v149, 0.0
    %771 = vadd.xlane.f32.xlu0 %v770
    %v772 = vpop.xlane.xlu0 %771
    %v773 = vsel %vm367, %v150, 0.0
    %774 = vadd.xlane.f32.xlu0 %v773
    %v775 = vpop.xlane.xlu0 %774
    %v776 = vsel %vm367, %v151, 0.0
    %777 = vadd.xlane.f32.xlu0 %v776
    %v778 = vpop.xlane.xlu0 %777
    %v779 = vsel %vm367, %v152, 0.0
    %780 = vadd.xlane.f32.xlu0 %v779
    %v781 = vpop.xlane.xlu0 %780
    %v782 = vsel %vm367, %v153, 0.0
    %783 = vadd.xlane.f32.xlu0 %v782
    %v784 = vpop.xlane.xlu0 %783
    %v785 = vsel %vm367, %v154, 0.0
    %786 = vadd.xlane.f32.xlu0 %v785
    %v787 = vpop.xlane.xlu0 %786
    %v788 = vsel %vm367, %v155, 0.0
    %789 = vadd.xlane.f32.xlu0 %v788
    %v790 = vpop.xlane.xlu0 %789
    %v791 = vsel %vm367, %v156, 0.0
    %792 = vadd.xlane.f32.xlu0 %v791
    %v793 = vpop.xlane.xlu0 %792
    %v794 = vsel %vm367, %v157, 0.0
    %795 = vadd.xlane.f32.xlu0 %v794
    %v796 = vpop.xlane.xlu0 %795
    %v797 = vsel %vm367, %v158, 0.0
    %798 = vadd.xlane.f32.xlu0 %v797
    %v799 = vpop.xlane.xlu0 %798
    %v800 = vsel %vm367, %v159, 0.0
    %801 = vadd.xlane.f32.xlu0 %v800
    %v802 = vpop.xlane.xlu0 %801
    %v803 = vsel %vm367, %v160, 0.0
    %804 = vadd.xlane.f32.xlu0 %v803
    %v805 = vpop.xlane.xlu0 %804
    %v806 = vsel %vm367, %v161, 0.0
    %807 = vadd.xlane.f32.xlu0 %v806
    %v808 = vpop.xlane.xlu0 %807
    %v809 = vsel %vm367, %v162, 0.0
    %810 = vadd.xlane.f32.xlu0 %v809
    %v811 = vpop.xlane.xlu0 %810
    %v812 = vsel %vm367, %v163, 0.0
    %813 = vadd.xlane.f32.xlu0 %v812
    %v814 = vpop.xlane.xlu0 %813
    %v815 = vsel %vm367, %v164, 0.0
    %816 = vadd.xlane.f32.xlu0 %v815
    %v817 = vpop.xlane.xlu0 %816
    %v818 = vsel %vm367, %v165, 0.0
    %819 = vadd.xlane.f32.xlu0 %v818
    %v820 = vpop.xlane.xlu0 %819
    %v821 = vsel %vm367, %v166, 0.0
    %822 = vadd.xlane.f32.xlu0 %v821
    %v823 = vpop.xlane.xlu0 %822
    %v824 = vsel %vm367, %v167, 0.0
    %825 = vadd.xlane.f32.xlu0 %v824
    %v826 = vpop.xlane.xlu0 %825
    %v827 = vsel %vm367, %v168, 0.0
    %828 = vadd.xlane.f32.xlu0 %v827
    %v829 = vpop.xlane.xlu0 %828
    %v830 = vsel %vm367, %v169, 0.0
    %831 = vadd.xlane.f32.xlu0 %v830
    %v832 = vpop.xlane.xlu0 %831
    %v833 = vsel %vm367, %v170, 0.0
    %834 = vadd.xlane.f32.xlu0 %v833
    %v835 = vpop.xlane.xlu0 %834
    %v836 = vsel %vm367, %v171, 0.0
    %837 = vadd.xlane.f32.xlu0 %v836
    %v838 = vpop.xlane.xlu0 %837
    %v839 = vsel %vm367, %v172, 0.0
    %840 = vadd.xlane.f32.xlu0 %v839
    %v841 = vpop.xlane.xlu0 %840
    %v842 = vsel %vm367, %v173, 0.0
    %843 = vadd.xlane.f32.xlu0 %v842
    %v844 = vpop.xlane.xlu0 %843
    %v845 = vsel %vm367, %v174, 0.0
    %846 = vadd.xlane.f32.xlu0 %v845
    %v847 = vpop.xlane.xlu0 %846
    %v848 = vsel %vm367, %v175, 0.0
    %849 = vadd.xlane.f32.xlu0 %v848
    %v850 = vpop.xlane.xlu0 %849
    %v851 = vsel %vm367, %v176, 0.0
    %852 = vadd.xlane.f32.xlu0 %v851
    %v853 = vpop.xlane.xlu0 %852
    %v854 = vsel %vm367, %v177, 0.0
    %855 = vadd.xlane.f32.xlu0 %v854
    %v856 = vpop.xlane.xlu0 %855
    %v857 = vsel %vm367, %v178, 0.0
    %858 = vadd.xlane.f32.xlu0 %v857
    %v859 = vpop.xlane.xlu0 %858
    %v860 = vsel %vm367, %v179, 0.0
    %861 = vadd.xlane.f32.xlu0 %v860
    %v862 = vpop.xlane.xlu0 %861
    %v863 = vsel %vm367, %v180, 0.0
    %864 = vadd.xlane.f32.xlu0 %v863
    %v865 = vpop.xlane.xlu0 %864
    %v866 = vsel %vm367, %v181, 0.0
    %867 = vadd.xlane.f32.xlu0 %v866
    %v868 = vpop.xlane.xlu0 %867
    %v869 = vsel %vm367, %v182, 0.0
    %870 = vadd.xlane.f32.xlu0 %v869
    %v871 = vpop.xlane.xlu0 %870
    %v872 = vsel %vm367, %v183, 0.0
    %873 = vadd.xlane.f32.xlu0 %v872
    %v874 = vpop.xlane.xlu0 %873
    %v875 = vsel %vm367, %v184, 0.0
    %876 = vadd.xlane.f32.xlu0 %v875
    %v877 = vpop.xlane.xlu0 %876
    %v878 = vsel %vm367, %v185, 0.0
    %879 = vadd.xlane.f32.xlu0 %v878
    %v880 = vpop.xlane.xlu0 %879
    %v881 = vsel %vm367, %v186, 0.0
    %882 = vadd.xlane.f32.xlu0 %v881
    %v883 = vpop.xlane.xlu0 %882
    %v884 = vsel %vm367, %v187, 0.0
    %885 = vadd.xlane.f32.xlu0 %v884
    %v886 = vpop.xlane.xlu0 %885
    %v887 = vsel %vm367, %v188, 0.0
    %888 = vadd.xlane.f32.xlu0 %v887
    %v889 = vpop.xlane.xlu0 %888
    %v890 = vsel %vm367, %v189, 0.0
    %891 = vadd.xlane.f32.xlu0 %v890
    %v892 = vpop.xlane.xlu0 %891
    %v893 = vsel %vm367, %v190, 0.0
    %894 = vadd.xlane.f32.xlu0 %v893
    %v895 = vpop.xlane.xlu0 %894
    %v896 = vsel %vm367, %v191, 0.0
    %897 = vadd.xlane.f32.xlu0 %v896
    %v898 = vpop.xlane.xlu0 %897
    %v899 = vsel %vm367, %v192, 0.0
    %900 = vadd.xlane.f32.xlu0 %v899
    %v901 = vpop.xlane.xlu0 %900
    %v902 = vsel %vm367, %v193, 0.0
    %903 = vadd.xlane.f32.xlu0 %v902
    %v904 = vpop.xlane.xlu0 %903
    %v905 = vsel %vm367, %v194, 0.0
    %906 = vadd.xlane.f32.xlu0 %v905
    %v907 = vpop.xlane.xlu0 %906
    %v908 = vsel %vm367, %v195, 0.0
    %909 = vadd.xlane.f32.xlu0 %v908
    %v910 = vpop.xlane.xlu0 %909
    %v911 = vsel %vm367, %v196, 0.0
    %912 = vadd.xlane.f32.xlu0 %v911
    %v913 = vpop.xlane.xlu0 %912
    %v914 = vsel %vm367, %v197, 0.0
    %915 = vadd.xlane.f32.xlu0 %v914
    %v916 = vpop.xlane.xlu0 %915
    %v917 = vsel %vm367, %v198, 0.0
    %918 = vadd.xlane.f32.xlu0 %v917
    %v919 = vpop.xlane.xlu0 %918
    %v920 = vsel %vm367, %v199, 0.0
    %921 = vadd.xlane.f32.xlu0 %v920
    %v922 = vpop.xlane.xlu0 %921
    %v923 = vsel %vm367, %v200, 0.0
    %924 = vadd.xlane.f32.xlu0 %v923
    %v925 = vpop.xlane.xlu0 %924
    %v926 = vsel %vm367, %v201, 0.0
    %927 = vadd.xlane.f32.xlu0 %v926
    %v928 = vpop.xlane.xlu0 %927
    %v929 = vsel %vm367, %v202, 0.0
    %930 = vadd.xlane.f32.xlu0 %v929
    %v931 = vpop.xlane.xlu0 %930
    %v932 = vsel %vm367, %v203, 0.0
    %933 = vadd.xlane.f32.xlu0 %v932
    %v934 = vpop.xlane.xlu0 %933
    %v935 = vsel %vm367, %v204, 0.0
    %936 = vadd.xlane.f32.xlu0 %v935
    %v937 = vpop.xlane.xlu0 %936
    %v938 = vsel %vm367, %v205, 0.0
    %939 = vadd.xlane.f32.xlu0 %v938
    %v940 = vpop.xlane.xlu0 %939
    %v941 = vsel %vm367, %v206, 0.0
    %942 = vadd.xlane.f32.xlu0 %v941
    %v943 = vpop.xlane.xlu0 %942
    %v944 = vsel %vm367, %v207, 0.0
    %945 = vadd.xlane.f32.xlu0 %v944
    %v946 = vpop.xlane.xlu0 %945
    %v947 = vsel %vm367, %v208, 0.0
    %948 = vadd.xlane.f32.xlu0 %v947
    %v949 = vpop.xlane.xlu0 %948
    %v950 = vsel %vm367, %v209, 0.0
    %951 = vadd.xlane.f32.xlu0 %v950
    %v952 = vpop.xlane.xlu0 %951
    %v953 = vsel %vm367, %v210, 0.0
    %954 = vadd.xlane.f32.xlu0 %v953
    %v955 = vpop.xlane.xlu0 %954
    %v956 = vsel %vm367, %v211, 0.0
    %957 = vadd.xlane.f32.xlu0 %v956
    %v958 = vpop.xlane.xlu0 %957
    %v959 = vsel %vm367, %v212, 0.0
    %960 = vadd.xlane.f32.xlu0 %v959
    %v961 = vpop.xlane.xlu0 %960
    %v962 = vsel %vm367, %v213, 0.0
    %963 = vadd.xlane.f32.xlu0 %v962
    %v964 = vpop.xlane.xlu0 %963
    %v965 = vsel %vm367, %v214, 0.0
    %966 = vadd.xlane.f32.xlu0 %v965
    %v967 = vpop.xlane.xlu0 %966
    %v968 = vsel %vm367, %v215, 0.0
    %969 = vadd.xlane.f32.xlu0 %v968
    %v970 = vpop.xlane.xlu0 %969
    %v971 = vsel %vm367, %v216, 0.0
    %972 = vadd.xlane.f32.xlu0 %v971
    %v973 = vpop.xlane.xlu0 %972
    %v974 = vsel %vm367, %v217, 0.0
    %975 = vadd.xlane.f32.xlu0 %v974
    %v976 = vpop.xlane.xlu0 %975
    %v977 = vsel %vm367, %v218, 0.0
    %978 = vadd.xlane.f32.xlu0 %v977
    %v979 = vpop.xlane.xlu0 %978
    %v980 = vsel %vm367, %v219, 0.0
    %981 = vadd.xlane.f32.xlu0 %v980
    %v982 = vpop.xlane.xlu0 %981
    %v983 = vsel %vm367, %v220, 0.0
    %984 = vadd.xlane.f32.xlu0 %v983
    %v985 = vpop.xlane.xlu0 %984
    %v986 = vsel %vm367, %v221, 0.0
    %987 = vadd.xlane.f32.xlu0 %v986
    %v988 = vpop.xlane.xlu0 %987
    %v989 = vsel %vm367, %v222, 0.0
    %990 = vadd.xlane.f32.xlu0 %v989
    %v991 = vpop.xlane.xlu0 %990
    %v992 = vsel %vm367, %v223, 0.0
    %993 = vadd.xlane.f32.xlu0 %v992
    %v994 = vpop.xlane.xlu0 %993
    %v995 = vsel %vm367, %v224, 0.0
    %996 = vadd.xlane.f32.xlu0 %v995
    %v997 = vpop.xlane.xlu0 %996
    %v998 = vsel %vm367, %v225, 0.0
    %999 = vadd.xlane.f32.xlu0 %v998
    %v1000 = vpop.xlane.xlu0 %999
    %v1001 = vsel %vm367, %v226, 0.0
    %1002 = vadd.xlane.f32.xlu0 %v1001
    %v1003 = vpop.xlane.xlu0 %1002
    %v1004 = vsel %vm367, %v227, 0.0
    %1005 = vadd.xlane.f32.xlu0 %v1004
    %v1006 = vpop.xlane.xlu0 %1005
    %v1007 = vsel %vm367, %v228, 0.0
    %1008 = vadd.xlane.f32.xlu0 %v1007
    %v1009 = vpop.xlane.xlu0 %1008
    %v1010 = vsel %vm367, %v229, 0.0
    %1011 = vadd.xlane.f32.xlu0 %v1010
    %v1012 = vpop.xlane.xlu0 %1011
    %v1013 = vsel %vm367, %v230, 0.0
    %1014 = vadd.xlane.f32.xlu0 %v1013
    %v1015 = vpop.xlane.xlu0 %1014
    %v1016 = vsel %vm367, %v231, 0.0
    %1017 = vadd.xlane.f32.xlu0 %v1016
    %v1018 = vpop.xlane.xlu0 %1017
    %v1019 = vsel %vm367, %v232, 0.0
    %1020 = vadd.xlane.f32.xlu0 %v1019
    %v1021 = vpop.xlane.xlu0 %1020
    %v1022 = vsel %vm367, %v233, 0.0
    %1023 = vadd.xlane.f32.xlu0 %v1022
    %v1024 = vpop.xlane.xlu0 %1023
    %v1025 = vsel %vm367, %v234, 0.0
    %1026 = vadd.xlane.f32.xlu0 %v1025
    %v1027 = vpop.xlane.xlu0 %1026
    %v1028 = vsel %vm367, %v235, 0.0
    %1029 = vadd.xlane.f32.xlu0 %v1028
    %v1030 = vpop.xlane.xlu0 %1029
    %v1031 = vsel %vm367, %v236, 0.0
    %1032 = vadd.xlane.f32.xlu0 %v1031
    %v1033 = vpop.xlane.xlu0 %1032
    %v1034 = vsel %vm367, %v237, 0.0
    %1035 = vadd.xlane.f32.xlu0 %v1034
    %v1036 = vpop.xlane.xlu0 %1035
    %v1037 = vsel %vm367, %v238, 0.0
    %1038 = vadd.xlane.f32.xlu0 %v1037
    %v1039 = vpop.xlane.xlu0 %1038
    %v1040 = vsel %vm367, %v239, 0.0
    %1041 = vadd.xlane.f32.xlu0 %v1040
    %v1042 = vpop.xlane.xlu0 %1041
    %v1043 = vsel %vm367, %v240, 0.0
    %1044 = vadd.xlane.f32.xlu0 %v1043
    %v1045 = vpop.xlane.xlu0 %1044
    %v1046 = vsel %vm367, %v241, 0.0
    %1047 = vadd.xlane.f32.xlu0 %v1046
    %v1048 = vpop.xlane.xlu0 %1047
    %v1049 = vsel %vm367, %v242, 0.0
    %1050 = vadd.xlane.f32.xlu0 %v1049
    %v1051 = vpop.xlane.xlu0 %1050
    %v1052 = vsel %vm367, %v243, 0.0
    %1053 = vadd.xlane.f32.xlu0 %v1052
    %v1054 = vpop.xlane.xlu0 %1053
    %v1055 = vsel %vm367, %v244, 0.0
    %1056 = vadd.xlane.f32.xlu0 %v1055
    %v1057 = vpop.xlane.xlu0 %1056
    %v1058 = vsel %vm367, %v245, 0.0
    %1059 = vadd.xlane.f32.xlu0 %v1058
    %v1060 = vpop.xlane.xlu0 %1059
    %v1061 = vsel %vm367, %v246, 0.0
    %1062 = vadd.xlane.f32.xlu0 %v1061
    %v1063 = vpop.xlane.xlu0 %1062
    %v1064 = vsel %vm367, %v247, 0.0
    %1065 = vadd.xlane.f32.xlu0 %v1064
    %v1066 = vpop.xlane.xlu0 %1065
    %v1067 = vsel %vm367, %v248, 0.0
    %1068 = vadd.xlane.f32.xlu0 %v1067
    %v1069 = vpop.xlane.xlu0 %1068
    %v1070 = vsel %vm367, %v249, 0.0
    %1071 = vadd.xlane.f32.xlu0 %v1070
    %v1072 = vpop.xlane.xlu0 %1071
    %v1073 = vsel %vm367, %v250, 0.0
    %1074 = vadd.xlane.f32.xlu0 %v1073
    %v1075 = vpop.xlane.xlu0 %1074
    %v1076 = vsel %vm367, %v251, 0.0
    %1077 = vadd.xlane.f32.xlu0 %v1076
    %v1078 = vpop.xlane.xlu0 %1077
    %v1079 = vsel %vm367, %v252, 0.0
    %1080 = vadd.xlane.f32.xlu0 %v1079
    %v1081 = vpop.xlane.xlu0 %1080
    %v1082 = vsel %vm367, %v253, 0.0
    %1083 = vadd.xlane.f32.xlu0 %v1082
    %v1084 = vpop.xlane.xlu0 %1083
    %v1085 = vsel %vm367, %v254, 0.0
    %1086 = vadd.xlane.f32.xlu0 %v1085
    %v1087 = vpop.xlane.xlu0 %1086
    %v1088 = vsel %vm367, %v255, 0.0
    %1089 = vadd.xlane.f32.xlu0 %v1088
    %v1090 = vpop.xlane.xlu0 %1089
    %v1091 = vsel %vm367, %v256, 0.0
    %1092 = vadd.xlane.f32.xlu0 %v1091
    %v1093 = vpop.xlane.xlu0 %1092
    %v1094 = vsel %vm367, %v257, 0.0
    %1095 = vadd.xlane.f32.xlu0 %v1094
    %v1096 = vpop.xlane.xlu0 %1095
    %v1097 = vsel %vm367, %v258, 0.0
    %1098 = vadd.xlane.f32.xlu0 %v1097
    %v1099 = vpop.xlane.xlu0 %1098
    %v1100 = vsel %vm367, %v259, 0.0
    %1101 = vadd.xlane.f32.xlu0 %v1100
    %v1102 = vpop.xlane.xlu0 %1101
    %v1103 = vsel %vm367, %v260, 0.0
    %1104 = vadd.xlane.f32.xlu0 %v1103
    %v1105 = vpop.xlane.xlu0 %1104
    %v1106 = vsel %vm367, %v261, 0.0
    %1107 = vadd.xlane.f32.xlu0 %v1106
    %v1108 = vpop.xlane.xlu0 %1107
    %v1109 = vsel %vm367, %v262, 0.0
    %1110 = vadd.xlane.f32.xlu0 %v1109
    %v1111 = vpop.xlane.xlu0 %1110
    %v1112 = vsel %vm367, %v263, 0.0
    %1113 = vadd.xlane.f32.xlu0 %v1112
    %v1114 = vpop.xlane.xlu0 %1113
    %v1115 = vsel %vm367, %v264, 0.0
    %1116 = vadd.xlane.f32.xlu0 %v1115
    %v1117 = vpop.xlane.xlu0 %1116
    %v1118 = vsel %vm367, %v265, 0.0
    %1119 = vadd.xlane.f32.xlu0 %v1118
    %v1120 = vpop.xlane.xlu0 %1119
    %v1121 = vsel %vm367, %v266, 0.0
    %1122 = vadd.xlane.f32.xlu0 %v1121
    %v1123 = vpop.xlane.xlu0 %1122
    %v1124 = vsel %vm367, %v267, 0.0
    %1125 = vadd.xlane.f32.xlu0 %v1124
    %v1126 = vpop.xlane.xlu0 %1125
    %v1127 = vsel %vm367, %v268, 0.0
    %1128 = vadd.xlane.f32.xlu0 %v1127
    %v1129 = vpop.xlane.xlu0 %1128
    %v1130 = vsel %vm367, %v269, 0.0
    %1131 = vadd.xlane.f32.xlu0 %v1130
    %v1132 = vpop.xlane.xlu0 %1131
    %v1133 = vsel %vm367, %v270, 0.0
    %1134 = vadd.xlane.f32.xlu0 %v1133
    %v1135 = vpop.xlane.xlu0 %1134
    %v1136 = vsel %vm367, %v271, 0.0
    %1137 = vadd.xlane.f32.xlu0 %v1136
    %v1138 = vpop.xlane.xlu0 %1137
    %v1139 = vsel %vm367, %v272, 0.0
    %1140 = vadd.xlane.f32.xlu0 %v1139
    %v1141 = vpop.xlane.xlu0 %1140
    %v1142 = vsel %vm367, %v273, 0.0
    %1143 = vadd.xlane.f32.xlu0 %v1142
    %v1144 = vpop.xlane.xlu0 %1143
    %v1145 = vsel %vm367, %v274, 0.0
    %1146 = vadd.xlane.f32.xlu0 %v1145
    %v1147 = vpop.xlane.xlu0 %1146
    %v1148 = vsel %vm367, %v275, 0.0
    %1149 = vadd.xlane.f32.xlu0 %v1148
    %v1150 = vpop.xlane.xlu0 %1149
    %v1151 = vsel %vm367, %v276, 0.0
    %1152 = vadd.xlane.f32.xlu0 %v1151
    %v1153 = vpop.xlane.xlu0 %1152
    %v1154 = vsel %vm367, %v277, 0.0
    %1155 = vadd.xlane.f32.xlu0 %v1154
    %v1156 = vpop.xlane.xlu0 %1155
    %v1157 = vsel %vm367, %v278, 0.0
    %1158 = vadd.xlane.f32.xlu0 %v1157
    %v1159 = vpop.xlane.xlu0 %1158
    %v1160 = vsel %vm367, %v279, 0.0
    %1161 = vadd.xlane.f32.xlu0 %v1160
    %v1162 = vpop.xlane.xlu0 %1161
    %v1163 = vsel %vm367, %v280, 0.0
    %1164 = vadd.xlane.f32.xlu0 %v1163
    %v1165 = vpop.xlane.xlu0 %1164
    %v1166 = vsel %vm367, %v281, 0.0
    %1167 = vadd.xlane.f32.xlu0 %v1166
    %v1168 = vpop.xlane.xlu0 %1167
    %v1169 = vsel %vm367, %v282, 0.0
    %1170 = vadd.xlane.f32.xlu0 %v1169
    %v1171 = vpop.xlane.xlu0 %1170
    %v1172 = vsel %vm367, %v283, 0.0
    %1173 = vadd.xlane.f32.xlu0 %v1172
    %v1174 = vpop.xlane.xlu0 %1173
    %v1175 = vsel %vm367, %v284, 0.0
    %1176 = vadd.xlane.f32.xlu0 %v1175
    %v1177 = vpop.xlane.xlu0 %1176
    %v1178 = vsel %vm367, %v285, 0.0
    %1179 = vadd.xlane.f32.xlu0 %v1178
    %v1180 = vpop.xlane.xlu0 %1179
    %v1181 = vsel %vm367, %v286, 0.0
    %1182 = vadd.xlane.f32.xlu0 %v1181
    %v1183 = vpop.xlane.xlu0 %1182
    %v1184 = vsel %vm367, %v287, 0.0
    %1185 = vadd.xlane.f32.xlu0 %v1184
    %v1186 = vpop.xlane.xlu0 %1185
    %v1187 = vsel %vm367, %v288, 0.0
    %1188 = vadd.xlane.f32.xlu0 %v1187
    %v1189 = vpop.xlane.xlu0 %1188
    %v1190 = vsel %vm367, %v289, 0.0
    %1191 = vadd.xlane.f32.xlu0 %v1190
    %v1192 = vpop.xlane.xlu0 %1191
    %v1193 = vsel %vm367, %v290, 0.0
    %1194 = vadd.xlane.f32.xlu0 %v1193
    %v1195 = vpop.xlane.xlu0 %1194
    %v1196 = vsel %vm367, %v291, 0.0
    %1197 = vadd.xlane.f32.xlu0 %v1196
    %v1198 = vpop.xlane.xlu0 %1197
    %v1199 = vsel %vm367, %v292, 0.0
    %1200 = vadd.xlane.f32.xlu0 %v1199
    %v1201 = vpop.xlane.xlu0 %1200
    %v1202 = vsel %vm367, %v293, 0.0
    %1203 = vadd.xlane.f32.xlu0 %v1202
    %v1204 = vpop.xlane.xlu0 %1203
    %v1205 = vsel %vm367, %v294, 0.0
    %1206 = vadd.xlane.f32.xlu0 %v1205
    %v1207 = vpop.xlane.xlu0 %1206
    %v1208 = vsel %vm367, %v295, 0.0
    %1209 = vadd.xlane.f32.xlu0 %v1208
    %v1210 = vpop.xlane.xlu0 %1209
    %v1211 = vsel %vm367, %v296, 0.0
    %1212 = vadd.xlane.f32.xlu0 %v1211
    %v1213 = vpop.xlane.xlu0 %1212
    %v1214 = vsel %vm367, %v297, 0.0
    %1215 = vadd.xlane.f32.xlu0 %v1214
    %v1216 = vpop.xlane.xlu0 %1215
    %v1217 = vsel %vm367, %v298, 0.0
    %1218 = vadd.xlane.f32.xlu0 %v1217
    %v1219 = vpop.xlane.xlu0 %1218
    %v1220 = vsel %vm367, %v299, 0.0
    %1221 = vadd.xlane.f32.xlu0 %v1220
    %v1222 = vpop.xlane.xlu0 %1221
    %v1223 = vsel %vm367, %v300, 0.0
    %1224 = vadd.xlane.f32.xlu0 %v1223
    %v1225 = vpop.xlane.xlu0 %1224
    %v1226 = vsel %vm367, %v301, 0.0
    %1227 = vadd.xlane.f32.xlu0 %v1226
    %v1228 = vpop.xlane.xlu0 %1227
    %v1229 = vsel %vm367, %v302, 0.0
    %1230 = vadd.xlane.f32.xlu0 %v1229
    %v1231 = vpop.xlane.xlu0 %1230
    %v1232 = vsel %vm367, %v303, 0.0
    %1233 = vadd.xlane.f32.xlu0 %v1232
    %v1234 = vpop.xlane.xlu0 %1233
    %v1235 = vsel %vm367, %v304, 0.0
    %1236 = vadd.xlane.f32.xlu0 %v1235
    %v1237 = vpop.xlane.xlu0 %1236
    %v1238 = vsel %vm367, %v305, 0.0
    %1239 = vadd.xlane.f32.xlu0 %v1238
    %v1240 = vpop.xlane.xlu0 %1239
    %v1241 = vsel %vm367, %v306, 0.0
    %1242 = vadd.xlane.f32.xlu0 %v1241
    %v1243 = vpop.xlane.xlu0 %1242
    %v1244 = vsel %vm367, %v307, 0.0
    %1245 = vadd.xlane.f32.xlu0 %v1244
    %v1246 = vpop.xlane.xlu0 %1245
    %v1247 = vsel %vm367, %v308, 0.0
    %1248 = vadd.xlane.f32.xlu0 %v1247
    %v1249 = vpop.xlane.xlu0 %1248
    %v1250 = vsel %vm367, %v309, 0.0
    %1251 = vadd.xlane.f32.xlu0 %v1250
    %v1252 = vpop.xlane.xlu0 %1251
    %v1253 = vsel %vm367, %v310, 0.0
    %1254 = vadd.xlane.f32.xlu0 %v1253
    %v1255 = vpop.xlane.xlu0 %1254
    %v1256 = vsel %vm367, %v311, 0.0
    %1257 = vadd.xlane.f32.xlu0 %v1256
    %v1258 = vpop.xlane.xlu0 %1257
    %v1259 = vsel %vm367, %v312, 0.0
    %1260 = vadd.xlane.f32.xlu0 %v1259
    %v1261 = vpop.xlane.xlu0 %1260
    %v1262 = vsel %vm367, %v313, 0.0
    %1263 = vadd.xlane.f32.xlu0 %v1262
    %v1264 = vpop.xlane.xlu0 %1263
    %v1265 = vsel %vm367, %v314, 0.0
    %1266 = vadd.xlane.f32.xlu0 %v1265
    %v1267 = vpop.xlane.xlu0 %1266
    %v1268 = vsel %vm367, %v315, 0.0
    %1269 = vadd.xlane.f32.xlu0 %v1268
    %v1270 = vpop.xlane.xlu0 %1269
    %v1271 = vsel %vm367, %v316, 0.0
    %1272 = vadd.xlane.f32.xlu0 %v1271
    %v1273 = vpop.xlane.xlu0 %1272
    %v1274 = vsel %vm367, %v317, 0.0
    %1275 = vadd.xlane.f32.xlu0 %v1274
    %v1276 = vpop.xlane.xlu0 %1275
    %v1277 = vsel %vm367, %v318, 0.0
    %1278 = vadd.xlane.f32.xlu0 %v1277
    %v1279 = vpop.xlane.xlu0 %1278
    %v1280 = vsel %vm367, %v319, 0.0
    %1281 = vadd.xlane.f32.xlu0 %v1280
    %v1282 = vpop.xlane.xlu0 %1281
    %v1283 = vsel %vm367, %v320, 0.0
    %1284 = vadd.xlane.f32.xlu0 %v1283
    %v1285 = vpop.xlane.xlu0 %1284
    %v1286 = vsel %vm367, %v321, 0.0
    %1287 = vadd.xlane.f32.xlu0 %v1286
    %v1288 = vpop.xlane.xlu0 %1287
    %v1289 = vsel %vm367, %v322, 0.0
    %1290 = vadd.xlane.f32.xlu0 %v1289
    %v1291 = vpop.xlane.xlu0 %1290
    %v1292 = vsel %vm367, %v323, 0.0
    %1293 = vadd.xlane.f32.xlu0 %v1292
    %v1294 = vpop.xlane.xlu0 %1293
    %v1295 = vsel %vm367, %v324, 0.0
    %1296 = vadd.xlane.f32.xlu0 %v1295
    %v1297 = vpop.xlane.xlu0 %1296
    %v1298 = vsel %vm367, %v325, 0.0
    %1299 = vadd.xlane.f32.xlu0 %v1298
    %v1300 = vpop.xlane.xlu0 %1299
    %v1301 = vsel %vm367, %v326, 0.0
    %1302 = vadd.xlane.f32.xlu0 %v1301
    %v1303 = vpop.xlane.xlu0 %1302
    %v1304 = vsel %vm367, %v327, 0.0
    %1305 = vadd.xlane.f32.xlu0 %v1304
    %v1306 = vpop.xlane.xlu0 %1305
    %v1307 = vsel %vm367, %v328, 0.0
    %1308 = vadd.xlane.f32.xlu0 %v1307
    %v1309 = vpop.xlane.xlu0 %1308
    %v1310 = vsel %vm367, %v329, 0.0
    %1311 = vadd.xlane.f32.xlu0 %v1310
    %v1312 = vpop.xlane.xlu0 %1311
    %v1313 = vsel %vm367, %v330, 0.0
    %1314 = vadd.xlane.f32.xlu0 %v1313
    %v1315 = vpop.xlane.xlu0 %1314
    %v1316 = vsel %vm367, %v331, 0.0
    %1317 = vadd.xlane.f32.xlu0 %v1316
    %v1318 = vpop.xlane.xlu0 %1317
    %v1319 = vsel %vm367, %v332, 0.0
    %1320 = vadd.xlane.f32.xlu0 %v1319
    %v1321 = vpop.xlane.xlu0 %1320
    %v1322 = vsel %vm367, %v333, 0.0
    %1323 = vadd.xlane.f32.xlu0 %v1322
    %v1324 = vpop.xlane.xlu0 %1323
    %v1325 = vsel %vm367, %v334, 0.0
    %1326 = vadd.xlane.f32.xlu0 %v1325
    %v1327 = vpop.xlane.xlu0 %1326
    %v1328 = vsel %vm367, %v335, 0.0
    %1329 = vadd.xlane.f32.xlu0 %v1328
    %v1330 = vpop.xlane.xlu0 %1329
    %v1331 = vsel %vm367, %v336, 0.0
    %1332 = vadd.xlane.f32.xlu0 %v1331
    %v1333 = vpop.xlane.xlu0 %1332
    %v1334 = vsel %vm367, %v337, 0.0
    %1335 = vadd.xlane.f32.xlu0 %v1334
    %v1336 = vpop.xlane.xlu0 %1335
    %v1337 = vsel %vm367, %v338, 0.0
    %1338 = vadd.xlane.f32.xlu0 %v1337
    %v1339 = vpop.xlane.xlu0 %1338
    %v1340 = vsel %vm367, %v339, 0.0
    %1341 = vadd.xlane.f32.xlu0 %v1340
    %v1342 = vpop.xlane.xlu0 %1341
    %v1343 = vsel %vm367, %v340, 0.0
    %1344 = vadd.xlane.f32.xlu0 %v1343
    %v1345 = vpop.xlane.xlu0 %1344
    %v1346 = vsel %vm367, %v341, 0.0
    %1347 = vadd.xlane.f32.xlu0 %v1346
    %v1348 = vpop.xlane.xlu0 %1347
    %v1349 = vsel %vm367, %v342, 0.0
    %1350 = vadd.xlane.f32.xlu0 %v1349
    %v1351 = vpop.xlane.xlu0 %1350
    %v1352 = vsel %vm367, %v343, 0.0
    %1353 = vadd.xlane.f32.xlu0 %v1352
    %v1354 = vpop.xlane.xlu0 %1353
    %v1355 = vsel %vm367, %v344, 0.0
    %1356 = vadd.xlane.f32.xlu0 %v1355
    %v1357 = vpop.xlane.xlu0 %1356
    %v1358 = vsel %vm367, %v345, 0.0
    %1359 = vadd.xlane.f32.xlu0 %v1358
    %v1360 = vpop.xlane.xlu0 %1359
    %v1361 = vsel %vm367, %v346, 0.0
    %1362 = vadd.xlane.f32.xlu0 %v1361
    %v1363 = vpop.xlane.xlu0 %1362
    %v1364 = vsel %vm367, %v347, 0.0
    %1365 = vadd.xlane.f32.xlu0 %v1364
    %v1366 = vpop.xlane.xlu0 %1365
    %v1367 = vsel %vm367, %v348, 0.0
    %1368 = vadd.xlane.f32.xlu0 %v1367
    %v1369 = vpop.xlane.xlu0 %1368
    %v1370 = vsel %vm367, %v349, 0.0
    %1371 = vadd.xlane.f32.xlu0 %v1370
    %v1372 = vpop.xlane.xlu0 %1371
    %v1373 = vsel %vm367, %v350, 0.0
    %1374 = vadd.xlane.f32.xlu0 %v1373
    %v1375 = vpop.xlane.xlu0 %1374
    %v1376 = vsel %vm367, %v351, 0.0
    %1377 = vadd.xlane.f32.xlu0 %v1376
    %v1378 = vpop.xlane.xlu0 %1377
    %v1379 = vsel %vm367, %v352, 0.0
    %1380 = vadd.xlane.f32.xlu0 %v1379
    %v1381 = vpop.xlane.xlu0 %1380
    %v1382 = vsel %vm367, %v353, 0.0
    %1383 = vadd.xlane.f32.xlu0 %v1382
    %v1384 = vpop.xlane.xlu0 %1383
    %v1385 = vsel %vm367, %v354, 0.0
    %1386 = vadd.xlane.f32.xlu0 %v1385
    %v1387 = vpop.xlane.xlu0 %1386
    %v1388 = vsel %vm367, %v355, 0.0
    %1389 = vadd.xlane.f32.xlu0 %v1388
    %v1390 = vpop.xlane.xlu0 %1389
    %v1391 = vsel %vm367, %v356, 0.0
    %1392 = vadd.xlane.f32.xlu0 %v1391
    %v1393 = vpop.xlane.xlu0 %1392
    %v1394 = vsel %vm367, %v357, 0.0
    %1395 = vadd.xlane.f32.xlu0 %v1394
    %v1396 = vpop.xlane.xlu0 %1395
    %v1397 = vsel %vm367, %v358, 0.0
    %1398 = vadd.xlane.f32.xlu0 %v1397
    %v1399 = vpop.xlane.xlu0 %1398
    %v1400 = vsel %vm367, %v359, 0.0
    %1401 = vadd.xlane.f32.xlu0 %v1400
    %v1402 = vpop.xlane.xlu0 %1401
    %v1403 = vsel %vm367, %v360, 0.0
    %1404 = vadd.xlane.f32.xlu0 %v1403
    %v1405 = vpop.xlane.xlu0 %1404
    %v1406 = vsel %vm367, %v361, 0.0
    %1407 = vadd.xlane.f32.xlu0 %v1406
    %v1408 = vpop.xlane.xlu0 %1407
    %v1409 = vsel %vm367, %v362, 0.0
    %1410 = vadd.xlane.f32.xlu0 %v1409
    %v1411 = vpop.xlane.xlu0 %1410
    %v1412 = vsel %vm367, %v363, 0.0
    %1413 = vadd.xlane.f32.xlu0 %v1412
    %v1414 = vpop.xlane.xlu0 %1413
    %v1415 = vsel %vm367, %v364, 0.0
    %1416 = vadd.xlane.f32.xlu0 %v1415
    %v1417 = vpop.xlane.xlu0 %1416
    %v1418 = vsel %vm367, %v365, 0.0
    %1419 = vadd.xlane.f32.xlu0 %v1418
    %v1420 = vpop.xlane.xlu0 %1419
    %v1421 = vsel %vm367, %v366, 0.0
    %1422 = vadd.xlane.f32.xlu0 %v1421
    %v1423 = vpop.xlane.xlu0 %1422
    %v1424 = vld [vmem:[%s1] sm:$0xff]
    %v1425 = vld [vmem:[%s1 + $0x8] sm:$0xff]
    %v1426 = vld [vmem:[%s1 + $0x10] sm:$0xff]
    %v1427 = vld [vmem:[%s1 + $0x18] sm:$0xff]
    %v1428 = vld [vmem:[%s1 + $0x20] sm:$0xff]
    %v1429 = vld [vmem:[%s1 + $0x28] sm:$0xff]
    %v1430 = vld [vmem:[%s1 + $0x30] sm:$0xff]
    %v1431 = vld [vmem:[%s1 + $0x38] sm:$0xff]
    %v1432 = vld [vmem:[%s1 + $0x40] sm:$0xff]
    %v1433 = vld [vmem:[%s1 + $0x48] sm:$0xff]
    %v1434 = vld [vmem:[%s1 + $0x50] sm:$0xff]
    %v1435 = vld [vmem:[%s1 + $0x58] sm:$0xff]
    %v1436 = vld [vmem:[%s1 + $0x60] sm:$0xff]
    %v1437 = vld [vmem:[%s1 + $0x68] sm:$0xff]
    %v1438 = vld [vmem:[%s1 + $0x70] sm:$0xff]
    %v1439 = vld [vmem:[%s1 + $0x78] sm:$0xff]
    %v1440 = vld [vmem:[%s1 + $0x80] sm:$0xff]
    %v1441 = vld [vmem:[%s1 + $0x88] sm:$0xff]
    %v1442 = vld [vmem:[%s1 + $0x90] sm:$0xff]
    %v1443 = vld [vmem:[%s1 + $0x98] sm:$0xff]
    %v1444 = vld [vmem:[%s1 + $0xa0] sm:$0xff]
    %v1445 = vld [vmem:[%s1 + $0xa8] sm:$0xff]
    %v1446 = vld [vmem:[%s1 + $0xb0] sm:$0xff]
    %v1447 = vld [vmem:[%s1 + $0xb8] sm:$0xff]
    %v1448 = vld [vmem:[%s1 + $0xc0] sm:$0xff]
    %v1449 = vld [vmem:[%s1 + $0xc8] sm:$0xff]
    %v1450 = vld [vmem:[%s1 + $0xd0] sm:$0xff]
    %v1451 = vld [vmem:[%s1 + $0xd8] sm:$0xff]
    %v1452 = vld [vmem:[%s1 + $0xe0] sm:$0xff]
    %v1453 = vld [vmem:[%s1 + $0xe8] sm:$0xff]
    %v1454 = vld [vmem:[%s1 + $0xf0] sm:$0xff]
    %v1455 = vld [vmem:[%s1 + $0xf8] sm:$0xff]
    %v1456 = vld [vmem:[%s1 + $0x100] sm:$0xff]
    %v1457 = vld [vmem:[%s1 + $0x108] sm:$0xff]
    %v1458 = vld [vmem:[%s1 + $0x110] sm:$0xff]
    %v1459 = vld [vmem:[%s1 + $0x118] sm:$0xff]
    %v1460 = vld [vmem:[%s1 + $0x120] sm:$0xff]
    %v1461 = vld [vmem:[%s1 + $0x128] sm:$0xff]
    %v1462 = vld [vmem:[%s1 + $0x130] sm:$0xff]
    %v1463 = vld [vmem:[%s1 + $0x138] sm:$0xff]
    %v1464 = vld [vmem:[%s1 + $0x140] sm:$0xff]
    %v1465 = vld [vmem:[%s1 + $0x148] sm:$0xff]
    %v1466 = vld [vmem:[%s1 + $0x150] sm:$0xff]
    %v1467 = vld [vmem:[%s1 + $0x158] sm:$0xff]
    %v1468 = vld [vmem:[%s1 + $0x160] sm:$0xff]
    %v1469 = vld [vmem:[%s1 + $0x168] sm:$0xff]
    %v1470 = vld [vmem:[%s1 + $0x170] sm:$0xff]
    %v1471 = vld [vmem:[%s1 + $0x178] sm:$0xff]
    %v1472 = vld [vmem:[%s1 + $0x180] sm:$0xff]
    %v1473 = vld [vmem:[%s1 + $0x188] sm:$0xff]
    %v1474 = vld [vmem:[%s1 + $0x190] sm:$0xff]
    %v1475 = vld [vmem:[%s1 + $0x198] sm:$0xff]
    %v1476 = vld [vmem:[%s1 + $0x1a0] sm:$0xff]
    %v1477 = vld [vmem:[%s1 + $0x1a8] sm:$0xff]
    %v1478 = vld [vmem:[%s1 + $0x1b0] sm:$0xff]
    %v1479 = vld [vmem:[%s1 + $0x1b8] sm:$0xff]
    %v1480 = vld [vmem:[%s1 + $0x1c0] sm:$0xff]
    %v1481 = vld [vmem:[%s1 + $0x1c8] sm:$0xff]
    %v1482 = vld [vmem:[%s1 + $0x1d0] sm:$0xff]
    %v1483 = vld [vmem:[%s1 + $0x1d8] sm:$0xff]
    %v1484 = vld [vmem:[%s1 + $0x1e0] sm:$0xff]
    %v1485 = vld [vmem:[%s1 + $0x1e8] sm:$0xff]
    %v1486 = vld [vmem:[%s1 + $0x1f0] sm:$0xff]
    %v1487 = vld [vmem:[%s1 + $0x1f8] sm:$0xff]
    %v1488 = vld [vmem:[%s1 + $0x200] sm:$0xff]
    %v1489 = vld [vmem:[%s1 + $0x208] sm:$0xff]
    %v1490 = vld [vmem:[%s1 + $0x210] sm:$0xff]
    %v1491 = vld [vmem:[%s1 + $0x218] sm:$0xff]
    %v1492 = vld [vmem:[%s1 + $0x220] sm:$0xff]
    %v1493 = vld [vmem:[%s1 + $0x228] sm:$0xff]
    %v1494 = vld [vmem:[%s1 + $0x230] sm:$0xff]
    %v1495 = vld [vmem:[%s1 + $0x238] sm:$0xff]
    %v1496 = vld [vmem:[%s1 + $0x240] sm:$0xff]
    %v1497 = vld [vmem:[%s1 + $0x248] sm:$0xff]
    %v1498 = vld [vmem:[%s1 + $0x250] sm:$0xff]
    %v1499 = vld [vmem:[%s1 + $0x258] sm:$0xff]
    %v1500 = vld [vmem:[%s1 + $0x260] sm:$0xff]
    %v1501 = vld [vmem:[%s1 + $0x268] sm:$0xff]
    %v1502 = vld [vmem:[%s1 + $0x270] sm:$0xff]
    %v1503 = vld [vmem:[%s1 + $0x278] sm:$0xff]
    %v1504 = vld [vmem:[%s1 + $0x280] sm:$0xff]
    %v1505 = vld [vmem:[%s1 + $0x288] sm:$0xff]
    %v1506 = vld [vmem:[%s1 + $0x290] sm:$0xff]
    %v1507 = vld [vmem:[%s1 + $0x298] sm:$0xff]
    %v1508 = vld [vmem:[%s1 + $0x2a0] sm:$0xff]
    %v1509 = vld [vmem:[%s1 + $0x2a8] sm:$0xff]
    %v1510 = vld [vmem:[%s1 + $0x2b0] sm:$0xff]
    %v1511 = vld [vmem:[%s1 + $0x2b8] sm:$0xff]
    %v1512 = vld [vmem:[%s1 + $0x2c0] sm:$0xff]
    %v1513 = vld [vmem:[%s1 + $0x2c8] sm:$0xff]
    %v1514 = vld [vmem:[%s1 + $0x2d0] sm:$0xff]
    %v1515 = vld [vmem:[%s1 + $0x2d8] sm:$0xff]
    %v1516 = vld [vmem:[%s1 + $0x2e0] sm:$0xff]
    %v1517 = vld [vmem:[%s1 + $0x2e8] sm:$0xff]
    %v1518 = vld [vmem:[%s1 + $0x2f0] sm:$0xff]
    %v1519 = vld [vmem:[%s1 + $0x2f8] sm:$0xff]
    %v1520 = vld [vmem:[%s1 + $0x300] sm:$0xff]
    %v1521 = vld [vmem:[%s1 + $0x308] sm:$0xff]
    %v1522 = vld [vmem:[%s1 + $0x310] sm:$0xff]
    %v1523 = vld [vmem:[%s1 + $0x318] sm:$0xff]
    %v1524 = vld [vmem:[%s1 + $0x320] sm:$0xff]
    %v1525 = vld [vmem:[%s1 + $0x328] sm:$0xff]
    %v1526 = vld [vmem:[%s1 + $0x330] sm:$0xff]
    %v1527 = vld [vmem:[%s1 + $0x338] sm:$0xff]
    %v1528 = vld [vmem:[%s1 + $0x340] sm:$0xff]
    %v1529 = vld [vmem:[%s1 + $0x348] sm:$0xff]
    %v1530 = vld [vmem:[%s1 + $0x350] sm:$0xff]
    %v1531 = vld [vmem:[%s1 + $0x358] sm:$0xff]
    %v1532 = vld [vmem:[%s1 + $0x360] sm:$0xff]
    %v1533 = vld [vmem:[%s1 + $0x368] sm:$0xff]
    %v1534 = vld [vmem:[%s1 + $0x370] sm:$0xff]
    %v1535 = vld [vmem:[%s1 + $0x378] sm:$0xff]
    %v1536 = vld [vmem:[%s1 + $0x380] sm:$0xff]
    %v1537 = vld [vmem:[%s1 + $0x388] sm:$0xff]
    %v1538 = vld [vmem:[%s1 + $0x390] sm:$0xff]
    %v1539 = vld [vmem:[%s1 + $0x398] sm:$0xff]
    %v1540 = vld [vmem:[%s1 + $0x3a0] sm:$0xff]
    %v1541 = vld [vmem:[%s1 + $0x3a8] sm:$0xff]
    %v1542 = vld [vmem:[%s1 + $0x3b0] sm:$0xff]
    %v1543 = vld [vmem:[%s1 + $0x3b8] sm:$0xff]
    %v1544 = vld [vmem:[%s1 + $0x3c0] sm:$0xff]
    %v1545 = vld [vmem:[%s1 + $0x3c8] sm:$0xff]
    %v1546 = vld [vmem:[%s1 + $0x3d0] sm:$0xff]
    %v1547 = vld [vmem:[%s1 + $0x3d8] sm:$0xff]
    %v1548 = vld [vmem:[%s1 + $0x3e0] sm:$0xff]
    %v1549 = vld [vmem:[%s1 + $0x3e8] sm:$0xff]
    %v1550 = vld [vmem:[%s1 + $0x3f0] sm:$0xff]
    %v1551 = vld [vmem:[%s1 + $0x3f8] sm:$0xff]
    %v1552 = vld [vmem:[%s1 + $0x400] sm:$0xff]
    %v1553 = vld [vmem:[%s1 + $0x408] sm:$0xff]
    %v1554 = vld [vmem:[%s1 + $0x410] sm:$0xff]
    %v1555 = vld [vmem:[%s1 + $0x418] sm:$0xff]
    %v1556 = vld [vmem:[%s1 + $0x420] sm:$0xff]
    %v1557 = vld [vmem:[%s1 + $0x428] sm:$0xff]
    %v1558 = vld [vmem:[%s1 + $0x430] sm:$0xff]
    %v1559 = vld [vmem:[%s1 + $0x438] sm:$0xff]
    %v1560 = vld [vmem:[%s1 + $0x440] sm:$0xff]
    %v1561 = vld [vmem:[%s1 + $0x448] sm:$0xff]
    %v1562 = vld [vmem:[%s1 + $0x450] sm:$0xff]
    %v1563 = vld [vmem:[%s1 + $0x458] sm:$0xff]
    %v1564 = vld [vmem:[%s1 + $0x460] sm:$0xff]
    %v1565 = vld [vmem:[%s1 + $0x468] sm:$0xff]
    %v1566 = vld [vmem:[%s1 + $0x470] sm:$0xff]
    %v1567 = vld [vmem:[%s1 + $0x478] sm:$0xff]
    %v1568 = vld [vmem:[%s1 + $0x480] sm:$0xff]
    %v1569 = vld [vmem:[%s1 + $0x488] sm:$0xff]
    %v1570 = vld [vmem:[%s1 + $0x490] sm:$0xff]
    %v1571 = vld [vmem:[%s1 + $0x498] sm:$0xff]
    %v1572 = vld [vmem:[%s1 + $0x4a0] sm:$0xff]
    %v1573 = vld [vmem:[%s1 + $0x4a8] sm:$0xff]
    %v1574 = vld [vmem:[%s1 + $0x4b0] sm:$0xff]
    %v1575 = vld [vmem:[%s1 + $0x4b8] sm:$0xff]
    %v1576 = vld [vmem:[%s1 + $0x4c0] sm:$0xff]
    %v1577 = vld [vmem:[%s1 + $0x4c8] sm:$0xff]
    %v1578 = vld [vmem:[%s1 + $0x4d0] sm:$0xff]
    %v1579 = vld [vmem:[%s1 + $0x4d8] sm:$0xff]
    %v1580 = vld [vmem:[%s1 + $0x4e0] sm:$0xff]
    %v1581 = vld [vmem:[%s1 + $0x4e8] sm:$0xff]
    %v1582 = vld [vmem:[%s1 + $0x4f0] sm:$0xff]
    %v1583 = vld [vmem:[%s1 + $0x4f8] sm:$0xff]
    %v1584 = vld [vmem:[%s1 + $0x500] sm:$0xff]
    %v1585 = vld [vmem:[%s1 + $0x508] sm:$0xff]
    %v1586 = vld [vmem:[%s1 + $0x510] sm:$0xff]
    %v1587 = vld [vmem:[%s1 + $0x518] sm:$0xff]
    %v1588 = vld [vmem:[%s1 + $0x520] sm:$0xff]
    %v1589 = vld [vmem:[%s1 + $0x528] sm:$0xff]
    %v1590 = vld [vmem:[%s1 + $0x530] sm:$0xff]
    %v1591 = vld [vmem:[%s1 + $0x538] sm:$0xff]
    %v1592 = vld [vmem:[%s1 + $0x540] sm:$0xff]
    %v1593 = vld [vmem:[%s1 + $0x548] sm:$0xff]
    %v1594 = vld [vmem:[%s1 + $0x550] sm:$0xff]
    %v1595 = vld [vmem:[%s1 + $0x558] sm:$0xff]
    %v1596 = vld [vmem:[%s1 + $0x560] sm:$0xff]
    %v1597 = vld [vmem:[%s1 + $0x568] sm:$0xff]
    %v1598 = vld [vmem:[%s1 + $0x570] sm:$0xff]
    %v1599 = vld [vmem:[%s1 + $0x578] sm:$0xff]
    %v1600 = vld [vmem:[%s2] sm:$0x1]
    %v1602 = vlaneseq
    %v1603 = vshrl.u32 %v1602, 7
    %v1604 = vsub.s32 0, %v1603
    %v1605 = vrot.slane %v1600, %v1604
    %v1959 = vlaneseq
    %v1960 = vand.u32 %v1959, 127
    %v1961 = vlaneseq
    %v1962 = vshrl.u32 %v1961, 7
    %v1963 = vsub.s32 %v1960, %v1962
    %v1964 = vrot.slane %v370, %v1963
    %v1965 = vadd.s32 %v1960, 4294967288
    %v1966 = vlaneseq
    %v1967 = vshrl.u32 %v1966, 7
    %v1968 = vsub.s32 %v1965, %v1967
    %v1969 = vrot.slane %v373, %v1968
    %vm1970 = vcmask 130112
    %v1971 = vsel %vm1970, %v1969, %v1964
    %v1972 = vadd.s32 %v1960, 4294967280
    %v1973 = vlaneseq
    %v1974 = vshrl.u32 %v1973, 7
    %v1975 = vsub.s32 %v1972, %v1974
    %v1976 = vrot.slane %v376, %v1975
    %vm1977 = vcmask 195712
    %v1978 = vsel %vm1977, %v1976, %v1971
    %v1979 = vadd.s32 %v1960, 4294967272
    %v1980 = vlaneseq
    %v1981 = vshrl.u32 %v1980, 7
    %v1982 = vsub.s32 %v1979, %v1981
    %v1983 = vrot.slane %v379, %v1982
    %vm1984 = vcmask 261312
    %v1985 = vsel %vm1984, %v1983, %v1978
    %v1986 = vadd.s32 %v1960, 4294967264
    %v1987 = vlaneseq
    %v1988 = vshrl.u32 %v1987, 7
    %v1989 = vsub.s32 %v1986, %v1988
    %v1990 = vrot.slane %v382, %v1989
    %vm1991 = vcmask 326912
    %v1992 = vsel %vm1991, %v1990, %v1985
    %v1993 = vadd.s32 %v1960, 4294967256
    %v1994 = vlaneseq
    %v1995 = vshrl.u32 %v1994, 7
    %v1996 = vsub.s32 %v1993, %v1995
    %v1997 = vrot.slane %v385, %v1996
    %vm1998 = vcmask 392512
    %v1999 = vsel %vm1998, %v1997, %v1992
    %v2000 = vadd.s32 %v1960, 4294967248
    %v2001 = vlaneseq
    %v2002 = vshrl.u32 %v2001, 7
    %v2003 = vsub.s32 %v2000, %v2002
    %v2004 = vrot.slane %v388, %v2003
    %vm2005 = vcmask 458112
    %v2006 = vsel %vm2005, %v2004, %v1999
    %v2007 = vadd.s32 %v1960, 4294967240
    %v2008 = vlaneseq
    %v2009 = vshrl.u32 %v2008, 7
    %v2010 = vsub.s32 %v2007, %v2009
    %v2011 = vrot.slane %v391, %v2010
    %vm2012 = vcmask 523712
    %v2013 = vsel %vm2012, %v2011, %v2006
    %v2014 = vadd.s32 %v1960, 4294967232
    %v2015 = vlaneseq
    %v2016 = vshrl.u32 %v2015, 7
    %v2017 = vsub.s32 %v2014, %v2016
    %v2018 = vrot.slane %v394, %v2017
    %vm2019 = vcmask 589312
    %v2020 = vsel %vm2019, %v2018, %v2013
    %v2021 = vadd.s32 %v1960, 4294967224
    %v2022 = vlaneseq
    %v2023 = vshrl.u32 %v2022, 7
    %v2024 = vsub.s32 %v2021, %v2023
    %v2025 = vrot.slane %v397, %v2024
    %vm2026 = vcmask 654912
    %v2027 = vsel %vm2026, %v2025, %v2020
    %v2028 = vadd.s32 %v1960, 4294967216
    %v2029 = vlaneseq
    %v2030 = vshrl.u32 %v2029, 7
    %v2031 = vsub.s32 %v2028, %v2030
    %v2032 = vrot.slane %v400, %v2031
    %vm2033 = vcmask 720512
    %v2034 = vsel %vm2033, %v2032, %v2027
    %v2035 = vadd.s32 %v1960, 4294967208
    %v2036 = vlaneseq
    %v2037 = vshrl.u32 %v2036, 7
    %v2038 = vsub.s32 %v2035, %v2037
    %v2039 = vrot.slane %v403, %v2038
    %vm2040 = vcmask 786112
    %v2041 = vsel %vm2040, %v2039, %v2034
    %v2042 = vadd.s32 %v1960, 4294967200
    %v2043 = vlaneseq
    %v2044 = vshrl.u32 %v2043, 7
    %v2045 = vsub.s32 %v2042, %v2044
    %v2046 = vrot.slane %v406, %v2045
    %vm2047 = vcmask 851712
    %v2048 = vsel %vm2047, %v2046, %v2041
    %v2049 = vadd.s32 %v1960, 4294967192
    %v2050 = vlaneseq
    %v2051 = vshrl.u32 %v2050, 7
    %v2052 = vsub.s32 %v2049, %v2051
    %v2053 = vrot.slane %v409, %v2052
    %vm2054 = vcmask 917312
    %v2055 = vsel %vm2054, %v2053, %v2048
    %v2056 = vadd.s32 %v1960, 4294967184
    %v2057 = vlaneseq
    %v2058 = vshrl.u32 %v2057, 7
    %v2059 = vsub.s32 %v2056, %v2058
    %v2060 = vrot.slane %v412, %v2059
    %vm2061 = vcmask 982912
    %v2062 = vsel %vm2061, %v2060, %v2055
    %v2063 = vadd.s32 %v1960, 4294967176
    %v2064 = vlaneseq
    %v2065 = vshrl.u32 %v2064, 7
    %v2066 = vsub.s32 %v2063, %v2065
    %v2067 = vrot.slane %v415, %v2066
    %vm2068 = vcmask 1048512
    %v2069 = vsel %vm2068, %v2067, %v2062
    %v2070 = vlaneseq
    %v2071 = vshrl.u32 %v2070, 7
    %v2072 = vsub.s32 %v1960, %v2071
    %v2073 = vrot.slane %v418, %v2072
    %v2074 = vlaneseq
    %v2075 = vshrl.u32 %v2074, 7
    %v2076 = vsub.s32 %v1965, %v2075
    %v2077 = vrot.slane %v421, %v2076
    %v2078 = vsel %vm1970, %v2077, %v2073
    %v2079 = vlaneseq
    %v2080 = vshrl.u32 %v2079, 7
    %v2081 = vsub.s32 %v1972, %v2080
    %v2082 = vrot.slane %v424, %v2081
    %v2083 = vsel %vm1977, %v2082, %v2078
    %v2084 = vlaneseq
    %v2085 = vshrl.u32 %v2084, 7
    %v2086 = vsub.s32 %v1979, %v2085
    %v2087 = vrot.slane %v427, %v2086
    %v2088 = vsel %vm1984, %v2087, %v2083
    %v2089 = vlaneseq
    %v2090 = vshrl.u32 %v2089, 7
    %v2091 = vsub.s32 %v1986, %v2090
    %v2092 = vrot.slane %v430, %v2091
    %v2093 = vsel %vm1991, %v2092, %v2088
    %v2094 = vlaneseq
    %v2095 = vshrl.u32 %v2094, 7
    %v2096 = vsub.s32 %v1993, %v2095
    %v2097 = vrot.slane %v433, %v2096
    %v2098 = vsel %vm1998, %v2097, %v2093
    %v2099 = vlaneseq
    %v2100 = vshrl.u32 %v2099, 7
    %v2101 = vsub.s32 %v2000, %v2100
    %v2102 = vrot.slane %v436, %v2101
    %v2103 = vsel %vm2005, %v2102, %v2098
    %v2104 = vlaneseq
    %v2105 = vshrl.u32 %v2104, 7
    %v2106 = vsub.s32 %v2007, %v2105
    %v2107 = vrot.slane %v439, %v2106
    %v2108 = vsel %vm2012, %v2107, %v2103
    %v2109 = vlaneseq
    %v2110 = vshrl.u32 %v2109, 7
    %v2111 = vsub.s32 %v2014, %v2110
    %v2112 = vrot.slane %v442, %v2111
    %v2113 = vsel %vm2019, %v2112, %v2108
    %v2114 = vlaneseq
    %v2115 = vshrl.u32 %v2114, 7
    %v2116 = vsub.s32 %v2021, %v2115
    %v2117 = vrot.slane %v445, %v2116
    %v2118 = vsel %vm2026, %v2117, %v2113
    %v2119 = vlaneseq
    %v2120 = vshrl.u32 %v2119, 7
    %v2121 = vsub.s32 %v2028, %v2120
    %v2122 = vrot.slane %v448, %v2121
    %v2123 = vsel %vm2033, %v2122, %v2118
    %v2124 = vlaneseq
    %v2125 = vshrl.u32 %v2124, 7
    %v2126 = vsub.s32 %v2035, %v2125
    %v2127 = vrot.slane %v451, %v2126
    %v2128 = vsel %vm2040, %v2127, %v2123
    %v2129 = vlaneseq
    %v2130 = vshrl.u32 %v2129, 7
    %v2131 = vsub.s32 %v2042, %v2130
    %v2132 = vrot.slane %v454, %v2131
    %v2133 = vsel %vm2047, %v2132, %v2128
    %v2134 = vlaneseq
    %v2135 = vshrl.u32 %v2134, 7
    %v2136 = vsub.s32 %v2049, %v2135
    %v2137 = vrot.slane %v457, %v2136
    %v2138 = vsel %vm2054, %v2137, %v2133
    %v2139 = vlaneseq
    %v2140 = vshrl.u32 %v2139, 7
    %v2141 = vsub.s32 %v2056, %v2140
    %v2142 = vrot.slane %v460, %v2141
    %v2143 = vsel %vm2061, %v2142, %v2138
    %v2144 = vlaneseq
    %v2145 = vshrl.u32 %v2144, 7
    %v2146 = vsub.s32 %v2063, %v2145
    %v2147 = vrot.slane %v463, %v2146
    %v2148 = vsel %vm2068, %v2147, %v2143
    %v2149 = vlaneseq
    %v2150 = vshrl.u32 %v2149, 7
    %v2151 = vsub.s32 %v1960, %v2150
    %v2152 = vrot.slane %v466, %v2151
    %v2153 = vlaneseq
    %v2154 = vshrl.u32 %v2153, 7
    %v2155 = vsub.s32 %v1965, %v2154
    %v2156 = vrot.slane %v469, %v2155
    %v2157 = vsel %vm1970, %v2156, %v2152
    %v2158 = vlaneseq
    %v2159 = vshrl.u32 %v2158, 7
    %v2160 = vsub.s32 %v1972, %v2159
    %v2161 = vrot.slane %v472, %v2160
    %v2162 = vsel %vm1977, %v2161, %v2157
    %v2163 = vlaneseq
    %v2164 = vshrl.u32 %v2163, 7
    %v2165 = vsub.s32 %v1979, %v2164
    %v2166 = vrot.slane %v475, %v2165
    %v2167 = vsel %vm1984, %v2166, %v2162
    %v2168 = vlaneseq
    %v2169 = vshrl.u32 %v2168, 7
    %v2170 = vsub.s32 %v1986, %v2169
    %v2171 = vrot.slane %v478, %v2170
    %v2172 = vsel %vm1991, %v2171, %v2167
    %v2173 = vlaneseq
    %v2174 = vshrl.u32 %v2173, 7
    %v2175 = vsub.s32 %v1993, %v2174
    %v2176 = vrot.slane %v481, %v2175
    %v2177 = vsel %vm1998, %v2176, %v2172
    %v2178 = vlaneseq
    %v2179 = vshrl.u32 %v2178, 7
    %v2180 = vsub.s32 %v2000, %v2179
    %v2181 = vrot.slane %v484, %v2180
    %v2182 = vsel %vm2005, %v2181, %v2177
    %v2183 = vlaneseq
    %v2184 = vshrl.u32 %v2183, 7
    %v2185 = vsub.s32 %v2007, %v2184
    %v2186 = vrot.slane %v487, %v2185
    %v2187 = vsel %vm2012, %v2186, %v2182
    %v2188 = vlaneseq
    %v2189 = vshrl.u32 %v2188, 7
    %v2190 = vsub.s32 %v2014, %v2189
    %v2191 = vrot.slane %v490, %v2190
    %v2192 = vsel %vm2019, %v2191, %v2187
    %v2193 = vlaneseq
    %v2194 = vshrl.u32 %v2193, 7
    %v2195 = vsub.s32 %v2021, %v2194
    %v2196 = vrot.slane %v493, %v2195
    %v2197 = vsel %vm2026, %v2196, %v2192
    %v2198 = vlaneseq
    %v2199 = vshrl.u32 %v2198, 7
    %v2200 = vsub.s32 %v2028, %v2199
    %v2201 = vrot.slane %v496, %v2200
    %v2202 = vsel %vm2033, %v2201, %v2197
    %v2203 = vlaneseq
    %v2204 = vshrl.u32 %v2203, 7
    %v2205 = vsub.s32 %v2035, %v2204
    %v2206 = vrot.slane %v499, %v2205
    %v2207 = vsel %vm2040, %v2206, %v2202
    %v2208 = vlaneseq
    %v2209 = vshrl.u32 %v2208, 7
    %v2210 = vsub.s32 %v2042, %v2209
    %v2211 = vrot.slane %v502, %v2210
    %v2212 = vsel %vm2047, %v2211, %v2207
    %v2213 = vlaneseq
    %v2214 = vshrl.u32 %v2213, 7
    %v2215 = vsub.s32 %v2049, %v2214
    %v2216 = vrot.slane %v505, %v2215
    %v2217 = vsel %vm2054, %v2216, %v2212
    %v2218 = vlaneseq
    %v2219 = vshrl.u32 %v2218, 7
    %v2220 = vsub.s32 %v2056, %v2219
    %v2221 = vrot.slane %v508, %v2220
    %v2222 = vsel %vm2061, %v2221, %v2217
    %v2223 = vlaneseq
    %v2224 = vshrl.u32 %v2223, 7
    %v2225 = vsub.s32 %v2063, %v2224
    %v2226 = vrot.slane %v511, %v2225
    %v2227 = vsel %vm2068, %v2226, %v2222
    %v2228 = vlaneseq
    %v2229 = vshrl.u32 %v2228, 7
    %v2230 = vsub.s32 %v1960, %v2229
    %v2231 = vrot.slane %v514, %v2230
    %v2232 = vlaneseq
    %v2233 = vshrl.u32 %v2232, 7
    %v2234 = vsub.s32 %v1965, %v2233
    %v2235 = vrot.slane %v517, %v2234
    %v2236 = vsel %vm1970, %v2235, %v2231
    %v2237 = vlaneseq
    %v2238 = vshrl.u32 %v2237, 7
    %v2239 = vsub.s32 %v1972, %v2238
    %v2240 = vrot.slane %v520, %v2239
    %v2241 = vsel %vm1977, %v2240, %v2236
    %v2242 = vlaneseq
    %v2243 = vshrl.u32 %v2242, 7
    %v2244 = vsub.s32 %v1979, %v2243
    %v2245 = vrot.slane %v523, %v2244
    %v2246 = vsel %vm1984, %v2245, %v2241
    %v2247 = vlaneseq
    %v2248 = vshrl.u32 %v2247, 7
    %v2249 = vsub.s32 %v1986, %v2248
    %v2250 = vrot.slane %v526, %v2249
    %v2251 = vsel %vm1991, %v2250, %v2246
    %v2252 = vlaneseq
    %v2253 = vshrl.u32 %v2252, 7
    %v2254 = vsub.s32 %v1993, %v2253
    %v2255 = vrot.slane %v529, %v2254
    %v2256 = vsel %vm1998, %v2255, %v2251
    %v2257 = vlaneseq
    %v2258 = vshrl.u32 %v2257, 7
    %v2259 = vsub.s32 %v2000, %v2258
    %v2260 = vrot.slane %v532, %v2259
    %v2261 = vsel %vm2005, %v2260, %v2256
    %v2262 = vlaneseq
    %v2263 = vshrl.u32 %v2262, 7
    %v2264 = vsub.s32 %v2007, %v2263
    %v2265 = vrot.slane %v535, %v2264
    %v2266 = vsel %vm2012, %v2265, %v2261
    %v2267 = vlaneseq
    %v2268 = vshrl.u32 %v2267, 7
    %v2269 = vsub.s32 %v2014, %v2268
    %v2270 = vrot.slane %v538, %v2269
    %v2271 = vsel %vm2019, %v2270, %v2266
    %v2272 = vlaneseq
    %v2273 = vshrl.u32 %v2272, 7
    %v2274 = vsub.s32 %v2021, %v2273
    %v2275 = vrot.slane %v541, %v2274
    %v2276 = vsel %vm2026, %v2275, %v2271
    %v2277 = vlaneseq
    %v2278 = vshrl.u32 %v2277, 7
    %v2279 = vsub.s32 %v2028, %v2278
    %v2280 = vrot.slane %v544, %v2279
    %v2281 = vsel %vm2033, %v2280, %v2276
    %v2282 = vlaneseq
    %v2283 = vshrl.u32 %v2282, 7
    %v2284 = vsub.s32 %v2035, %v2283
    %v2285 = vrot.slane %v547, %v2284
    %v2286 = vsel %vm2040, %v2285, %v2281
    %v2287 = vlaneseq
    %v2288 = vshrl.u32 %v2287, 7
    %v2289 = vsub.s32 %v2042, %v2288
    %v2290 = vrot.slane %v550, %v2289
    %v2291 = vsel %vm2047, %v2290, %v2286
    %v2292 = vlaneseq
    %v2293 = vshrl.u32 %v2292, 7
    %v2294 = vsub.s32 %v2049, %v2293
    %v2295 = vrot.slane %v553, %v2294
    %v2296 = vsel %vm2054, %v2295, %v2291
    %v2297 = vlaneseq
    %v2298 = vshrl.u32 %v2297, 7
    %v2299 = vsub.s32 %v2056, %v2298
    %v2300 = vrot.slane %v556, %v2299
    %v2301 = vsel %vm2061, %v2300, %v2296
    %v2302 = vlaneseq
    %v2303 = vshrl.u32 %v2302, 7
    %v2304 = vsub.s32 %v2063, %v2303
    %v2305 = vrot.slane %v559, %v2304
    %v2306 = vsel %vm2068, %v2305, %v2301
    %v2307 = vlaneseq
    %v2308 = vshrl.u32 %v2307, 7
    %v2309 = vsub.s32 %v1960, %v2308
    %v2310 = vrot.slane %v562, %v2309
    %v2311 = vlaneseq
    %v2312 = vshrl.u32 %v2311, 7
    %v2313 = vsub.s32 %v1965, %v2312
    %v2314 = vrot.slane %v565, %v2313
    %v2315 = vsel %vm1970, %v2314, %v2310
    %v2316 = vlaneseq
    %v2317 = vshrl.u32 %v2316, 7
    %v2318 = vsub.s32 %v1972, %v2317
    %v2319 = vrot.slane %v568, %v2318
    %v2320 = vsel %vm1977, %v2319, %v2315
    %v2321 = vlaneseq
    %v2322 = vshrl.u32 %v2321, 7
    %v2323 = vsub.s32 %v1979, %v2322
    %v2324 = vrot.slane %v571, %v2323
    %v2325 = vsel %vm1984, %v2324, %v2320
    %v2326 = vlaneseq
    %v2327 = vshrl.u32 %v2326, 7
    %v2328 = vsub.s32 %v1986, %v2327
    %v2329 = vrot.slane %v574, %v2328
    %v2330 = vsel %vm1991, %v2329, %v2325
    %v2331 = vlaneseq
    %v2332 = vshrl.u32 %v2331, 7
    %v2333 = vsub.s32 %v1993, %v2332
    %v2334 = vrot.slane %v577, %v2333
    %v2335 = vsel %vm1998, %v2334, %v2330
    %v2336 = vlaneseq
    %v2337 = vshrl.u32 %v2336, 7
    %v2338 = vsub.s32 %v2000, %v2337
    %v2339 = vrot.slane %v580, %v2338
    %v2340 = vsel %vm2005, %v2339, %v2335
    %v2341 = vlaneseq
    %v2342 = vshrl.u32 %v2341, 7
    %v2343 = vsub.s32 %v2007, %v2342
    %v2344 = vrot.slane %v583, %v2343
    %v2345 = vsel %vm2012, %v2344, %v2340
    %v2346 = vlaneseq
    %v2347 = vshrl.u32 %v2346, 7
    %v2348 = vsub.s32 %v2014, %v2347
    %v2349 = vrot.slane %v586, %v2348
    %v2350 = vsel %vm2019, %v2349, %v2345
    %v2351 = vlaneseq
    %v2352 = vshrl.u32 %v2351, 7
    %v2353 = vsub.s32 %v2021, %v2352
    %v2354 = vrot.slane %v589, %v2353
    %v2355 = vsel %vm2026, %v2354, %v2350
    %v2356 = vlaneseq
    %v2357 = vshrl.u32 %v2356, 7
    %v2358 = vsub.s32 %v2028, %v2357
    %v2359 = vrot.slane %v592, %v2358
    %v2360 = vsel %vm2033, %v2359, %v2355
    %v2361 = vlaneseq
    %v2362 = vshrl.u32 %v2361, 7
    %v2363 = vsub.s32 %v2035, %v2362
    %v2364 = vrot.slane %v595, %v2363
    %v2365 = vsel %vm2040, %v2364, %v2360
    %v2366 = vlaneseq
    %v2367 = vshrl.u32 %v2366, 7
    %v2368 = vsub.s32 %v2042, %v2367
    %v2369 = vrot.slane %v598, %v2368
    %v2370 = vsel %vm2047, %v2369, %v2365
    %v2371 = vlaneseq
    %v2372 = vshrl.u32 %v2371, 7
    %v2373 = vsub.s32 %v2049, %v2372
    %v2374 = vrot.slane %v601, %v2373
    %v2375 = vsel %vm2054, %v2374, %v2370
    %v2376 = vlaneseq
    %v2377 = vshrl.u32 %v2376, 7
    %v2378 = vsub.s32 %v2056, %v2377
    %v2379 = vrot.slane %v604, %v2378
    %v2380 = vsel %vm2061, %v2379, %v2375
    %v2381 = vlaneseq
    %v2382 = vshrl.u32 %v2381, 7
    %v2383 = vsub.s32 %v2063, %v2382
    %v2384 = vrot.slane %v607, %v2383
    %v2385 = vsel %vm2068, %v2384, %v2380
    %v2386 = vlaneseq
    %v2387 = vshrl.u32 %v2386, 7
    %v2388 = vsub.s32 %v1960, %v2387
    %v2389 = vrot.slane %v610, %v2388
    %v2390 = vlaneseq
    %v2391 = vshrl.u32 %v2390, 7
    %v2392 = vsub.s32 %v1965, %v2391
    %v2393 = vrot.slane %v613, %v2392
    %v2394 = vsel %vm1970, %v2393, %v2389
    %v2395 = vlaneseq
    %v2396 = vshrl.u32 %v2395, 7
    %v2397 = vsub.s32 %v1972, %v2396
    %v2398 = vrot.slane %v616, %v2397
    %v2399 = vsel %vm1977, %v2398, %v2394
    %v2400 = vlaneseq
    %v2401 = vshrl.u32 %v2400, 7
    %v2402 = vsub.s32 %v1979, %v2401
    %v2403 = vrot.slane %v619, %v2402
    %v2404 = vsel %vm1984, %v2403, %v2399
    %v2405 = vlaneseq
    %v2406 = vshrl.u32 %v2405, 7
    %v2407 = vsub.s32 %v1986, %v2406
    %v2408 = vrot.slane %v622, %v2407
    %v2409 = vsel %vm1991, %v2408, %v2404
    %v2410 = vlaneseq
    %v2411 = vshrl.u32 %v2410, 7
    %v2412 = vsub.s32 %v1993, %v2411
    %v2413 = vrot.slane %v625, %v2412
    %v2414 = vsel %vm1998, %v2413, %v2409
    %v2415 = vlaneseq
    %v2416 = vshrl.u32 %v2415, 7
    %v2417 = vsub.s32 %v2000, %v2416
    %v2418 = vrot.slane %v628, %v2417
    %v2419 = vsel %vm2005, %v2418, %v2414
    %v2420 = vlaneseq
    %v2421 = vshrl.u32 %v2420, 7
    %v2422 = vsub.s32 %v2007, %v2421
    %v2423 = vrot.slane %v631, %v2422
    %v2424 = vsel %vm2012, %v2423, %v2419
    %v2425 = vlaneseq
    %v2426 = vshrl.u32 %v2425, 7
    %v2427 = vsub.s32 %v2014, %v2426
    %v2428 = vrot.slane %v634, %v2427
    %v2429 = vsel %vm2019, %v2428, %v2424
    %v2430 = vlaneseq
    %v2431 = vshrl.u32 %v2430, 7
    %v2432 = vsub.s32 %v2021, %v2431
    %v2433 = vrot.slane %v637, %v2432
    %v2434 = vsel %vm2026, %v2433, %v2429
    %v2435 = vlaneseq
    %v2436 = vshrl.u32 %v2435, 7
    %v2437 = vsub.s32 %v2028, %v2436
    %v2438 = vrot.slane %v640, %v2437
    %v2439 = vsel %vm2033, %v2438, %v2434
    %v2440 = vlaneseq
    %v2441 = vshrl.u32 %v2440, 7
    %v2442 = vsub.s32 %v2035, %v2441
    %v2443 = vrot.slane %v643, %v2442
    %v2444 = vsel %vm2040, %v2443, %v2439
    %v2445 = vlaneseq
    %v2446 = vshrl.u32 %v2445, 7
    %v2447 = vsub.s32 %v2042, %v2446
    %v2448 = vrot.slane %v646, %v2447
    %v2449 = vsel %vm2047, %v2448, %v2444
    %v2450 = vlaneseq
    %v2451 = vshrl.u32 %v2450, 7
    %v2452 = vsub.s32 %v2049, %v2451
    %v2453 = vrot.slane %v649, %v2452
    %v2454 = vsel %vm2054, %v2453, %v2449
    %v2455 = vlaneseq
    %v2456 = vshrl.u32 %v2455, 7
    %v2457 = vsub.s32 %v2056, %v2456
    %v2458 = vrot.slane %v652, %v2457
    %v2459 = vsel %vm2061, %v2458, %v2454
    %v2460 = vlaneseq
    %v2461 = vshrl.u32 %v2460, 7
    %v2462 = vsub.s32 %v2063, %v2461
    %v2463 = vrot.slane %v655, %v2462
    %v2464 = vsel %vm2068, %v2463, %v2459
    %v2465 = vlaneseq
    %v2466 = vshrl.u32 %v2465, 7
    %v2467 = vsub.s32 %v1960, %v2466
    %v2468 = vrot.slane %v658, %v2467
    %v2469 = vlaneseq
    %v2470 = vshrl.u32 %v2469, 7
    %v2471 = vsub.s32 %v1965, %v2470
    %v2472 = vrot.slane %v661, %v2471
    %v2473 = vsel %vm1970, %v2472, %v2468
    %v2474 = vlaneseq
    %v2475 = vshrl.u32 %v2474, 7
    %v2476 = vsub.s32 %v1972, %v2475
    %v2477 = vrot.slane %v664, %v2476
    %v2478 = vsel %vm1977, %v2477, %v2473
    %v2479 = vlaneseq
    %v2480 = vshrl.u32 %v2479, 7
    %v2481 = vsub.s32 %v1979, %v2480
    %v2482 = vrot.slane %v667, %v2481
    %v2483 = vsel %vm1984, %v2482, %v2478
    %v2484 = vlaneseq
    %v2485 = vshrl.u32 %v2484, 7
    %v2486 = vsub.s32 %v1986, %v2485
    %v2487 = vrot.slane %v670, %v2486
    %v2488 = vsel %vm1991, %v2487, %v2483
    %v2489 = vlaneseq
    %v2490 = vshrl.u32 %v2489, 7
    %v2491 = vsub.s32 %v1993, %v2490
    %v2492 = vrot.slane %v673, %v2491
    %v2493 = vsel %vm1998, %v2492, %v2488
    %v2494 = vlaneseq
    %v2495 = vshrl.u32 %v2494, 7
    %v2496 = vsub.s32 %v2000, %v2495
    %v2497 = vrot.slane %v676, %v2496
    %v2498 = vsel %vm2005, %v2497, %v2493
    %v2499 = vlaneseq
    %v2500 = vshrl.u32 %v2499, 7
    %v2501 = vsub.s32 %v2007, %v2500
    %v2502 = vrot.slane %v679, %v2501
    %v2503 = vsel %vm2012, %v2502, %v2498
    %v2504 = vlaneseq
    %v2505 = vshrl.u32 %v2504, 7
    %v2506 = vsub.s32 %v2014, %v2505
    %v2507 = vrot.slane %v682, %v2506
    %v2508 = vsel %vm2019, %v2507, %v2503
    %v2509 = vlaneseq
    %v2510 = vshrl.u32 %v2509, 7
    %v2511 = vsub.s32 %v2021, %v2510
    %v2512 = vrot.slane %v685, %v2511
    %v2513 = vsel %vm2026, %v2512, %v2508
    %v2514 = vlaneseq
    %v2515 = vshrl.u32 %v2514, 7
    %v2516 = vsub.s32 %v2028, %v2515
    %v2517 = vrot.slane %v688, %v2516
    %v2518 = vsel %vm2033, %v2517, %v2513
    %v2519 = vlaneseq
    %v2520 = vshrl.u32 %v2519, 7
    %v2521 = vsub.s32 %v2035, %v2520
    %v2522 = vrot.slane %v691, %v2521
    %v2523 = vsel %vm2040, %v2522, %v2518
    %v2524 = vlaneseq
    %v2525 = vshrl.u32 %v2524, 7
    %v2526 = vsub.s32 %v2042, %v2525
    %v2527 = vrot.slane %v694, %v2526
    %v2528 = vsel %vm2047, %v2527, %v2523
    %v2529 = vlaneseq
    %v2530 = vshrl.u32 %v2529, 7
    %v2531 = vsub.s32 %v2049, %v2530
    %v2532 = vrot.slane %v697, %v2531
    %v2533 = vsel %vm2054, %v2532, %v2528
    %v2534 = vlaneseq
    %v2535 = vshrl.u32 %v2534, 7
    %v2536 = vsub.s32 %v2056, %v2535
    %v2537 = vrot.slane %v700, %v2536
    %v2538 = vsel %vm2061, %v2537, %v2533
    %v2539 = vlaneseq
    %v2540 = vshrl.u32 %v2539, 7
    %v2541 = vsub.s32 %v2063, %v2540
    %v2542 = vrot.slane %v703, %v2541
    %v2543 = vsel %vm2068, %v2542, %v2538
    %v2544 = vlaneseq
    %v2545 = vshrl.u32 %v2544, 7
    %v2546 = vsub.s32 %v1960, %v2545
    %v2547 = vrot.slane %v706, %v2546
    %v2548 = vlaneseq
    %v2549 = vshrl.u32 %v2548, 7
    %v2550 = vsub.s32 %v1965, %v2549
    %v2551 = vrot.slane %v709, %v2550
    %v2552 = vsel %vm1970, %v2551, %v2547
    %v2553 = vlaneseq
    %v2554 = vshrl.u32 %v2553, 7
    %v2555 = vsub.s32 %v1972, %v2554
    %v2556 = vrot.slane %v712, %v2555
    %v2557 = vsel %vm1977, %v2556, %v2552
    %v2558 = vlaneseq
    %v2559 = vshrl.u32 %v2558, 7
    %v2560 = vsub.s32 %v1979, %v2559
    %v2561 = vrot.slane %v715, %v2560
    %v2562 = vsel %vm1984, %v2561, %v2557
    %v2563 = vlaneseq
    %v2564 = vshrl.u32 %v2563, 7
    %v2565 = vsub.s32 %v1986, %v2564
    %v2566 = vrot.slane %v718, %v2565
    %v2567 = vsel %vm1991, %v2566, %v2562
    %v2568 = vlaneseq
    %v2569 = vshrl.u32 %v2568, 7
    %v2570 = vsub.s32 %v1993, %v2569
    %v2571 = vrot.slane %v721, %v2570
    %v2572 = vsel %vm1998, %v2571, %v2567
    %v2573 = vlaneseq
    %v2574 = vshrl.u32 %v2573, 7
    %v2575 = vsub.s32 %v2000, %v2574
    %v2576 = vrot.slane %v724, %v2575
    %v2577 = vsel %vm2005, %v2576, %v2572
    %v2578 = vlaneseq
    %v2579 = vshrl.u32 %v2578, 7
    %v2580 = vsub.s32 %v2007, %v2579
    %v2581 = vrot.slane %v727, %v2580
    %v2582 = vsel %vm2012, %v2581, %v2577
    %v2583 = vlaneseq
    %v2584 = vshrl.u32 %v2583, 7
    %v2585 = vsub.s32 %v2014, %v2584
    %v2586 = vrot.slane %v730, %v2585
    %v2587 = vsel %vm2019, %v2586, %v2582
    %v2588 = vlaneseq
    %v2589 = vshrl.u32 %v2588, 7
    %v2590 = vsub.s32 %v2021, %v2589
    %v2591 = vrot.slane %v733, %v2590
    %v2592 = vsel %vm2026, %v2591, %v2587
    %v2593 = vlaneseq
    %v2594 = vshrl.u32 %v2593, 7
    %v2595 = vsub.s32 %v2028, %v2594
    %v2596 = vrot.slane %v736, %v2595
    %v2597 = vsel %vm2033, %v2596, %v2592
    %v2598 = vlaneseq
    %v2599 = vshrl.u32 %v2598, 7
    %v2600 = vsub.s32 %v2035, %v2599
    %v2601 = vrot.slane %v739, %v2600
    %v2602 = vsel %vm2040, %v2601, %v2597
    %v2603 = vlaneseq
    %v2604 = vshrl.u32 %v2603, 7
    %v2605 = vsub.s32 %v2042, %v2604
    %v2606 = vrot.slane %v742, %v2605
    %v2607 = vsel %vm2047, %v2606, %v2602
    %v2608 = vlaneseq
    %v2609 = vshrl.u32 %v2608, 7
    %v2610 = vsub.s32 %v2049, %v2609
    %v2611 = vrot.slane %v745, %v2610
    %v2612 = vsel %vm2054, %v2611, %v2607
    %v2613 = vlaneseq
    %v2614 = vshrl.u32 %v2613, 7
    %v2615 = vsub.s32 %v2056, %v2614
    %v2616 = vrot.slane %v748, %v2615
    %v2617 = vsel %vm2061, %v2616, %v2612
    %v2618 = vlaneseq
    %v2619 = vshrl.u32 %v2618, 7
    %v2620 = vsub.s32 %v2063, %v2619
    %v2621 = vrot.slane %v751, %v2620
    %v2622 = vsel %vm2068, %v2621, %v2617
    %v2623 = vlaneseq
    %v2624 = vshrl.u32 %v2623, 7
    %v2625 = vsub.s32 %v1960, %v2624
    %v2626 = vrot.slane %v754, %v2625
    %v2627 = vlaneseq
    %v2628 = vshrl.u32 %v2627, 7
    %v2629 = vsub.s32 %v1965, %v2628
    %v2630 = vrot.slane %v757, %v2629
    %v2631 = vsel %vm1970, %v2630, %v2626
    %v2632 = vlaneseq
    %v2633 = vshrl.u32 %v2632, 7
    %v2634 = vsub.s32 %v1972, %v2633
    %v2635 = vrot.slane %v760, %v2634
    %v2636 = vsel %vm1977, %v2635, %v2631
    %v2637 = vlaneseq
    %v2638 = vshrl.u32 %v2637, 7
    %v2639 = vsub.s32 %v1979, %v2638
    %v2640 = vrot.slane %v763, %v2639
    %v2641 = vsel %vm1984, %v2640, %v2636
    %v2642 = vlaneseq
    %v2643 = vshrl.u32 %v2642, 7
    %v2644 = vsub.s32 %v1986, %v2643
    %v2645 = vrot.slane %v766, %v2644
    %v2646 = vsel %vm1991, %v2645, %v2641
    %v2647 = vlaneseq
    %v2648 = vshrl.u32 %v2647, 7
    %v2649 = vsub.s32 %v1993, %v2648
    %v2650 = vrot.slane %v769, %v2649
    %v2651 = vsel %vm1998, %v2650, %v2646
    %v2652 = vlaneseq
    %v2653 = vshrl.u32 %v2652, 7
    %v2654 = vsub.s32 %v2000, %v2653
    %v2655 = vrot.slane %v772, %v2654
    %v2656 = vsel %vm2005, %v2655, %v2651
    %v2657 = vlaneseq
    %v2658 = vshrl.u32 %v2657, 7
    %v2659 = vsub.s32 %v2007, %v2658
    %v2660 = vrot.slane %v775, %v2659
    %v2661 = vsel %vm2012, %v2660, %v2656
    %v2662 = vlaneseq
    %v2663 = vshrl.u32 %v2662, 7
    %v2664 = vsub.s32 %v2014, %v2663
    %v2665 = vrot.slane %v778, %v2664
    %v2666 = vsel %vm2019, %v2665, %v2661
    %v2667 = vlaneseq
    %v2668 = vshrl.u32 %v2667, 7
    %v2669 = vsub.s32 %v2021, %v2668
    %v2670 = vrot.slane %v781, %v2669
    %v2671 = vsel %vm2026, %v2670, %v2666
    %v2672 = vlaneseq
    %v2673 = vshrl.u32 %v2672, 7
    %v2674 = vsub.s32 %v2028, %v2673
    %v2675 = vrot.slane %v784, %v2674
    %v2676 = vsel %vm2033, %v2675, %v2671
    %v2677 = vlaneseq
    %v2678 = vshrl.u32 %v2677, 7
    %v2679 = vsub.s32 %v2035, %v2678
    %v2680 = vrot.slane %v787, %v2679
    %v2681 = vsel %vm2040, %v2680, %v2676
    %v2682 = vlaneseq
    %v2683 = vshrl.u32 %v2682, 7
    %v2684 = vsub.s32 %v2042, %v2683
    %v2685 = vrot.slane %v790, %v2684
    %v2686 = vsel %vm2047, %v2685, %v2681
    %v2687 = vlaneseq
    %v2688 = vshrl.u32 %v2687, 7
    %v2689 = vsub.s32 %v2049, %v2688
    %v2690 = vrot.slane %v793, %v2689
    %v2691 = vsel %vm2054, %v2690, %v2686
    %v2692 = vlaneseq
    %v2693 = vshrl.u32 %v2692, 7
    %v2694 = vsub.s32 %v2056, %v2693
    %v2695 = vrot.slane %v796, %v2694
    %v2696 = vsel %vm2061, %v2695, %v2691
    %v2697 = vlaneseq
    %v2698 = vshrl.u32 %v2697, 7
    %v2699 = vsub.s32 %v2063, %v2698
    %v2700 = vrot.slane %v799, %v2699
    %v2701 = vsel %vm2068, %v2700, %v2696
    %v2702 = vlaneseq
    %v2703 = vshrl.u32 %v2702, 7
    %v2704 = vsub.s32 %v1960, %v2703
    %v2705 = vrot.slane %v802, %v2704
    %v2706 = vlaneseq
    %v2707 = vshrl.u32 %v2706, 7
    %v2708 = vsub.s32 %v1965, %v2707
    %v2709 = vrot.slane %v805, %v2708
    %v2710 = vsel %vm1970, %v2709, %v2705
    %v2711 = vlaneseq
    %v2712 = vshrl.u32 %v2711, 7
    %v2713 = vsub.s32 %v1972, %v2712
    %v2714 = vrot.slane %v808, %v2713
    %v2715 = vsel %vm1977, %v2714, %v2710
    %v2716 = vlaneseq
    %v2717 = vshrl.u32 %v2716, 7
    %v2718 = vsub.s32 %v1979, %v2717
    %v2719 = vrot.slane %v811, %v2718
    %v2720 = vsel %vm1984, %v2719, %v2715
    %v2721 = vlaneseq
    %v2722 = vshrl.u32 %v2721, 7
    %v2723 = vsub.s32 %v1986, %v2722
    %v2724 = vrot.slane %v814, %v2723
    %v2725 = vsel %vm1991, %v2724, %v2720
    %v2726 = vlaneseq
    %v2727 = vshrl.u32 %v2726, 7
    %v2728 = vsub.s32 %v1993, %v2727
    %v2729 = vrot.slane %v817, %v2728
    %v2730 = vsel %vm1998, %v2729, %v2725
    %v2731 = vlaneseq
    %v2732 = vshrl.u32 %v2731, 7
    %v2733 = vsub.s32 %v2000, %v2732
    %v2734 = vrot.slane %v820, %v2733
    %v2735 = vsel %vm2005, %v2734, %v2730
    %v2736 = vlaneseq
    %v2737 = vshrl.u32 %v2736, 7
    %v2738 = vsub.s32 %v2007, %v2737
    %v2739 = vrot.slane %v823, %v2738
    %v2740 = vsel %vm2012, %v2739, %v2735
    %v2741 = vlaneseq
    %v2742 = vshrl.u32 %v2741, 7
    %v2743 = vsub.s32 %v2014, %v2742
    %v2744 = vrot.slane %v826, %v2743
    %v2745 = vsel %vm2019, %v2744, %v2740
    %v2746 = vlaneseq
    %v2747 = vshrl.u32 %v2746, 7
    %v2748 = vsub.s32 %v2021, %v2747
    %v2749 = vrot.slane %v829, %v2748
    %v2750 = vsel %vm2026, %v2749, %v2745
    %v2751 = vlaneseq
    %v2752 = vshrl.u32 %v2751, 7
    %v2753 = vsub.s32 %v2028, %v2752
    %v2754 = vrot.slane %v832, %v2753
    %v2755 = vsel %vm2033, %v2754, %v2750
    %v2756 = vlaneseq
    %v2757 = vshrl.u32 %v2756, 7
    %v2758 = vsub.s32 %v2035, %v2757
    %v2759 = vrot.slane %v835, %v2758
    %v2760 = vsel %vm2040, %v2759, %v2755
    %v2761 = vlaneseq
    %v2762 = vshrl.u32 %v2761, 7
    %v2763 = vsub.s32 %v2042, %v2762
    %v2764 = vrot.slane %v838, %v2763
    %v2765 = vsel %vm2047, %v2764, %v2760
    %v2766 = vlaneseq
    %v2767 = vshrl.u32 %v2766, 7
    %v2768 = vsub.s32 %v2049, %v2767
    %v2769 = vrot.slane %v841, %v2768
    %v2770 = vsel %vm2054, %v2769, %v2765
    %v2771 = vlaneseq
    %v2772 = vshrl.u32 %v2771, 7
    %v2773 = vsub.s32 %v2056, %v2772
    %v2774 = vrot.slane %v844, %v2773
    %v2775 = vsel %vm2061, %v2774, %v2770
    %v2776 = vlaneseq
    %v2777 = vshrl.u32 %v2776, 7
    %v2778 = vsub.s32 %v2063, %v2777
    %v2779 = vrot.slane %v847, %v2778
    %v2780 = vsel %vm2068, %v2779, %v2775
    %v2781 = vlaneseq
    %v2782 = vshrl.u32 %v2781, 7
    %v2783 = vsub.s32 %v1960, %v2782
    %v2784 = vrot.slane %v850, %v2783
    %v2785 = vlaneseq
    %v2786 = vshrl.u32 %v2785, 7
    %v2787 = vsub.s32 %v1965, %v2786
    %v2788 = vrot.slane %v853, %v2787
    %v2789 = vsel %vm1970, %v2788, %v2784
    %v2790 = vlaneseq
    %v2791 = vshrl.u32 %v2790, 7
    %v2792 = vsub.s32 %v1972, %v2791
    %v2793 = vrot.slane %v856, %v2792
    %v2794 = vsel %vm1977, %v2793, %v2789
    %v2795 = vlaneseq
    %v2796 = vshrl.u32 %v2795, 7
    %v2797 = vsub.s32 %v1979, %v2796
    %v2798 = vrot.slane %v859, %v2797
    %v2799 = vsel %vm1984, %v2798, %v2794
    %v2800 = vlaneseq
    %v2801 = vshrl.u32 %v2800, 7
    %v2802 = vsub.s32 %v1986, %v2801
    %v2803 = vrot.slane %v862, %v2802
    %v2804 = vsel %vm1991, %v2803, %v2799
    %v2805 = vlaneseq
    %v2806 = vshrl.u32 %v2805, 7
    %v2807 = vsub.s32 %v1993, %v2806
    %v2808 = vrot.slane %v865, %v2807
    %v2809 = vsel %vm1998, %v2808, %v2804
    %v2810 = vlaneseq
    %v2811 = vshrl.u32 %v2810, 7
    %v2812 = vsub.s32 %v2000, %v2811
    %v2813 = vrot.slane %v868, %v2812
    %v2814 = vsel %vm2005, %v2813, %v2809
    %v2815 = vlaneseq
    %v2816 = vshrl.u32 %v2815, 7
    %v2817 = vsub.s32 %v2007, %v2816
    %v2818 = vrot.slane %v871, %v2817
    %v2819 = vsel %vm2012, %v2818, %v2814
    %v2820 = vlaneseq
    %v2821 = vshrl.u32 %v2820, 7
    %v2822 = vsub.s32 %v2014, %v2821
    %v2823 = vrot.slane %v874, %v2822
    %v2824 = vsel %vm2019, %v2823, %v2819
    %v2825 = vlaneseq
    %v2826 = vshrl.u32 %v2825, 7
    %v2827 = vsub.s32 %v2021, %v2826
    %v2828 = vrot.slane %v877, %v2827
    %v2829 = vsel %vm2026, %v2828, %v2824
    %v2830 = vlaneseq
    %v2831 = vshrl.u32 %v2830, 7
    %v2832 = vsub.s32 %v2028, %v2831
    %v2833 = vrot.slane %v880, %v2832
    %v2834 = vsel %vm2033, %v2833, %v2829
    %v2835 = vlaneseq
    %v2836 = vshrl.u32 %v2835, 7
    %v2837 = vsub.s32 %v2035, %v2836
    %v2838 = vrot.slane %v883, %v2837
    %v2839 = vsel %vm2040, %v2838, %v2834
    %v2840 = vlaneseq
    %v2841 = vshrl.u32 %v2840, 7
    %v2842 = vsub.s32 %v2042, %v2841
    %v2843 = vrot.slane %v886, %v2842
    %v2844 = vsel %vm2047, %v2843, %v2839
    %v2845 = vlaneseq
    %v2846 = vshrl.u32 %v2845, 7
    %v2847 = vsub.s32 %v2049, %v2846
    %v2848 = vrot.slane %v889, %v2847
    %v2849 = vsel %vm2054, %v2848, %v2844
    %v2850 = vlaneseq
    %v2851 = vshrl.u32 %v2850, 7
    %v2852 = vsub.s32 %v2056, %v2851
    %v2853 = vrot.slane %v892, %v2852
    %v2854 = vsel %vm2061, %v2853, %v2849
    %v2855 = vlaneseq
    %v2856 = vshrl.u32 %v2855, 7
    %v2857 = vsub.s32 %v2063, %v2856
    %v2858 = vrot.slane %v895, %v2857
    %v2859 = vsel %vm2068, %v2858, %v2854
    %v2860 = vlaneseq
    %v2861 = vshrl.u32 %v2860, 7
    %v2862 = vsub.s32 %v1960, %v2861
    %v2863 = vrot.slane %v898, %v2862
    %v2864 = vlaneseq
    %v2865 = vshrl.u32 %v2864, 7
    %v2866 = vsub.s32 %v1965, %v2865
    %v2867 = vrot.slane %v901, %v2866
    %v2868 = vsel %vm1970, %v2867, %v2863
    %v2869 = vlaneseq
    %v2870 = vshrl.u32 %v2869, 7
    %v2871 = vsub.s32 %v1972, %v2870
    %v2872 = vrot.slane %v904, %v2871
    %v2873 = vsel %vm1977, %v2872, %v2868
    %v2874 = vlaneseq
    %v2875 = vshrl.u32 %v2874, 7
    %v2876 = vsub.s32 %v1979, %v2875
    %v2877 = vrot.slane %v907, %v2876
    %v2878 = vsel %vm1984, %v2877, %v2873
    %v2879 = vlaneseq
    %v2880 = vshrl.u32 %v2879, 7
    %v2881 = vsub.s32 %v1986, %v2880
    %v2882 = vrot.slane %v910, %v2881
    %v2883 = vsel %vm1991, %v2882, %v2878
    %v2884 = vlaneseq
    %v2885 = vshrl.u32 %v2884, 7
    %v2886 = vsub.s32 %v1993, %v2885
    %v2887 = vrot.slane %v913, %v2886
    %v2888 = vsel %vm1998, %v2887, %v2883
    %v2889 = vlaneseq
    %v2890 = vshrl.u32 %v2889, 7
    %v2891 = vsub.s32 %v2000, %v2890
    %v2892 = vrot.slane %v916, %v2891
    %v2893 = vsel %vm2005, %v2892, %v2888
    %v2894 = vlaneseq
    %v2895 = vshrl.u32 %v2894, 7
    %v2896 = vsub.s32 %v2007, %v2895
    %v2897 = vrot.slane %v919, %v2896
    %v2898 = vsel %vm2012, %v2897, %v2893
    %v2899 = vlaneseq
    %v2900 = vshrl.u32 %v2899, 7
    %v2901 = vsub.s32 %v2014, %v2900
    %v2902 = vrot.slane %v922, %v2901
    %v2903 = vsel %vm2019, %v2902, %v2898
    %v2904 = vlaneseq
    %v2905 = vshrl.u32 %v2904, 7
    %v2906 = vsub.s32 %v2021, %v2905
    %v2907 = vrot.slane %v925, %v2906
    %v2908 = vsel %vm2026, %v2907, %v2903
    %v2909 = vlaneseq
    %v2910 = vshrl.u32 %v2909, 7
    %v2911 = vsub.s32 %v2028, %v2910
    %v2912 = vrot.slane %v928, %v2911
    %v2913 = vsel %vm2033, %v2912, %v2908
    %v2914 = vlaneseq
    %v2915 = vshrl.u32 %v2914, 7
    %v2916 = vsub.s32 %v2035, %v2915
    %v2917 = vrot.slane %v931, %v2916
    %v2918 = vsel %vm2040, %v2917, %v2913
    %v2919 = vlaneseq
    %v2920 = vshrl.u32 %v2919, 7
    %v2921 = vsub.s32 %v2042, %v2920
    %v2922 = vrot.slane %v934, %v2921
    %v2923 = vsel %vm2047, %v2922, %v2918
    %v2924 = vlaneseq
    %v2925 = vshrl.u32 %v2924, 7
    %v2926 = vsub.s32 %v2049, %v2925
    %v2927 = vrot.slane %v937, %v2926
    %v2928 = vsel %vm2054, %v2927, %v2923
    %v2929 = vlaneseq
    %v2930 = vshrl.u32 %v2929, 7
    %v2931 = vsub.s32 %v2056, %v2930
    %v2932 = vrot.slane %v940, %v2931
    %v2933 = vsel %vm2061, %v2932, %v2928
    %v2934 = vlaneseq
    %v2935 = vshrl.u32 %v2934, 7
    %v2936 = vsub.s32 %v2063, %v2935
    %v2937 = vrot.slane %v943, %v2936
    %v2938 = vsel %vm2068, %v2937, %v2933
    %v2939 = vlaneseq
    %v2940 = vshrl.u32 %v2939, 7
    %v2941 = vsub.s32 %v1960, %v2940
    %v2942 = vrot.slane %v946, %v2941
    %v2943 = vlaneseq
    %v2944 = vshrl.u32 %v2943, 7
    %v2945 = vsub.s32 %v1965, %v2944
    %v2946 = vrot.slane %v949, %v2945
    %v2947 = vsel %vm1970, %v2946, %v2942
    %v2948 = vlaneseq
    %v2949 = vshrl.u32 %v2948, 7
    %v2950 = vsub.s32 %v1972, %v2949
    %v2951 = vrot.slane %v952, %v2950
    %v2952 = vsel %vm1977, %v2951, %v2947
    %v2953 = vlaneseq
    %v2954 = vshrl.u32 %v2953, 7
    %v2955 = vsub.s32 %v1979, %v2954
    %v2956 = vrot.slane %v955, %v2955
    %v2957 = vsel %vm1984, %v2956, %v2952
    %v2958 = vlaneseq
    %v2959 = vshrl.u32 %v2958, 7
    %v2960 = vsub.s32 %v1986, %v2959
    %v2961 = vrot.slane %v958, %v2960
    %v2962 = vsel %vm1991, %v2961, %v2957
    %v2963 = vlaneseq
    %v2964 = vshrl.u32 %v2963, 7
    %v2965 = vsub.s32 %v1993, %v2964
    %v2966 = vrot.slane %v961, %v2965
    %v2967 = vsel %vm1998, %v2966, %v2962
    %v2968 = vlaneseq
    %v2969 = vshrl.u32 %v2968, 7
    %v2970 = vsub.s32 %v2000, %v2969
    %v2971 = vrot.slane %v964, %v2970
    %v2972 = vsel %vm2005, %v2971, %v2967
    %v2973 = vlaneseq
    %v2974 = vshrl.u32 %v2973, 7
    %v2975 = vsub.s32 %v2007, %v2974
    %v2976 = vrot.slane %v967, %v2975
    %v2977 = vsel %vm2012, %v2976, %v2972
    %v2978 = vlaneseq
    %v2979 = vshrl.u32 %v2978, 7
    %v2980 = vsub.s32 %v2014, %v2979
    %v2981 = vrot.slane %v970, %v2980
    %v2982 = vsel %vm2019, %v2981, %v2977
    %v2983 = vlaneseq
    %v2984 = vshrl.u32 %v2983, 7
    %v2985 = vsub.s32 %v2021, %v2984
    %v2986 = vrot.slane %v973, %v2985
    %v2987 = vsel %vm2026, %v2986, %v2982
    %v2988 = vlaneseq
    %v2989 = vshrl.u32 %v2988, 7
    %v2990 = vsub.s32 %v2028, %v2989
    %v2991 = vrot.slane %v976, %v2990
    %v2992 = vsel %vm2033, %v2991, %v2987
    %v2993 = vlaneseq
    %v2994 = vshrl.u32 %v2993, 7
    %v2995 = vsub.s32 %v2035, %v2994
    %v2996 = vrot.slane %v979, %v2995
    %v2997 = vsel %vm2040, %v2996, %v2992
    %v2998 = vlaneseq
    %v2999 = vshrl.u32 %v2998, 7
    %v3000 = vsub.s32 %v2042, %v2999
    %v3001 = vrot.slane %v982, %v3000
    %v3002 = vsel %vm2047, %v3001, %v2997
    %v3003 = vlaneseq
    %v3004 = vshrl.u32 %v3003, 7
    %v3005 = vsub.s32 %v2049, %v3004
    %v3006 = vrot.slane %v985, %v3005
    %v3007 = vsel %vm2054, %v3006, %v3002
    %v3008 = vlaneseq
    %v3009 = vshrl.u32 %v3008, 7
    %v3010 = vsub.s32 %v2056, %v3009
    %v3011 = vrot.slane %v988, %v3010
    %v3012 = vsel %vm2061, %v3011, %v3007
    %v3013 = vlaneseq
    %v3014 = vshrl.u32 %v3013, 7
    %v3015 = vsub.s32 %v2063, %v3014
    %v3016 = vrot.slane %v991, %v3015
    %v3017 = vsel %vm2068, %v3016, %v3012
    %v3018 = vlaneseq
    %v3019 = vshrl.u32 %v3018, 7
    %v3020 = vsub.s32 %v1960, %v3019
    %v3021 = vrot.slane %v994, %v3020
    %v3022 = vlaneseq
    %v3023 = vshrl.u32 %v3022, 7
    %v3024 = vsub.s32 %v1965, %v3023
    %v3025 = vrot.slane %v997, %v3024
    %v3026 = vsel %vm1970, %v3025, %v3021
    %v3027 = vlaneseq
    %v3028 = vshrl.u32 %v3027, 7
    %v3029 = vsub.s32 %v1972, %v3028
    %v3030 = vrot.slane %v1000, %v3029
    %v3031 = vsel %vm1977, %v3030, %v3026
    %v3032 = vlaneseq
    %v3033 = vshrl.u32 %v3032, 7
    %v3034 = vsub.s32 %v1979, %v3033
    %v3035 = vrot.slane %v1003, %v3034
    %v3036 = vsel %vm1984, %v3035, %v3031
    %v3037 = vlaneseq
    %v3038 = vshrl.u32 %v3037, 7
    %v3039 = vsub.s32 %v1986, %v3038
    %v3040 = vrot.slane %v1006, %v3039
    %v3041 = vsel %vm1991, %v3040, %v3036
    %v3042 = vlaneseq
    %v3043 = vshrl.u32 %v3042, 7
    %v3044 = vsub.s32 %v1993, %v3043
    %v3045 = vrot.slane %v1009, %v3044
    %v3046 = vsel %vm1998, %v3045, %v3041
    %v3047 = vlaneseq
    %v3048 = vshrl.u32 %v3047, 7
    %v3049 = vsub.s32 %v2000, %v3048
    %v3050 = vrot.slane %v1012, %v3049
    %v3051 = vsel %vm2005, %v3050, %v3046
    %v3052 = vlaneseq
    %v3053 = vshrl.u32 %v3052, 7
    %v3054 = vsub.s32 %v2007, %v3053
    %v3055 = vrot.slane %v1015, %v3054
    %v3056 = vsel %vm2012, %v3055, %v3051
    %v3057 = vlaneseq
    %v3058 = vshrl.u32 %v3057, 7
    %v3059 = vsub.s32 %v2014, %v3058
    %v3060 = vrot.slane %v1018, %v3059
    %v3061 = vsel %vm2019, %v3060, %v3056
    %v3062 = vlaneseq
    %v3063 = vshrl.u32 %v3062, 7
    %v3064 = vsub.s32 %v2021, %v3063
    %v3065 = vrot.slane %v1021, %v3064
    %v3066 = vsel %vm2026, %v3065, %v3061
    %v3067 = vlaneseq
    %v3068 = vshrl.u32 %v3067, 7
    %v3069 = vsub.s32 %v2028, %v3068
    %v3070 = vrot.slane %v1024, %v3069
    %v3071 = vsel %vm2033, %v3070, %v3066
    %v3072 = vlaneseq
    %v3073 = vshrl.u32 %v3072, 7
    %v3074 = vsub.s32 %v2035, %v3073
    %v3075 = vrot.slane %v1027, %v3074
    %v3076 = vsel %vm2040, %v3075, %v3071
    %v3077 = vlaneseq
    %v3078 = vshrl.u32 %v3077, 7
    %v3079 = vsub.s32 %v2042, %v3078
    %v3080 = vrot.slane %v1030, %v3079
    %v3081 = vsel %vm2047, %v3080, %v3076
    %v3082 = vlaneseq
    %v3083 = vshrl.u32 %v3082, 7
    %v3084 = vsub.s32 %v2049, %v3083
    %v3085 = vrot.slane %v1033, %v3084
    %v3086 = vsel %vm2054, %v3085, %v3081
    %v3087 = vlaneseq
    %v3088 = vshrl.u32 %v3087, 7
    %v3089 = vsub.s32 %v2056, %v3088
    %v3090 = vrot.slane %v1036, %v3089
    %v3091 = vsel %vm2061, %v3090, %v3086
    %v3092 = vlaneseq
    %v3093 = vshrl.u32 %v3092, 7
    %v3094 = vsub.s32 %v2063, %v3093
    %v3095 = vrot.slane %v1039, %v3094
    %v3096 = vsel %vm2068, %v3095, %v3091
    %v3097 = vlaneseq
    %v3098 = vshrl.u32 %v3097, 7
    %v3099 = vsub.s32 %v1960, %v3098
    %v3100 = vrot.slane %v1042, %v3099
    %v3101 = vlaneseq
    %v3102 = vshrl.u32 %v3101, 7
    %v3103 = vsub.s32 %v1965, %v3102
    %v3104 = vrot.slane %v1045, %v3103
    %v3105 = vsel %vm1970, %v3104, %v3100
    %v3106 = vlaneseq
    %v3107 = vshrl.u32 %v3106, 7
    %v3108 = vsub.s32 %v1972, %v3107
    %v3109 = vrot.slane %v1048, %v3108
    %v3110 = vsel %vm1977, %v3109, %v3105
    %v3111 = vlaneseq
    %v3112 = vshrl.u32 %v3111, 7
    %v3113 = vsub.s32 %v1979, %v3112
    %v3114 = vrot.slane %v1051, %v3113
    %v3115 = vsel %vm1984, %v3114, %v3110
    %v3116 = vlaneseq
    %v3117 = vshrl.u32 %v3116, 7
    %v3118 = vsub.s32 %v1986, %v3117
    %v3119 = vrot.slane %v1054, %v3118
    %v3120 = vsel %vm1991, %v3119, %v3115
    %v3121 = vlaneseq
    %v3122 = vshrl.u32 %v3121, 7
    %v3123 = vsub.s32 %v1993, %v3122
    %v3124 = vrot.slane %v1057, %v3123
    %v3125 = vsel %vm1998, %v3124, %v3120
    %v3126 = vlaneseq
    %v3127 = vshrl.u32 %v3126, 7
    %v3128 = vsub.s32 %v2000, %v3127
    %v3129 = vrot.slane %v1060, %v3128
    %v3130 = vsel %vm2005, %v3129, %v3125
    %v3131 = vlaneseq
    %v3132 = vshrl.u32 %v3131, 7
    %v3133 = vsub.s32 %v2007, %v3132
    %v3134 = vrot.slane %v1063, %v3133
    %v3135 = vsel %vm2012, %v3134, %v3130
    %v3136 = vlaneseq
    %v3137 = vshrl.u32 %v3136, 7
    %v3138 = vsub.s32 %v2014, %v3137
    %v3139 = vrot.slane %v1066, %v3138
    %v3140 = vsel %vm2019, %v3139, %v3135
    %v3141 = vlaneseq
    %v3142 = vshrl.u32 %v3141, 7
    %v3143 = vsub.s32 %v2021, %v3142
    %v3144 = vrot.slane %v1069, %v3143
    %v3145 = vsel %vm2026, %v3144, %v3140
    %v3146 = vlaneseq
    %v3147 = vshrl.u32 %v3146, 7
    %v3148 = vsub.s32 %v2028, %v3147
    %v3149 = vrot.slane %v1072, %v3148
    %v3150 = vsel %vm2033, %v3149, %v3145
    %v3151 = vlaneseq
    %v3152 = vshrl.u32 %v3151, 7
    %v3153 = vsub.s32 %v2035, %v3152
    %v3154 = vrot.slane %v1075, %v3153
    %v3155 = vsel %vm2040, %v3154, %v3150
    %v3156 = vlaneseq
    %v3157 = vshrl.u32 %v3156, 7
    %v3158 = vsub.s32 %v2042, %v3157
    %v3159 = vrot.slane %v1078, %v3158
    %v3160 = vsel %vm2047, %v3159, %v3155
    %v3161 = vlaneseq
    %v3162 = vshrl.u32 %v3161, 7
    %v3163 = vsub.s32 %v2049, %v3162
    %v3164 = vrot.slane %v1081, %v3163
    %v3165 = vsel %vm2054, %v3164, %v3160
    %v3166 = vlaneseq
    %v3167 = vshrl.u32 %v3166, 7
    %v3168 = vsub.s32 %v2056, %v3167
    %v3169 = vrot.slane %v1084, %v3168
    %v3170 = vsel %vm2061, %v3169, %v3165
    %v3171 = vlaneseq
    %v3172 = vshrl.u32 %v3171, 7
    %v3173 = vsub.s32 %v2063, %v3172
    %v3174 = vrot.slane %v1087, %v3173
    %v3175 = vsel %vm2068, %v3174, %v3170
    %v3176 = vlaneseq
    %v3177 = vshrl.u32 %v3176, 7
    %v3178 = vsub.s32 %v1960, %v3177
    %v3179 = vrot.slane %v1090, %v3178
    %v3180 = vlaneseq
    %v3181 = vshrl.u32 %v3180, 7
    %v3182 = vsub.s32 %v1965, %v3181
    %v3183 = vrot.slane %v1093, %v3182
    %v3184 = vsel %vm1970, %v3183, %v3179
    %v3185 = vlaneseq
    %v3186 = vshrl.u32 %v3185, 7
    %v3187 = vsub.s32 %v1972, %v3186
    %v3188 = vrot.slane %v1096, %v3187
    %v3189 = vsel %vm1977, %v3188, %v3184
    %v3190 = vlaneseq
    %v3191 = vshrl.u32 %v3190, 7
    %v3192 = vsub.s32 %v1979, %v3191
    %v3193 = vrot.slane %v1099, %v3192
    %v3194 = vsel %vm1984, %v3193, %v3189
    %v3195 = vlaneseq
    %v3196 = vshrl.u32 %v3195, 7
    %v3197 = vsub.s32 %v1986, %v3196
    %v3198 = vrot.slane %v1102, %v3197
    %v3199 = vsel %vm1991, %v3198, %v3194
    %v3200 = vlaneseq
    %v3201 = vshrl.u32 %v3200, 7
    %v3202 = vsub.s32 %v1993, %v3201
    %v3203 = vrot.slane %v1105, %v3202
    %v3204 = vsel %vm1998, %v3203, %v3199
    %v3205 = vlaneseq
    %v3206 = vshrl.u32 %v3205, 7
    %v3207 = vsub.s32 %v2000, %v3206
    %v3208 = vrot.slane %v1108, %v3207
    %v3209 = vsel %vm2005, %v3208, %v3204
    %v3210 = vlaneseq
    %v3211 = vshrl.u32 %v3210, 7
    %v3212 = vsub.s32 %v2007, %v3211
    %v3213 = vrot.slane %v1111, %v3212
    %v3214 = vsel %vm2012, %v3213, %v3209
    %v3215 = vlaneseq
    %v3216 = vshrl.u32 %v3215, 7
    %v3217 = vsub.s32 %v2014, %v3216
    %v3218 = vrot.slane %v1114, %v3217
    %v3219 = vsel %vm2019, %v3218, %v3214
    %v3220 = vlaneseq
    %v3221 = vshrl.u32 %v3220, 7
    %v3222 = vsub.s32 %v2021, %v3221
    %v3223 = vrot.slane %v1117, %v3222
    %v3224 = vsel %vm2026, %v3223, %v3219
    %v3225 = vlaneseq
    %v3226 = vshrl.u32 %v3225, 7
    %v3227 = vsub.s32 %v2028, %v3226
    %v3228 = vrot.slane %v1120, %v3227
    %v3229 = vsel %vm2033, %v3228, %v3224
    %v3230 = vlaneseq
    %v3231 = vshrl.u32 %v3230, 7
    %v3232 = vsub.s32 %v2035, %v3231
    %v3233 = vrot.slane %v1123, %v3232
    %v3234 = vsel %vm2040, %v3233, %v3229
    %v3235 = vlaneseq
    %v3236 = vshrl.u32 %v3235, 7
    %v3237 = vsub.s32 %v2042, %v3236
    %v3238 = vrot.slane %v1126, %v3237
    %v3239 = vsel %vm2047, %v3238, %v3234
    %v3240 = vlaneseq
    %v3241 = vshrl.u32 %v3240, 7
    %v3242 = vsub.s32 %v2049, %v3241
    %v3243 = vrot.slane %v1129, %v3242
    %v3244 = vsel %vm2054, %v3243, %v3239
    %v3245 = vlaneseq
    %v3246 = vshrl.u32 %v3245, 7
    %v3247 = vsub.s32 %v2056, %v3246
    %v3248 = vrot.slane %v1132, %v3247
    %v3249 = vsel %vm2061, %v3248, %v3244
    %v3250 = vlaneseq
    %v3251 = vshrl.u32 %v3250, 7
    %v3252 = vsub.s32 %v2063, %v3251
    %v3253 = vrot.slane %v1135, %v3252
    %v3254 = vsel %vm2068, %v3253, %v3249
    %v3255 = vlaneseq
    %v3256 = vshrl.u32 %v3255, 7
    %v3257 = vsub.s32 %v1960, %v3256
    %v3258 = vrot.slane %v1138, %v3257
    %v3259 = vlaneseq
    %v3260 = vshrl.u32 %v3259, 7
    %v3261 = vsub.s32 %v1965, %v3260
    %v3262 = vrot.slane %v1141, %v3261
    %v3263 = vsel %vm1970, %v3262, %v3258
    %v3264 = vlaneseq
    %v3265 = vshrl.u32 %v3264, 7
    %v3266 = vsub.s32 %v1972, %v3265
    %v3267 = vrot.slane %v1144, %v3266
    %v3268 = vsel %vm1977, %v3267, %v3263
    %v3269 = vlaneseq
    %v3270 = vshrl.u32 %v3269, 7
    %v3271 = vsub.s32 %v1979, %v3270
    %v3272 = vrot.slane %v1147, %v3271
    %v3273 = vsel %vm1984, %v3272, %v3268
    %v3274 = vlaneseq
    %v3275 = vshrl.u32 %v3274, 7
    %v3276 = vsub.s32 %v1986, %v3275
    %v3277 = vrot.slane %v1150, %v3276
    %v3278 = vsel %vm1991, %v3277, %v3273
    %v3279 = vlaneseq
    %v3280 = vshrl.u32 %v3279, 7
    %v3281 = vsub.s32 %v1993, %v3280
    %v3282 = vrot.slane %v1153, %v3281
    %v3283 = vsel %vm1998, %v3282, %v3278
    %v3284 = vlaneseq
    %v3285 = vshrl.u32 %v3284, 7
    %v3286 = vsub.s32 %v2000, %v3285
    %v3287 = vrot.slane %v1156, %v3286
    %v3288 = vsel %vm2005, %v3287, %v3283
    %v3289 = vlaneseq
    %v3290 = vshrl.u32 %v3289, 7
    %v3291 = vsub.s32 %v2007, %v3290
    %v3292 = vrot.slane %v1159, %v3291
    %v3293 = vsel %vm2012, %v3292, %v3288
    %v3294 = vlaneseq
    %v3295 = vshrl.u32 %v3294, 7
    %v3296 = vsub.s32 %v2014, %v3295
    %v3297 = vrot.slane %v1162, %v3296
    %v3298 = vsel %vm2019, %v3297, %v3293
    %v3299 = vlaneseq
    %v3300 = vshrl.u32 %v3299, 7
    %v3301 = vsub.s32 %v2021, %v3300
    %v3302 = vrot.slane %v1165, %v3301
    %v3303 = vsel %vm2026, %v3302, %v3298
    %v3304 = vlaneseq
    %v3305 = vshrl.u32 %v3304, 7
    %v3306 = vsub.s32 %v2028, %v3305
    %v3307 = vrot.slane %v1168, %v3306
    %v3308 = vsel %vm2033, %v3307, %v3303
    %v3309 = vlaneseq
    %v3310 = vshrl.u32 %v3309, 7
    %v3311 = vsub.s32 %v2035, %v3310
    %v3312 = vrot.slane %v1171, %v3311
    %v3313 = vsel %vm2040, %v3312, %v3308
    %v3314 = vlaneseq
    %v3315 = vshrl.u32 %v3314, 7
    %v3316 = vsub.s32 %v2042, %v3315
    %v3317 = vrot.slane %v1174, %v3316
    %v3318 = vsel %vm2047, %v3317, %v3313
    %v3319 = vlaneseq
    %v3320 = vshrl.u32 %v3319, 7
    %v3321 = vsub.s32 %v2049, %v3320
    %v3322 = vrot.slane %v1177, %v3321
    %v3323 = vsel %vm2054, %v3322, %v3318
    %v3324 = vlaneseq
    %v3325 = vshrl.u32 %v3324, 7
    %v3326 = vsub.s32 %v2056, %v3325
    %v3327 = vrot.slane %v1180, %v3326
    %v3328 = vsel %vm2061, %v3327, %v3323
    %v3329 = vlaneseq
    %v3330 = vshrl.u32 %v3329, 7
    %v3331 = vsub.s32 %v2063, %v3330
    %v3332 = vrot.slane %v1183, %v3331
    %v3333 = vsel %vm2068, %v3332, %v3328
    %v3334 = vlaneseq
    %v3335 = vshrl.u32 %v3334, 7
    %v3336 = vsub.s32 %v1960, %v3335
    %v3337 = vrot.slane %v1186, %v3336
    %v3338 = vlaneseq
    %v3339 = vshrl.u32 %v3338, 7
    %v3340 = vsub.s32 %v1965, %v3339
    %v3341 = vrot.slane %v1189, %v3340
    %v3342 = vsel %vm1970, %v3341, %v3337
    %v3343 = vlaneseq
    %v3344 = vshrl.u32 %v3343, 7
    %v3345 = vsub.s32 %v1972, %v3344
    %v3346 = vrot.slane %v1192, %v3345
    %v3347 = vsel %vm1977, %v3346, %v3342
    %v3348 = vlaneseq
    %v3349 = vshrl.u32 %v3348, 7
    %v3350 = vsub.s32 %v1979, %v3349
    %v3351 = vrot.slane %v1195, %v3350
    %v3352 = vsel %vm1984, %v3351, %v3347
    %v3353 = vlaneseq
    %v3354 = vshrl.u32 %v3353, 7
    %v3355 = vsub.s32 %v1986, %v3354
    %v3356 = vrot.slane %v1198, %v3355
    %v3357 = vsel %vm1991, %v3356, %v3352
    %v3358 = vlaneseq
    %v3359 = vshrl.u32 %v3358, 7
    %v3360 = vsub.s32 %v1993, %v3359
    %v3361 = vrot.slane %v1201, %v3360
    %v3362 = vsel %vm1998, %v3361, %v3357
    %v3363 = vlaneseq
    %v3364 = vshrl.u32 %v3363, 7
    %v3365 = vsub.s32 %v2000, %v3364
    %v3366 = vrot.slane %v1204, %v3365
    %v3367 = vsel %vm2005, %v3366, %v3362
    %v3368 = vlaneseq
    %v3369 = vshrl.u32 %v3368, 7
    %v3370 = vsub.s32 %v2007, %v3369
    %v3371 = vrot.slane %v1207, %v3370
    %v3372 = vsel %vm2012, %v3371, %v3367
    %v3373 = vlaneseq
    %v3374 = vshrl.u32 %v3373, 7
    %v3375 = vsub.s32 %v2014, %v3374
    %v3376 = vrot.slane %v1210, %v3375
    %v3377 = vsel %vm2019, %v3376, %v3372
    %v3378 = vlaneseq
    %v3379 = vshrl.u32 %v3378, 7
    %v3380 = vsub.s32 %v2021, %v3379
    %v3381 = vrot.slane %v1213, %v3380
    %v3382 = vsel %vm2026, %v3381, %v3377
    %v3383 = vlaneseq
    %v3384 = vshrl.u32 %v3383, 7
    %v3385 = vsub.s32 %v2028, %v3384
    %v3386 = vrot.slane %v1216, %v3385
    %v3387 = vsel %vm2033, %v3386, %v3382
    %v3388 = vlaneseq
    %v3389 = vshrl.u32 %v3388, 7
    %v3390 = vsub.s32 %v2035, %v3389
    %v3391 = vrot.slane %v1219, %v3390
    %v3392 = vsel %vm2040, %v3391, %v3387
    %v3393 = vlaneseq
    %v3394 = vshrl.u32 %v3393, 7
    %v3395 = vsub.s32 %v2042, %v3394
    %v3396 = vrot.slane %v1222, %v3395
    %v3397 = vsel %vm2047, %v3396, %v3392
    %v3398 = vlaneseq
    %v3399 = vshrl.u32 %v3398, 7
    %v3400 = vsub.s32 %v2049, %v3399
    %v3401 = vrot.slane %v1225, %v3400
    %v3402 = vsel %vm2054, %v3401, %v3397
    %v3403 = vlaneseq
    %v3404 = vshrl.u32 %v3403, 7
    %v3405 = vsub.s32 %v2056, %v3404
    %v3406 = vrot.slane %v1228, %v3405
    %v3407 = vsel %vm2061, %v3406, %v3402
    %v3408 = vlaneseq
    %v3409 = vshrl.u32 %v3408, 7
    %v3410 = vsub.s32 %v2063, %v3409
    %v3411 = vrot.slane %v1231, %v3410
    %v3412 = vsel %vm2068, %v3411, %v3407
    %v3413 = vlaneseq
    %v3414 = vshrl.u32 %v3413, 7
    %v3415 = vsub.s32 %v1960, %v3414
    %v3416 = vrot.slane %v1234, %v3415
    %v3417 = vlaneseq
    %v3418 = vshrl.u32 %v3417, 7
    %v3419 = vsub.s32 %v1965, %v3418
    %v3420 = vrot.slane %v1237, %v3419
    %v3421 = vsel %vm1970, %v3420, %v3416
    %v3422 = vlaneseq
    %v3423 = vshrl.u32 %v3422, 7
    %v3424 = vsub.s32 %v1972, %v3423
    %v3425 = vrot.slane %v1240, %v3424
    %v3426 = vsel %vm1977, %v3425, %v3421
    %v3427 = vlaneseq
    %v3428 = vshrl.u32 %v3427, 7
    %v3429 = vsub.s32 %v1979, %v3428
    %v3430 = vrot.slane %v1243, %v3429
    %v3431 = vsel %vm1984, %v3430, %v3426
    %v3432 = vlaneseq
    %v3433 = vshrl.u32 %v3432, 7
    %v3434 = vsub.s32 %v1986, %v3433
    %v3435 = vrot.slane %v1246, %v3434
    %v3436 = vsel %vm1991, %v3435, %v3431
    %v3437 = vlaneseq
    %v3438 = vshrl.u32 %v3437, 7
    %v3439 = vsub.s32 %v1993, %v3438
    %v3440 = vrot.slane %v1249, %v3439
    %v3441 = vsel %vm1998, %v3440, %v3436
    %v3442 = vlaneseq
    %v3443 = vshrl.u32 %v3442, 7
    %v3444 = vsub.s32 %v2000, %v3443
    %v3445 = vrot.slane %v1252, %v3444
    %v3446 = vsel %vm2005, %v3445, %v3441
    %v3447 = vlaneseq
    %v3448 = vshrl.u32 %v3447, 7
    %v3449 = vsub.s32 %v2007, %v3448
    %v3450 = vrot.slane %v1255, %v3449
    %v3451 = vsel %vm2012, %v3450, %v3446
    %v3452 = vlaneseq
    %v3453 = vshrl.u32 %v3452, 7
    %v3454 = vsub.s32 %v2014, %v3453
    %v3455 = vrot.slane %v1258, %v3454
    %v3456 = vsel %vm2019, %v3455, %v3451
    %v3457 = vlaneseq
    %v3458 = vshrl.u32 %v3457, 7
    %v3459 = vsub.s32 %v2021, %v3458
    %v3460 = vrot.slane %v1261, %v3459
    %v3461 = vsel %vm2026, %v3460, %v3456
    %v3462 = vlaneseq
    %v3463 = vshrl.u32 %v3462, 7
    %v3464 = vsub.s32 %v2028, %v3463
    %v3465 = vrot.slane %v1264, %v3464
    %v3466 = vsel %vm2033, %v3465, %v3461
    %v3467 = vlaneseq
    %v3468 = vshrl.u32 %v3467, 7
    %v3469 = vsub.s32 %v2035, %v3468
    %v3470 = vrot.slane %v1267, %v3469
    %v3471 = vsel %vm2040, %v3470, %v3466
    %v3472 = vlaneseq
    %v3473 = vshrl.u32 %v3472, 7
    %v3474 = vsub.s32 %v2042, %v3473
    %v3475 = vrot.slane %v1270, %v3474
    %v3476 = vsel %vm2047, %v3475, %v3471
    %v3477 = vlaneseq
    %v3478 = vshrl.u32 %v3477, 7
    %v3479 = vsub.s32 %v2049, %v3478
    %v3480 = vrot.slane %v1273, %v3479
    %v3481 = vsel %vm2054, %v3480, %v3476
    %v3482 = vlaneseq
    %v3483 = vshrl.u32 %v3482, 7
    %v3484 = vsub.s32 %v2056, %v3483
    %v3485 = vrot.slane %v1276, %v3484
    %v3486 = vsel %vm2061, %v3485, %v3481
    %v3487 = vlaneseq
    %v3488 = vshrl.u32 %v3487, 7
    %v3489 = vsub.s32 %v2063, %v3488
    %v3490 = vrot.slane %v1279, %v3489
    %v3491 = vsel %vm2068, %v3490, %v3486
    %v3492 = vlaneseq
    %v3493 = vshrl.u32 %v3492, 7
    %v3494 = vsub.s32 %v1960, %v3493
    %v3495 = vrot.slane %v1282, %v3494
    %v3496 = vlaneseq
    %v3497 = vshrl.u32 %v3496, 7
    %v3498 = vsub.s32 %v1965, %v3497
    %v3499 = vrot.slane %v1285, %v3498
    %v3500 = vsel %vm1970, %v3499, %v3495
    %v3501 = vlaneseq
    %v3502 = vshrl.u32 %v3501, 7
    %v3503 = vsub.s32 %v1972, %v3502
    %v3504 = vrot.slane %v1288, %v3503
    %v3505 = vsel %vm1977, %v3504, %v3500
    %v3506 = vlaneseq
    %v3507 = vshrl.u32 %v3506, 7
    %v3508 = vsub.s32 %v1979, %v3507
    %v3509 = vrot.slane %v1291, %v3508
    %v3510 = vsel %vm1984, %v3509, %v3505
    %v3511 = vlaneseq
    %v3512 = vshrl.u32 %v3511, 7
    %v3513 = vsub.s32 %v1986, %v3512
    %v3514 = vrot.slane %v1294, %v3513
    %v3515 = vsel %vm1991, %v3514, %v3510
    %v3516 = vlaneseq
    %v3517 = vshrl.u32 %v3516, 7
    %v3518 = vsub.s32 %v1993, %v3517
    %v3519 = vrot.slane %v1297, %v3518
    %v3520 = vsel %vm1998, %v3519, %v3515
    %v3521 = vlaneseq
    %v3522 = vshrl.u32 %v3521, 7
    %v3523 = vsub.s32 %v2000, %v3522
    %v3524 = vrot.slane %v1300, %v3523
    %v3525 = vsel %vm2005, %v3524, %v3520
    %v3526 = vlaneseq
    %v3527 = vshrl.u32 %v3526, 7
    %v3528 = vsub.s32 %v2007, %v3527
    %v3529 = vrot.slane %v1303, %v3528
    %v3530 = vsel %vm2012, %v3529, %v3525
    %v3531 = vlaneseq
    %v3532 = vshrl.u32 %v3531, 7
    %v3533 = vsub.s32 %v2014, %v3532
    %v3534 = vrot.slane %v1306, %v3533
    %v3535 = vsel %vm2019, %v3534, %v3530
    %v3536 = vlaneseq
    %v3537 = vshrl.u32 %v3536, 7
    %v3538 = vsub.s32 %v2021, %v3537
    %v3539 = vrot.slane %v1309, %v3538
    %v3540 = vsel %vm2026, %v3539, %v3535
    %v3541 = vlaneseq
    %v3542 = vshrl.u32 %v3541, 7
    %v3543 = vsub.s32 %v2028, %v3542
    %v3544 = vrot.slane %v1312, %v3543
    %v3545 = vsel %vm2033, %v3544, %v3540
    %v3546 = vlaneseq
    %v3547 = vshrl.u32 %v3546, 7
    %v3548 = vsub.s32 %v2035, %v3547
    %v3549 = vrot.slane %v1315, %v3548
    %v3550 = vsel %vm2040, %v3549, %v3545
    %v3551 = vlaneseq
    %v3552 = vshrl.u32 %v3551, 7
    %v3553 = vsub.s32 %v2042, %v3552
    %v3554 = vrot.slane %v1318, %v3553
    %v3555 = vsel %vm2047, %v3554, %v3550
    %v3556 = vlaneseq
    %v3557 = vshrl.u32 %v3556, 7
    %v3558 = vsub.s32 %v2049, %v3557
    %v3559 = vrot.slane %v1321, %v3558
    %v3560 = vsel %vm2054, %v3559, %v3555
    %v3561 = vlaneseq
    %v3562 = vshrl.u32 %v3561, 7
    %v3563 = vsub.s32 %v2056, %v3562
    %v3564 = vrot.slane %v1324, %v3563
    %v3565 = vsel %vm2061, %v3564, %v3560
    %v3566 = vlaneseq
    %v3567 = vshrl.u32 %v3566, 7
    %v3568 = vsub.s32 %v2063, %v3567
    %v3569 = vrot.slane %v1327, %v3568
    %v3570 = vsel %vm2068, %v3569, %v3565
    %v3571 = vlaneseq
    %v3572 = vshrl.u32 %v3571, 7
    %v3573 = vsub.s32 %v1960, %v3572
    %v3574 = vrot.slane %v1330, %v3573
    %v3575 = vlaneseq
    %v3576 = vshrl.u32 %v3575, 7
    %v3577 = vsub.s32 %v1965, %v3576
    %v3578 = vrot.slane %v1333, %v3577
    %v3579 = vsel %vm1970, %v3578, %v3574
    %v3580 = vlaneseq
    %v3581 = vshrl.u32 %v3580, 7
    %v3582 = vsub.s32 %v1972, %v3581
    %v3583 = vrot.slane %v1336, %v3582
    %v3584 = vsel %vm1977, %v3583, %v3579
    %v3585 = vlaneseq
    %v3586 = vshrl.u32 %v3585, 7
    %v3587 = vsub.s32 %v1979, %v3586
    %v3588 = vrot.slane %v1339, %v3587
    %v3589 = vsel %vm1984, %v3588, %v3584
    %v3590 = vlaneseq
    %v3591 = vshrl.u32 %v3590, 7
    %v3592 = vsub.s32 %v1986, %v3591
    %v3593 = vrot.slane %v1342, %v3592
    %v3594 = vsel %vm1991, %v3593, %v3589
    %v3595 = vlaneseq
    %v3596 = vshrl.u32 %v3595, 7
    %v3597 = vsub.s32 %v1993, %v3596
    %v3598 = vrot.slane %v1345, %v3597
    %v3599 = vsel %vm1998, %v3598, %v3594
    %v3600 = vlaneseq
    %v3601 = vshrl.u32 %v3600, 7
    %v3602 = vsub.s32 %v2000, %v3601
    %v3603 = vrot.slane %v1348, %v3602
    %v3604 = vsel %vm2005, %v3603, %v3599
    %v3605 = vlaneseq
    %v3606 = vshrl.u32 %v3605, 7
    %v3607 = vsub.s32 %v2007, %v3606
    %v3608 = vrot.slane %v1351, %v3607
    %v3609 = vsel %vm2012, %v3608, %v3604
    %v3610 = vlaneseq
    %v3611 = vshrl.u32 %v3610, 7
    %v3612 = vsub.s32 %v2014, %v3611
    %v3613 = vrot.slane %v1354, %v3612
    %v3614 = vsel %vm2019, %v3613, %v3609
    %v3615 = vlaneseq
    %v3616 = vshrl.u32 %v3615, 7
    %v3617 = vsub.s32 %v2021, %v3616
    %v3618 = vrot.slane %v1357, %v3617
    %v3619 = vsel %vm2026, %v3618, %v3614
    %v3620 = vlaneseq
    %v3621 = vshrl.u32 %v3620, 7
    %v3622 = vsub.s32 %v2028, %v3621
    %v3623 = vrot.slane %v1360, %v3622
    %v3624 = vsel %vm2033, %v3623, %v3619
    %v3625 = vlaneseq
    %v3626 = vshrl.u32 %v3625, 7
    %v3627 = vsub.s32 %v2035, %v3626
    %v3628 = vrot.slane %v1363, %v3627
    %v3629 = vsel %vm2040, %v3628, %v3624
    %v3630 = vlaneseq
    %v3631 = vshrl.u32 %v3630, 7
    %v3632 = vsub.s32 %v2042, %v3631
    %v3633 = vrot.slane %v1366, %v3632
    %v3634 = vsel %vm2047, %v3633, %v3629
    %v3635 = vlaneseq
    %v3636 = vshrl.u32 %v3635, 7
    %v3637 = vsub.s32 %v2049, %v3636
    %v3638 = vrot.slane %v1369, %v3637
    %v3639 = vsel %vm2054, %v3638, %v3634
    %v3640 = vlaneseq
    %v3641 = vshrl.u32 %v3640, 7
    %v3642 = vsub.s32 %v2056, %v3641
    %v3643 = vrot.slane %v1372, %v3642
    %v3644 = vsel %vm2061, %v3643, %v3639
    %v3645 = vlaneseq
    %v3646 = vshrl.u32 %v3645, 7
    %v3647 = vsub.s32 %v2063, %v3646
    %v3648 = vrot.slane %v1375, %v3647
    %v3649 = vsel %vm2068, %v3648, %v3644
    %v3650 = vlaneseq
    %v3651 = vshrl.u32 %v3650, 7
    %v3652 = vsub.s32 %v1960, %v3651
    %v3653 = vrot.slane %v1378, %v3652
    %v3654 = vlaneseq
    %v3655 = vshrl.u32 %v3654, 7
    %v3656 = vsub.s32 %v1965, %v3655
    %v3657 = vrot.slane %v1381, %v3656
    %v3658 = vsel %vm1970, %v3657, %v3653
    %v3659 = vlaneseq
    %v3660 = vshrl.u32 %v3659, 7
    %v3661 = vsub.s32 %v1972, %v3660
    %v3662 = vrot.slane %v1384, %v3661
    %v3663 = vsel %vm1977, %v3662, %v3658
    %v3664 = vlaneseq
    %v3665 = vshrl.u32 %v3664, 7
    %v3666 = vsub.s32 %v1979, %v3665
    %v3667 = vrot.slane %v1387, %v3666
    %v3668 = vsel %vm1984, %v3667, %v3663
    %v3669 = vlaneseq
    %v3670 = vshrl.u32 %v3669, 7
    %v3671 = vsub.s32 %v1986, %v3670
    %v3672 = vrot.slane %v1390, %v3671
    %v3673 = vsel %vm1991, %v3672, %v3668
    %v3674 = vlaneseq
    %v3675 = vshrl.u32 %v3674, 7
    %v3676 = vsub.s32 %v1993, %v3675
    %v3677 = vrot.slane %v1393, %v3676
    %v3678 = vsel %vm1998, %v3677, %v3673
    %v3679 = vlaneseq
    %v3680 = vshrl.u32 %v3679, 7
    %v3681 = vsub.s32 %v2000, %v3680
    %v3682 = vrot.slane %v1396, %v3681
    %v3683 = vsel %vm2005, %v3682, %v3678
    %v3684 = vlaneseq
    %v3685 = vshrl.u32 %v3684, 7
    %v3686 = vsub.s32 %v2007, %v3685
    %v3687 = vrot.slane %v1399, %v3686
    %v3688 = vsel %vm2012, %v3687, %v3683
    %v3689 = vlaneseq
    %v3690 = vshrl.u32 %v3689, 7
    %v3691 = vsub.s32 %v2014, %v3690
    %v3692 = vrot.slane %v1402, %v3691
    %v3693 = vsel %vm2019, %v3692, %v3688
    %v3694 = vlaneseq
    %v3695 = vshrl.u32 %v3694, 7
    %v3696 = vsub.s32 %v2021, %v3695
    %v3697 = vrot.slane %v1405, %v3696
    %v3698 = vsel %vm2026, %v3697, %v3693
    %v3699 = vlaneseq
    %v3700 = vshrl.u32 %v3699, 7
    %v3701 = vsub.s32 %v2028, %v3700
    %v3702 = vrot.slane %v1408, %v3701
    %v3703 = vsel %vm2033, %v3702, %v3698
    %v3704 = vlaneseq
    %v3705 = vshrl.u32 %v3704, 7
    %v3706 = vsub.s32 %v2035, %v3705
    %v3707 = vrot.slane %v1411, %v3706
    %v3708 = vsel %vm2040, %v3707, %v3703
    %v3709 = vlaneseq
    %v3710 = vshrl.u32 %v3709, 7
    %v3711 = vsub.s32 %v2042, %v3710
    %v3712 = vrot.slane %v1414, %v3711
    %v3713 = vsel %vm2047, %v3712, %v3708
    %v3714 = vlaneseq
    %v3715 = vshrl.u32 %v3714, 7
    %v3716 = vsub.s32 %v2049, %v3715
    %v3717 = vrot.slane %v1417, %v3716
    %v3718 = vsel %vm2054, %v3717, %v3713
    %v3719 = vlaneseq
    %v3720 = vshrl.u32 %v3719, 7
    %v3721 = vsub.s32 %v2056, %v3720
    %v3722 = vrot.slane %v1420, %v3721
    %v3723 = vsel %vm2061, %v3722, %v3718
    %v3724 = vlaneseq
    %v3725 = vshrl.u32 %v3724, 7
    %v3726 = vsub.s32 %v2063, %v3725
    %v3727 = vrot.slane %v1423, %v3726
    %v3728 = vsel %vm2068, %v3727, %v3723
    %vm3729 = vcmask 1041409
    %v3730 = vsel %vm3729, %v2938, %v2069
    %v3731 = vsel %vm3729, %v3017, %v2148
    %v3732 = vsel %vm3729, %v3096, %v2227
    %v3733 = vsel %vm3729, %v3175, %v2306
    %v3734 = vsel %vm3729, %v3254, %v2385
    %v3735 = vsel %vm3729, %v3333, %v2464
    %v3736 = vsel %vm3729, %v3412, %v2543
    %v3737 = vsel %vm3729, %v3491, %v2622
    %v3738 = vsel %vm3729, %v3570, %v2701
    %v3739 = vsel %vm3729, %v3649, %v2780
    %v3740 = vsel %vm3729, %v3728, %v2859
    %3752 = vmatprep.subr.mxu0 0.0
    %3753 = vmatpush1.msra.mxu0 %v1424
    %3754 = vmatprep.subr.mxu0 0.0
    %3755 = vmatpush1.msra.mxu0 %v1425
    %3756 = vmatprep.subr.mxu0 0.0
    %3757 = vmatpush1.msra.mxu0 %v1426
    %3758 = vmatprep.subr.mxu0 0.0
    %3759 = vmatpush1.msra.mxu0 %v1427
    %3760 = vmatprep.subr.mxu0 0.0
    %3761 = vmatpush1.msra.mxu0 %v1428
    %3762 = vmatprep.subr.mxu0 0.0
    %3763 = vmatpush1.msra.mxu0 %v1429
    %3764 = vmatprep.subr.mxu0 0.0
    %3765 = vmatpush1.msra.mxu0 %v1430
    %3766 = vmatprep.subr.mxu0 0.0
    %3767 = vmatpush1.msra.mxu0 %v1431
    %3768 = vmatprep.subr.mxu0 0.0
    %3769 = vmatpush1.msra.mxu0 %v1432
    %3770 = vmatprep.subr.mxu0 0.0
    %3771 = vmatpush1.msra.mxu0 %v1433
    %3772 = vmatprep.subr.mxu0 0.0
    %3773 = vmatpush1.msra.mxu0 %v1434
    %3774 = vmatprep.subr.mxu0 0.0
    %3775 = vmatpush1.msra.mxu0 %v1435
    %3776 = vmatprep.subr.mxu0 0.0
    %3777 = vmatpush1.msra.mxu0 %v1436
    %3778 = vmatprep.subr.mxu0 0.0
    %3779 = vmatpush1.msra.mxu0 %v1437
    %3780 = vmatprep.subr.mxu0 0.0
    %3781 = vmatpush1.msra.mxu0 %v1438
    %3782 = vmatprep.subr.mxu0 0.0
    %3783 = vmatpush1.msra.mxu0 %v1439
    %3784 = vmatprep.subr.mxu0 0.0
    %3785 = vmatpush1.msra.mxu0 %v1440
    %3786 = vmatprep.subr.mxu0 0.0
    %3787 = vmatpush1.msra.mxu0 %v1441
    %3788 = vmatprep.subr.mxu0 0.0
    %3789 = vmatpush1.msra.mxu0 %v1442
    %3790 = vmatprep.subr.mxu0 0.0
    %3791 = vmatpush1.msra.mxu0 %v1443
    %3792 = vmatprep.subr.mxu0 0.0
    %3793 = vmatpush1.msra.mxu0 %v1444
    %3794 = vmatprep.subr.mxu0 0.0
    %3795 = vmatpush1.msra.mxu0 %v1445
    %3796 = vmatprep.subr.mxu0 0.0
    %3797 = vmatpush1.msra.mxu0 %v1446
    %3798 = vmatprep.subr.mxu0 0.0
    %3799 = vmatpush1.msra.mxu0 %v1447
    %3800 = vmatprep.subr.mxu0 0.0
    %3801 = vmatpush1.msra.mxu0 %v1448
    %3802 = vmatprep.subr.mxu0 0.0
    %3803 = vmatpush1.msra.mxu0 %v1449
    %3804 = vmatprep.subr.mxu0 0.0
    %3805 = vmatpush1.msra.mxu0 %v1450
    %3806 = vmatprep.subr.mxu0 0.0
    %3807 = vmatpush1.msra.mxu0 %v1451
    %3808 = vmatprep.subr.mxu0 0.0
    %3809 = vmatpush1.msra.mxu0 %v1452
    %3810 = vmatprep.subr.mxu0 0.0
    %3811 = vmatpush1.msra.mxu0 %v1453
    %3812 = vmatprep.subr.mxu0 0.0
    %3813 = vmatpush1.msra.mxu0 %v1454
    %3814 = vmatprep.subr.mxu0 0.0
    %3815 = vmatpush1.msra.mxu0 %v1455
    %3816 = vmatprep.mubr.f32.mxu0 %v3731
    %3817 = vmatmul.mubr.f32.gmra.mrb[0].mxu0 %v3730
    %v3818 = vpop.f32.mrb[0].mxu0
    %v3819 = vadd.f32 %v1605, %v3818
    %v3820 = vpop.f32.mrb[0].mxu0
    %3821 = vdwg.mxu0
    %3822 = vmatprep.subr.mxu0 0.0
    %3823 = vmatpush1.msra.mxu0 %v1456
    %3824 = vmatprep.subr.mxu0 0.0
    %3825 = vmatpush1.msra.mxu0 %v1457
    %3826 = vmatprep.subr.mxu0 0.0
    %3827 = vmatpush1.msra.mxu0 %v1458
    %3828 = vmatprep.subr.mxu0 0.0
    %3829 = vmatpush1.msra.mxu0 %v1459
    %3830 = vmatprep.subr.mxu0 0.0
    %3831 = vmatpush1.msra.mxu0 %v1460
    %3832 = vmatprep.subr.mxu0 0.0
    %3833 = vmatpush1.msra.mxu0 %v1461
    %3834 = vmatprep.subr.mxu0 0.0
    %3835 = vmatpush1.msra.mxu0 %v1462
    %3836 = vmatprep.subr.mxu0 0.0
    %3837 = vmatpush1.msra.mxu0 %v1463
    %3838 = vmatprep.subr.mxu0 0.0
    %3839 = vmatpush1.msra.mxu0 %v1464
    %3840 = vmatprep.subr.mxu0 0.0
    %3841 = vmatpush1.msra.mxu0 %v1465
    %3842 = vmatprep.subr.mxu0 0.0
    %3843 = vmatpush1.msra.mxu0 %v1466
    %3844 = vmatprep.subr.mxu0 0.0
    %3845 = vmatpush1.msra.mxu0 %v1467
    %3846 = vmatprep.subr.mxu0 0.0
    %3847 = vmatpush1.msra.mxu0 %v1468
    %3848 = vmatprep.subr.mxu0 0.0
    %3849 = vmatpush1.msra.mxu0 %v1469
    %3850 = vmatprep.subr.mxu0 0.0
    %3851 = vmatpush1.msra.mxu0 %v1470
    %3852 = vmatprep.subr.mxu0 0.0
    %3853 = vmatpush1.msra.mxu0 %v1471
    %3854 = vmatprep.subr.mxu0 0.0
    %3855 = vmatpush1.msra.mxu0 %v1472
    %3856 = vmatprep.subr.mxu0 0.0
    %3857 = vmatpush1.msra.mxu0 %v1473
    %3858 = vmatprep.subr.mxu0 0.0
    %3859 = vmatpush1.msra.mxu0 %v1474
    %3860 = vmatprep.subr.mxu0 0.0
    %3861 = vmatpush1.msra.mxu0 %v1475
    %3862 = vmatprep.subr.mxu0 0.0
    %3863 = vmatpush1.msra.mxu0 %v1476
    %3864 = vmatprep.subr.mxu0 0.0
    %3865 = vmatpush1.msra.mxu0 %v1477
    %3866 = vmatprep.subr.mxu0 0.0
    %3867 = vmatpush1.msra.mxu0 %v1478
    %3868 = vmatprep.subr.mxu0 0.0
    %3869 = vmatpush1.msra.mxu0 %v1479
    %3870 = vmatprep.subr.mxu0 0.0
    %3871 = vmatpush1.msra.mxu0 %v1480
    %3872 = vmatprep.subr.mxu0 0.0
    %3873 = vmatpush1.msra.mxu0 %v1481
    %3874 = vmatprep.subr.mxu0 0.0
    %3875 = vmatpush1.msra.mxu0 %v1482
    %3876 = vmatprep.subr.mxu0 0.0
    %3877 = vmatpush1.msra.mxu0 %v1483
    %3878 = vmatprep.subr.mxu0 0.0
    %3879 = vmatpush1.msra.mxu0 %v1484
    %3880 = vmatprep.subr.mxu0 0.0
    %3881 = vmatpush1.msra.mxu0 %v1485
    %3882 = vmatprep.subr.mxu0 0.0
    %3883 = vmatpush1.msra.mxu0 %v1486
    %3884 = vmatprep.subr.mxu0 0.0
    %3885 = vmatpush1.msra.mxu0 %v1487
    %3886 = vmatprep.mubr.f32.mxu0 %v3733
    %3887 = vmatmul.mubr.f32.gmra.mrb[0].mxu0 %v3732
    %v3888 = vpop.f32.mrb[0].mxu0
    %v3889 = vadd.f32 %v3819, %v3888
    %v3890 = vpop.f32.mrb[0].mxu0
    %3891 = vdwg.mxu0
    %3892 = vmatprep.subr.mxu0 0.0
    %3893 = vmatpush1.msra.mxu0 %v1488
    %3894 = vmatprep.subr.mxu0 0.0
    %3895 = vmatpush1.msra.mxu0 %v1489
    %3896 = vmatprep.subr.mxu0 0.0
    %3897 = vmatpush1.msra.mxu0 %v1490
    %3898 = vmatprep.subr.mxu0 0.0
    %3899 = vmatpush1.msra.mxu0 %v1491
    %3900 = vmatprep.subr.mxu0 0.0
    %3901 = vmatpush1.msra.mxu0 %v1492
    %3902 = vmatprep.subr.mxu0 0.0
    %3903 = vmatpush1.msra.mxu0 %v1493
    %3904 = vmatprep.subr.mxu0 0.0
    %3905 = vmatpush1.msra.mxu0 %v1494
    %3906 = vmatprep.subr.mxu0 0.0
    %3907 = vmatpush1.msra.mxu0 %v1495
    %3908 = vmatprep.subr.mxu0 0.0
    %3909 = vmatpush1.msra.mxu0 %v1496
    %3910 = vmatprep.subr.mxu0 0.0
    %3911 = vmatpush1.msra.mxu0 %v1497
    %3912 = vmatprep.subr.mxu0 0.0
    %3913 = vmatpush1.msra.mxu0 %v1498
    %3914 = vmatprep.subr.mxu0 0.0
    %3915 = vmatpush1.msra.mxu0 %v1499
    %3916 = vmatprep.subr.mxu0 0.0
    %3917 = vmatpush1.msra.mxu0 %v1500
    %3918 = vmatprep.subr.mxu0 0.0
    %3919 = vmatpush1.msra.mxu0 %v1501
    %3920 = vmatprep.subr.mxu0 0.0
    %3921 = vmatpush1.msra.mxu0 %v1502
    %3922 = vmatprep.subr.mxu0 0.0
    %3923 = vmatpush1.msra.mxu0 %v1503
    %3924 = vmatprep.subr.mxu0 0.0
    %3925 = vmatpush1.msra.mxu0 %v1504
    %3926 = vmatprep.subr.mxu0 0.0
    %3927 = vmatpush1.msra.mxu0 %v1505
    %3928 = vmatprep.subr.mxu0 0.0
    %3929 = vmatpush1.msra.mxu0 %v1506
    %3930 = vmatprep.subr.mxu0 0.0
    %3931 = vmatpush1.msra.mxu0 %v1507
    %3932 = vmatprep.subr.mxu0 0.0
    %3933 = vmatpush1.msra.mxu0 %v1508
    %3934 = vmatprep.subr.mxu0 0.0
    %3935 = vmatpush1.msra.mxu0 %v1509
    %3936 = vmatprep.subr.mxu0 0.0
    %3937 = vmatpush1.msra.mxu0 %v1510
    %3938 = vmatprep.subr.mxu0 0.0
    %3939 = vmatpush1.msra.mxu0 %v1511
    %3940 = vmatprep.subr.mxu0 0.0
    %3941 = vmatpush1.msra.mxu0 %v1512
    %3942 = vmatprep.subr.mxu0 0.0
    %3943 = vmatpush1.msra.mxu0 %v1513
    %3944 = vmatprep.subr.mxu0 0.0
    %3945 = vmatpush1.msra.mxu0 %v1514
    %3946 = vmatprep.subr.mxu0 0.0
    %3947 = vmatpush1.msra.mxu0 %v1515
    %3948 = vmatprep.subr.mxu0 0.0
    %3949 = vmatpush1.msra.mxu0 %v1516
    %3950 = vmatprep.subr.mxu0 0.0
    %3951 = vmatpush1.msra.mxu0 %v1517
    %3952 = vmatprep.subr.mxu0 0.0
    %3953 = vmatpush1.msra.mxu0 %v1518
    %3954 = vmatprep.subr.mxu0 0.0
    %3955 = vmatpush1.msra.mxu0 %v1519
    %3956 = vmatprep.mubr.f32.mxu0 %v3735
    %3957 = vmatmul.mubr.f32.gmra.mrb[0].mxu0 %v3734
    %v3958 = vpop.f32.mrb[0].mxu0
    %v3959 = vadd.f32 %v3889, %v3958
    %v3960 = vpop.f32.mrb[0].mxu0
    %3961 = vdwg.mxu0
    %3962 = vmatprep.subr.mxu0 0.0
    %3963 = vmatpush1.msra.mxu0 %v1520
    %3964 = vmatprep.subr.mxu0 0.0
    %3965 = vmatpush1.msra.mxu0 %v1521
    %3966 = vmatprep.subr.mxu0 0.0
    %3967 = vmatpush1.msra.mxu0 %v1522
    %3968 = vmatprep.subr.mxu0 0.0
    %3969 = vmatpush1.msra.mxu0 %v1523
    %3970 = vmatprep.subr.mxu0 0.0
    %3971 = vmatpush1.msra.mxu0 %v1524
    %3972 = vmatprep.subr.mxu0 0.0
    %3973 = vmatpush1.msra.mxu0 %v1525
    %3974 = vmatprep.subr.mxu0 0.0
    %3975 = vmatpush1.msra.mxu0 %v1526
    %3976 = vmatprep.subr.mxu0 0.0
    %3977 = vmatpush1.msra.mxu0 %v1527
    %3978 = vmatprep.subr.mxu0 0.0
    %3979 = vmatpush1.msra.mxu0 %v1528
    %3980 = vmatprep.subr.mxu0 0.0
    %3981 = vmatpush1.msra.mxu0 %v1529
    %3982 = vmatprep.subr.mxu0 0.0
    %3983 = vmatpush1.msra.mxu0 %v1530
    %3984 = vmatprep.subr.mxu0 0.0
    %3985 = vmatpush1.msra.mxu0 %v1531
    %3986 = vmatprep.subr.mxu0 0.0
    %3987 = vmatpush1.msra.mxu0 %v1532
    %3988 = vmatprep.subr.mxu0 0.0
    %3989 = vmatpush1.msra.mxu0 %v1533
    %3990 = vmatprep.subr.mxu0 0.0
    %3991 = vmatpush1.msra.mxu0 %v1534
    %3992 = vmatprep.subr.mxu0 0.0
    %3993 = vmatpush1.msra.mxu0 %v1535
    %3994 = vmatprep.subr.mxu0 0.0
    %3995 = vmatpush1.msra.mxu0 %v1536
    %3996 = vmatprep.subr.mxu0 0.0
    %3997 = vmatpush1.msra.mxu0 %v1537
    %3998 = vmatprep.subr.mxu0 0.0
    %3999 = vmatpush1.msra.mxu0 %v1538
    %4000 = vmatprep.subr.mxu0 0.0
    %4001 = vmatpush1.msra.mxu0 %v1539
    %4002 = vmatprep.subr.mxu0 0.0
    %4003 = vmatpush1.msra.mxu0 %v1540
    %4004 = vmatprep.subr.mxu0 0.0
    %4005 = vmatpush1.msra.mxu0 %v1541
    %4006 = vmatprep.subr.mxu0 0.0
    %4007 = vmatpush1.msra.mxu0 %v1542
    %4008 = vmatprep.subr.mxu0 0.0
    %4009 = vmatpush1.msra.mxu0 %v1543
    %4010 = vmatprep.subr.mxu0 0.0
    %4011 = vmatpush1.msra.mxu0 %v1544
    %4012 = vmatprep.subr.mxu0 0.0
    %4013 = vmatpush1.msra.mxu0 %v1545
    %4014 = vmatprep.subr.mxu0 0.0
    %4015 = vmatpush1.msra.mxu0 %v1546
    %4016 = vmatprep.subr.mxu0 0.0
    %4017 = vmatpush1.msra.mxu0 %v1547
    %4018 = vmatprep.subr.mxu0 0.0
    %4019 = vmatpush1.msra.mxu0 %v1548
    %4020 = vmatprep.subr.mxu0 0.0
    %4021 = vmatpush1.msra.mxu0 %v1549
    %4022 = vmatprep.subr.mxu0 0.0
    %4023 = vmatpush1.msra.mxu0 %v1550
    %4024 = vmatprep.subr.mxu0 0.0
    %4025 = vmatpush1.msra.mxu0 %v1551
    %4026 = vmatprep.mubr.f32.mxu0 %v3737
    %4027 = vmatmul.mubr.f32.gmra.mrb[0].mxu0 %v3736
    %v4028 = vpop.f32.mrb[0].mxu0
    %v4029 = vadd.f32 %v3959, %v4028
    %v4030 = vpop.f32.mrb[0].mxu0
    %4031 = vdwg.mxu0
    %4032 = vmatprep.subr.mxu0 0.0
    %4033 = vmatpush1.msra.mxu0 %v1552
    %4034 = vmatprep.subr.mxu0 0.0
    %4035 = vmatpush1.msra.mxu0 %v1553
    %4036 = vmatprep.subr.mxu0 0.0
    %4037 = vmatpush1.msra.mxu0 %v1554
    %4038 = vmatprep.subr.mxu0 0.0
    %4039 = vmatpush1.msra.mxu0 %v1555
    %4040 = vmatprep.subr.mxu0 0.0
    %4041 = vmatpush1.msra.mxu0 %v1556
    %4042 = vmatprep.subr.mxu0 0.0
    %4043 = vmatpush1.msra.mxu0 %v1557
    %4044 = vmatprep.subr.mxu0 0.0
    %4045 = vmatpush1.msra.mxu0 %v1558
    %4046 = vmatprep.subr.mxu0 0.0
    %4047 = vmatpush1.msra.mxu0 %v1559
    %4048 = vmatprep.subr.mxu0 0.0
    %4049 = vmatpush1.msra.mxu0 %v1560
    %4050 = vmatprep.subr.mxu0 0.0
    %4051 = vmatpush1.msra.mxu0 %v1561
    %4052 = vmatprep.subr.mxu0 0.0
    %4053 = vmatpush1.msra.mxu0 %v1562
    %4054 = vmatprep.subr.mxu0 0.0
    %4055 = vmatpush1.msra.mxu0 %v1563
    %4056 = vmatprep.subr.mxu0 0.0
    %4057 = vmatpush1.msra.mxu0 %v1564
    %4058 = vmatprep.subr.mxu0 0.0
    %4059 = vmatpush1.msra.mxu0 %v1565
    %4060 = vmatprep.subr.mxu0 0.0
    %4061 = vmatpush1.msra.mxu0 %v1566
    %4062 = vmatprep.subr.mxu0 0.0
    %4063 = vmatpush1.msra.mxu0 %v1567
    %4064 = vmatprep.subr.mxu0 0.0
    %4065 = vmatpush1.msra.mxu0 %v1568
    %4066 = vmatprep.subr.mxu0 0.0
    %4067 = vmatpush1.msra.mxu0 %v1569
    %4068 = vmatprep.subr.mxu0 0.0
    %4069 = vmatpush1.msra.mxu0 %v1570
    %4070 = vmatprep.subr.mxu0 0.0
    %4071 = vmatpush1.msra.mxu0 %v1571
    %4072 = vmatprep.subr.mxu0 0.0
    %4073 = vmatpush1.msra.mxu0 %v1572
    %4074 = vmatprep.subr.mxu0 0.0
    %4075 = vmatpush1.msra.mxu0 %v1573
    %4076 = vmatprep.subr.mxu0 0.0
    %4077 = vmatpush1.msra.mxu0 %v1574
    %4078 = vmatprep.subr.mxu0 0.0
    %4079 = vmatpush1.msra.mxu0 %v1575
    %4080 = vmatprep.subr.mxu0 0.0
    %4081 = vmatpush1.msra.mxu0 %v1576
    %4082 = vmatprep.subr.mxu0 0.0
    %4083 = vmatpush1.msra.mxu0 %v1577
    %4084 = vmatprep.subr.mxu0 0.0
    %4085 = vmatpush1.msra.mxu0 %v1578
    %4086 = vmatprep.subr.mxu0 0.0
    %4087 = vmatpush1.msra.mxu0 %v1579
    %4088 = vmatprep.subr.mxu0 0.0
    %4089 = vmatpush1.msra.mxu0 %v1580
    %4090 = vmatprep.subr.mxu0 0.0
    %4091 = vmatpush1.msra.mxu0 %v1581
    %4092 = vmatprep.subr.mxu0 0.0
    %4093 = vmatpush1.msra.mxu0 %v1582
    %4094 = vmatprep.subr.mxu0 0.0
    %4095 = vmatpush1.msra.mxu0 %v1583
    %4096 = vmatprep.mubr.f32.mxu0 %v3739
    %4097 = vmatmul.mubr.f32.gmra.mrb[0].mxu0 %v3738
    %v4098 = vpop.f32.mrb[0].mxu0
    %v4099 = vadd.f32 %v4029, %v4098
    %v4100 = vpop.f32.mrb[0].mxu0
    %4101 = vdwg.mxu0
    %4102 = vmatprep.subr.mxu0 0.0
    %4103 = vmatpush1.msra.mxu0 %v1584
    %4104 = vmatprep.subr.mxu0 0.0
    %4105 = vmatpush1.msra.mxu0 %v1585
    %4106 = vmatprep.subr.mxu0 0.0
    %4107 = vmatpush1.msra.mxu0 %v1586
    %4108 = vmatprep.subr.mxu0 0.0
    %4109 = vmatpush1.msra.mxu0 %v1587
    %4110 = vmatprep.subr.mxu0 0.0
    %4111 = vmatpush1.msra.mxu0 %v1588
    %4112 = vmatprep.subr.mxu0 0.0
    %4113 = vmatpush1.msra.mxu0 %v1589
    %4114 = vmatprep.subr.mxu0 0.0
    %4115 = vmatpush1.msra.mxu0 %v1590
    %4116 = vmatprep.subr.mxu0 0.0
    %4117 = vmatpush1.msra.mxu0 %v1591
    %4118 = vmatprep.subr.mxu0 0.0
    %4119 = vmatpush1.msra.mxu0 %v1592
    %4120 = vmatprep.subr.mxu0 0.0
    %4121 = vmatpush1.msra.mxu0 %v1593
    %4122 = vmatprep.subr.mxu0 0.0
    %4123 = vmatpush1.msra.mxu0 %v1594
    %4124 = vmatprep.subr.mxu0 0.0
    %4125 = vmatpush1.msra.mxu0 %v1595
    %4126 = vmatprep.subr.mxu0 0.0
    %4127 = vmatpush1.msra.mxu0 %v1596
    %4128 = vmatprep.subr.mxu0 0.0
    %4129 = vmatpush1.msra.mxu0 %v1597
    %4130 = vmatprep.subr.mxu0 0.0
    %4131 = vmatpush1.msra.mxu0 %v1598
    %4132 = vmatprep.subr.mxu0 0.0
    %4133 = vmatpush1.msra.mxu0 %v1599
    %4134 = vmatprep.subr.mxu0 0.0
    %4135 = vmatpush1.msra.mxu0 0.0
    %4136 = vmatprep.subr.mxu0 0.0
    %4137 = vmatpush1.msra.mxu0 0.0
    %4138 = vmatprep.subr.mxu0 0.0
    %4139 = vmatpush1.msra.mxu0 0.0
    %4140 = vmatprep.subr.mxu0 0.0
    %4141 = vmatpush1.msra.mxu0 0.0
    %4142 = vmatprep.subr.mxu0 0.0
    %4143 = vmatpush1.msra.mxu0 0.0
    %4144 = vmatprep.subr.mxu0 0.0
    %4145 = vmatpush1.msra.mxu0 0.0
    %4146 = vmatprep.subr.mxu0 0.0
    %4147 = vmatpush1.msra.mxu0 0.0
    %4148 = vmatprep.subr.mxu0 0.0
    %4149 = vmatpush1.msra.mxu0 0.0
    %4150 = vmatprep.subr.mxu0 0.0
    %4151 = vmatpush1.msra.mxu0 0.0
    %4152 = vmatprep.subr.mxu0 0.0
    %4153 = vmatpush1.msra.mxu0 0.0
    %4154 = vmatprep.subr.mxu0 0.0
    %4155 = vmatpush1.msra.mxu0 0.0
    %4156 = vmatprep.subr.mxu0 0.0
    %4157 = vmatpush1.msra.mxu0 0.0
    %4158 = vmatprep.subr.mxu0 0.0
    %4159 = vmatpush1.msra.mxu0 0.0
    %4160 = vmatprep.subr.mxu0 0.0
    %4161 = vmatpush1.msra.mxu0 0.0
    %4162 = vmatprep.subr.mxu0 0.0
    %4163 = vmatpush1.msra.mxu0 0.0
    %4164 = vmatprep.subr.mxu0 0.0
    %4165 = vmatpush1.msra.mxu0 0.0
    %4166 = vmatprep.mubr.f32.mxu0 0.0
    %4167 = vmatmul.mubr.f32.gmra.mrb[0].mxu0 %v3740
    %v4168 = vpop.f32.mrb[0].mxu0
    %v4169 = vadd.f32 %v4099, %v4168
    %v4170 = vpop.f32.mrb[0].mxu0
    %4171 = vdwg.mxu0
    %vm4172 = vcmask 9216
    %4173 = vst.msk [vmem:[#allocation2] sm:$0x3] %vm4172, %v4169
    // Predicated region
    $region14: #{tpu_custom_call.1} parent=1 // pred_check
      _
    $region15: #{tpu_custom_call.1} parent=1 // pred_check_branch
      %4175 = sbr.rel (0) target = $region17
    $region16: #{tpu_custom_call.1} parent=1 // pred_region
      %s4177 = ssub.s32 32, 32
      %4178 = vsyncadd [#allocation3], %s4177
      %s4180 = sshll.u32 [#allocation2], 4
      %s4181 = int_to_ptr.vmem [resolvable:$true] %s4180
      %4183 = dma.vmem_to_hbm [thread:$0]  %s4181, 32, %s3, [#allocation3]
    $region17: #{tpu_custom_call.1} parent=1 // pred_fallthru
      _
    // Predicated region
    $region18: #{tpu_custom_call.1} parent=1 // pred_check
      _
    $region19: #{tpu_custom_call.1} parent=1 // pred_check_branch
      %4185 = sbr.rel (0) target = $region21
    $region20: #{tpu_custom_call.1} parent=1 // pred_region
      %4186 = dma.done [#allocation3], 32
    $region21: #{tpu_custom_call.1} parent=1 // pred_fallthru
      _
    %4187 = vsyncpa [#allocation3], 1

</llo_original>
